<compile_context>
chip_gen: v5e
topology: v5e:2x2
jax: 0.10.0
libtpu: 0.0.40
codegen_flags: <defaults>
</compile_context>

<pallas_src>
import functools

import jax
import jax.numpy as jnp
import numpy as np
from jax import lax
from jax.experimental import pallas as pl
from jax.experimental.pallas import tpu as pltpu


def _row_im2col_conv(xp, w_ref, H, W, K):
    """Row-im2col conv on a padded map.

    xp:    (H+K-1, W+K-1, C) padded input (compute dtype).
    w_ref: (K, K*C, Cout) weight ref, rows ordered (kx, cin) per ky slice.

    Builds the horizontally-expanded map once (K lane concats, not K^2), then
    runs K accumulating MXU matmuls over ky with contraction depth K*C.
    Returns (H*W, Cout) in f32.
    """
    C = xp.shape[-1]
    hcat = jnp.concatenate([xp[:, kx:kx + W, :] for kx in range(K)], axis=-1)
    acc = None
    for ky in range(K):                                   # static unroll
        patch = hcat[ky:ky + H].reshape(H * W, K * C)     # leading-axis slice
        part = jnp.dot(patch, w_ref[ky], preferred_element_type=jnp.float32)
        acc = part if acc is None else acc + part
    return acc


def _inception_kernel(x_ref, w1x1_ref, b1x1_ref, w3x3_ref, b3x3_ref,
                      w5x5_ref, b5x5_ref, wproj_ref, bproj_ref,
                      o_ref,
                      pad3_ref, pad5_ref,
                      *, chans, compute_dtype):
    C1, C3r, C3, C5r, C5, Cp = chans
    _, H, W, Cin = x_ref.shape

    # Halo-only init: the borders just need to be zero and are never written
    # afterwards; the interior is fully overwritten every grid step, so one
    # full zero-fill at step 0 is enough (scratch persists across steps).
    @pl.when(pl.program_id(0) == 0)
    def _():
        pad3_ref[...] = jnp.zeros_like(pad3_ref)
        pad5_ref[...] = jnp.zeros_like(pad5_ref)

    x = x_ref[0].astype(compute_dtype)                    # (H, W, Cin)
    x2d = x.reshape(H * W, Cin)

    # ---- fused 1x1 stage: branch1 + branch2-reduce + branch3-reduce --------
    y = jnp.dot(x2d, w1x1_ref[...], preferred_element_type=jnp.float32)
    y = jnp.maximum(y + b1x1_ref[...], 0.0)               # f32, (H*W, C1+C3r+C5r)

    # branch1: slice-store immediately (retire y1 early, no final lane concat)
    o_ref[:, :, :, 0:C1] = y[:, 0:C1].reshape(1, H, W, C1).astype(o_ref.dtype)

    # ---- branch2: 3x3 conv, pad=1 (row-im2col, 3 accumulating matmuls) -----
    pad3_ref[1:H + 1, 1:W + 1, :] = \
        y[:, C1:C1 + C3r].reshape(H, W, C3r).astype(compute_dtype)
    y3 = _row_im2col_conv(pad3_ref[...], w3x3_ref, H, W, 3)
    y3 = jnp.maximum(y3 + b3x3_ref[...], 0.0)
    o_ref[:, :, :, C1:C1 + C3] = \
        y3.reshape(1, H, W, C3).astype(o_ref.dtype)

    # ---- branch3: 5x5 conv, pad=2 (row-im2col, 5 accumulating matmuls) -----
    pad5_ref[2:H + 2, 2:W + 2, :] = \
        y[:, C1 + C3r:C1 + C3r + C5r].reshape(H, W, C5r).astype(compute_dtype)
    y5 = _row_im2col_conv(pad5_ref[...], w5x5_ref, H, W, 5)
    y5 = jnp.maximum(y5 + b5x5_ref[...], 0.0)
    o_ref[:, :, :, C1 + C3:C1 + C3 + C5] = \
        y5.reshape(1, H, W, C5).astype(o_ref.dtype)

    # ---- branch4: separable 3x3/s1/p1 maxpool + 1x1 proj (no scratch) ------
    # Edge-clamped shifts are equivalent to -inf padding for max pooling.
    up = jnp.concatenate([x[:1], x[:-1]], axis=0)
    dn = jnp.concatenate([x[1:], x[-1:]], axis=0)
    vmax = jnp.maximum(jnp.maximum(up, x), dn)            # vertical 3-max
    lf = jnp.concatenate([vmax[:, :1], vmax[:, :-1]], axis=1)
    rt = jnp.concatenate([vmax[:, 1:], vmax[:, -1:]], axis=1)
    pooled = jnp.maximum(jnp.maximum(lf, vmax), rt)       # (H, W, Cin)
    yp = jnp.dot(pooled.reshape(H * W, Cin), wproj_ref[...],
                 preferred_element_type=jnp.float32)
    yp = jnp.maximum(yp + bproj_ref[...], 0.0)
    o_ref[:, :, :, C1 + C3 + C5:] = \
        yp.reshape(1, H, W, Cp).astype(o_ref.dtype)


@functools.partial(jax.jit, static_argnames=("compute_dtype",))
def inception_block(x_nchw, p, *, compute_dtype=jnp.bfloat16):
    """Fused Pallas InceptionBlock forward.  Input/output are NCHW (PyTorch)."""
    N, Cin, H, W = x_nchw.shape
    x = jnp.transpose(x_nchw, (0, 2, 3, 1))               # -> NHWC

    C1 = p["b1_w"].shape[-1]
    C3r, C3 = p["b2r_w"].shape[-1], p["b2_w"].shape[-1]
    C5r, C5 = p["b3r_w"].shape[-1], p["b3_w"].shape[-1]
    Cp = p["b4_w"].shape[-1]
    Ctot = C1 + C3 + C5 + Cp

    # Fold the three input-side 1x1 convs into one (Cin, C1+C3r+C5r) matmul.
    # KxK HWIO weights become (K, K*Cin, Cout) so the kernel can index a ky
    # slice statically (row-im2col).  Weights are pre-cast to the MXU operand
    # dtype ONCE here; biases stay f32 (added to the f32 accumulator).
    w1x1 = jnp.concatenate([p["b1_w"].reshape(Cin, C1),
                            p["b2r_w"].reshape(Cin, C3r),
                            p["b3r_w"].reshape(Cin, C5r)],
                           axis=-1).astype(compute_dtype)
    b1x1 = jnp.concatenate([p["b1_b"], p["b2r_b"], p["b3r_b"]], axis=-1)
    w3x3 = p["b2_w"].reshape(3, 3 * C3r, C3).astype(compute_dtype)
    w5x5 = p["b3_w"].reshape(5, 5 * C5r, C5).astype(compute_dtype)
    wproj = p["b4_w"].reshape(Cin, Cp).astype(compute_dtype)

    kernel = functools.partial(_inception_kernel,
                               chans=(C1, C3r, C3, C5r, C5, Cp),
                               compute_dtype=compute_dtype)

    flops = 2 * N * H * W * (Cin * (C1 + C3r + C5r) + 9 * C3r * C3
                             + 25 * C5r * C5 + Cin * Cp)
    bytes_accessed = (x.size * x.dtype.itemsize
                      + N * H * W * Ctot * x.dtype.itemsize
                      + sum(int(a.size) * a.dtype.itemsize
                            for a in (w1x1, b1x1, w3x3, w5x5, wproj))
                      + sum(int(p[k].size) * 4
                            for k in ("b2_b", "b3_b", "b4_b")))

    out = pl.pallas_call(
        kernel,
        out_shape=jax.ShapeDtypeStruct((N, H, W, Ctot), x.dtype),
        grid_spec=pltpu.PrefetchScalarGridSpec(
            num_scalar_prefetch=0,
            grid=(N,),
            in_specs=[
                pl.BlockSpec((1, H, W, Cin), lambda n: (n, 0, 0, 0)),
                pl.BlockSpec(w1x1.shape, lambda n: (0, 0)),
                pl.BlockSpec(b1x1.shape, lambda n: (0, 0)),
                pl.BlockSpec(w3x3.shape, lambda n: (0, 0, 0)),
                pl.BlockSpec(p["b2_b"].shape, lambda n: (0, 0)),
                pl.BlockSpec(w5x5.shape, lambda n: (0, 0, 0)),
                pl.BlockSpec(p["b3_b"].shape, lambda n: (0, 0)),
                pl.BlockSpec(wproj.shape, lambda n: (0, 0)),
                pl.BlockSpec(p["b4_b"].shape, lambda n: (0, 0)),
            ],
            out_specs=pl.BlockSpec((1, H, W, Ctot), lambda n: (n, 0, 0, 0)),
            scratch_shapes=[
                pltpu.VMEM((H + 2, W + 2, C3r), compute_dtype),  # 3x3 zero-pad
                pltpu.VMEM((H + 4, W + 4, C5r), compute_dtype),  # 5x5 zero-pad
            ],
        ),
        compiler_params=pltpu.CompilerParams(
            dimension_semantics=("parallel",)),
        cost_estimate=pl.CostEstimate(flops=flops, transcendentals=0,
                                      bytes_accessed=bytes_accessed),
    )(x, w1x1, b1x1, w3x3, p["b2_b"], w5x5, p["b3_b"], wproj, p["b4_b"])

    return jnp.transpose(out, (0, 3, 1, 2))                # -> NCHW


# ---------------- pure-JAX reference for verification -----------------------
def _ref_conv(x_nhwc, w, b, pad):
    y = lax.conv_general_dilated(
        x_nhwc, w, (1, 1), [(pad, pad), (pad, pad)],
        dimension_numbers=("NHWC", "HWIO", "NHWC"))
    return jnp.maximum(y + b.reshape(1, 1, 1, -1), 0.0)


def _ref_inception(x_nchw, p):
    x = jnp.transpose(x_nchw, (0, 2, 3, 1))
    b1 = _ref_conv(x, p["b1_w"], p["b1_b"], 0)
    b2 = _ref_conv(_ref_conv(x, p["b2r_w"], p["b2r_b"], 0), p["b2_w"], p["b2_b"], 1)
    b3 = _ref_conv(_ref_conv(x, p["b3r_w"], p["b3r_b"], 0), p["b3_w"], p["b3_b"], 2)
    pooled = lax.reduce_window(x, -jnp.inf, lax.max, (1, 3, 3, 1), (1, 1, 1, 1),
                               ((0, 0), (1, 1), (1, 1), (0, 0)))
    b4 = _ref_conv(pooled, p["b4_w"], p["b4_b"], 0)
    return jnp.transpose(jnp.concatenate([b1, b2, b3, b4], axis=-1), (0, 3, 1, 2))


def _init_params(key, cin, ch1x1, ch3r, ch3, ch5r, ch5, pool_proj):
    def conv(key, k, ci, co):
        kw, kb = jax.random.split(key)
        scale = 1.0 / np.sqrt(k * k * ci)
        w = jax.random.uniform(kw, (k, k, ci, co), jnp.float32, -scale, scale)
        b = jax.random.uniform(kb, (1, co), jnp.float32, -scale, scale)
        return w, b

    keys = jax.random.split(key, 6)
    p = {}
    p["b1_w"], p["b1_b"] = conv(keys[0], 1, cin, ch1x1)
    p["b2r_w"], p["b2r_b"] = conv(keys[1], 1, cin, ch3r)
    p["b2_w"], p["b2_b"] = conv(keys[2], 3, ch3r, ch3)
    p["b3r_w"], p["b3r_b"] = conv(keys[3], 1, cin, ch5r)
    p["b3_w"], p["b3_b"] = conv(keys[4], 5, ch5r, ch5)
    p["b4_w"], p["b4_b"] = conv(keys[5], 1, cin, pool_proj)
    return p


if __name__ == "__main__":
    key = jax.random.PRNGKey(0)
    kx, kp = jax.random.split(key)

    N, Cin, H, W = 2, 4, 16, 16
    ch1x1, ch3r, ch3, ch5r, ch5, pool_proj = 8, 4, 8, 4, 8, 8

    x = jax.random.normal(kx, (N, Cin, H, W), jnp.float32)   # NCHW like PyTorch
    params = _init_params(kp, Cin, ch1x1, ch3r, ch3, ch5r, ch5, pool_proj)

    ref = jax.block_until_ready(_ref_inception(x, params))

    # Default path: bf16 MXU operands, f32 accumulation (loose tolerance).
    out_bf16 = jax.block_until_ready(inception_block(x, params))
    assert out_bf16.shape == (N, ch1x1 + ch3 + ch5 + pool_proj, H, W)
    np.testing.assert_allclose(np.asarray(out_bf16), np.asarray(ref),
                               rtol=5e-2, atol=5e-2)

    # Full-precision path: tight tolerance against the f32 reference.
    out_f32 = jax.block_until_ready(
        inception_block(x, params, compute_dtype=jnp.float32))
    np.testing.assert_allclose(np.asarray(out_f32), np.asarray(ref),
                               rtol=5e-4, atol=5e-4)

    print("KERNEL_OK")
</pallas_src>

<mosaic_0001>
module attributes {stable_mosaic.version = 11 : i64} {
  func.func @_inception_kernel(%arg0: i32, %arg1: memref<1x16x16x4xf32, #tpu.memory_space<vmem>>, %arg2: memref<4x16xbf16, #tpu.memory_space<vmem>>, %arg3: memref<1x16xf32, #tpu.memory_space<vmem>>, %arg4: memref<3x12x8xbf16, #tpu.memory_space<vmem>>, %arg5: memref<1x8xf32, #tpu.memory_space<vmem>>, %arg6: memref<5x20x8xbf16, #tpu.memory_space<vmem>>, %arg7: memref<1x8xf32, #tpu.memory_space<vmem>>, %arg8: memref<4x8xbf16, #tpu.memory_space<vmem>>, %arg9: memref<1x8xf32, #tpu.memory_space<vmem>>, %arg10: memref<1x16x16x32xf32, #tpu.memory_space<vmem>>, %arg11: memref<18x18x4xbf16, #tpu.memory_space<vmem>>, %arg12: memref<20x20x4xbf16, #tpu.memory_space<vmem>>) attributes {dimension_semantics = [#tpu.dimension_semantics<parallel>], iteration_bounds = array<i64: 2>, scalar_prefetch = 0 : i64, scratch_operands = 2 : i64, tpu.core_type = #tpu.core_type<tc>, window_params = [{transform_indices = @transform_0, window_bounds = array<i64: 1, 16, 16, 4>}, {pipeline_mode = #tpu.pipeline_mode<synchronous>, transform_indices = @transform_1, window_bounds = array<i64: 4, 16>}, {pipeline_mode = #tpu.pipeline_mode<synchronous>, transform_indices = @transform_2, window_bounds = array<i64: 1, 16>}, {pipeline_mode = #tpu.pipeline_mode<synchronous>, transform_indices = @transform_3, window_bounds = array<i64: 3, 12, 8>}, {pipeline_mode = #tpu.pipeline_mode<synchronous>, transform_indices = @transform_4, window_bounds = array<i64: 1, 8>}, {pipeline_mode = #tpu.pipeline_mode<synchronous>, transform_indices = @transform_5, window_bounds = array<i64: 5, 20, 8>}, {pipeline_mode = #tpu.pipeline_mode<synchronous>, transform_indices = @transform_6, window_bounds = array<i64: 1, 8>}, {pipeline_mode = #tpu.pipeline_mode<synchronous>, transform_indices = @transform_7, window_bounds = array<i64: 4, 8>}, {pipeline_mode = #tpu.pipeline_mode<synchronous>, transform_indices = @transform_8, window_bounds = array<i64: 1, 8>}, {transform_indices = @transform_9, window_bounds = array<i64: 1, 16, 16, 32>}]} {
    %c0_i32 = arith.constant 0 : i32
    %0 = arith.cmpi eq, %arg0, %c0_i32 : i32
    %1 = arith.extui %0 : i1 to i32
    %c0_i32_0 = arith.constant 0 : i32
    %2 = arith.cmpi ne, %1, %c0_i32_0 : i32
    scf.if %2 {
      %cst_74 = arith.constant 0.000000e+00 : bf16
      %123 = vector.broadcast %cst_74 : bf16 to vector<18x18x4xbf16>
      %c0_75 = arith.constant 0 : index
      %c0_76 = arith.constant 0 : index
      %c0_77 = arith.constant 0 : index
      %124 = vector.load %arg11[%c0_75, %c0_76, %c0_77] : memref<18x18x4xbf16, #tpu.memory_space<vmem>>, vector<18x18x4xbf16>
      tpu.vector_store %arg11[%c0_75, %c0_76, %c0_77], %123 {strides = array<i32>} : memref<18x18x4xbf16, #tpu.memory_space<vmem>>, vector<18x18x4xbf16>,
      %cst_78 = arith.constant 0.000000e+00 : bf16
      %125 = vector.broadcast %cst_78 : bf16 to vector<20x20x4xbf16>
      %c0_79 = arith.constant 0 : index
      %c0_80 = arith.constant 0 : index
      %c0_81 = arith.constant 0 : index
      %126 = vector.load %arg12[%c0_79, %c0_80, %c0_81] : memref<20x20x4xbf16, #tpu.memory_space<vmem>>, vector<20x20x4xbf16>
      tpu.vector_store %arg12[%c0_79, %c0_80, %c0_81], %125 {strides = array<i32>} : memref<20x20x4xbf16, #tpu.memory_space<vmem>>, vector<20x20x4xbf16>,
    } else {
    }
    %c0 = arith.constant 0 : index
    %c0_1 = arith.constant 0 : index
    %c0_2 = arith.constant 0 : index
    %c0_3 = arith.constant 0 : index
    %3 = vector.load %arg1[%c0, %c0_1, %c0_2, %c0_3] : memref<1x16x16x4xf32, #tpu.memory_space<vmem>>, vector<1x16x16x4xf32>
    %4 = vector.shape_cast %3 : vector<1x16x16x4xf32> to vector<16x16x4xf32>
    %5 = arith.truncf %4 : vector<16x16x4xf32> to vector<16x16x4xbf16>
    %6 = vector.shape_cast %5 : vector<16x16x4xbf16> to vector<256x4xbf16>
    %c0_4 = arith.constant 0 : index
    %c0_5 = arith.constant 0 : index
    %7 = vector.load %arg2[%c0_4, %c0_5] : memref<4x16xbf16, #tpu.memory_space<vmem>>, vector<4x16xbf16>
    %cst = arith.constant dense<0.000000e+00> : vector<256x16xf32>
    %8 = tpu.matmul %6, %7, %cst {dimension_numbers = #tpu.dot_dimension_numbers<[1], [0], [0], [1], [0, 0, 1, 1], [], []>} : vector<256x4xbf16>, vector<4x16xbf16>, vector<256x16xf32> -> vector<256x16xf32>
    %c0_6 = arith.constant 0 : index
    %c0_7 = arith.constant 0 : index
    %9 = vector.load %arg3[%c0_6, %c0_7] : memref<1x16xf32, #tpu.memory_space<vmem>>, vector<1x16xf32>
    %10 = vector.broadcast %9 : vector<1x16xf32> to vector<256x16xf32>
    %11 = arith.addf %8, %10 : vector<256x16xf32>
    %cst_8 = arith.constant 0.000000e+00 : f32
    %12 = vector.broadcast %cst_8 : f32 to vector<256x16xf32>
    %13 = arith.maximumf %11, %12 : vector<256x16xf32>
    %14 = vector.extract_strided_slice %13 {offsets = [0, 0], sizes = [256, 8], strides = [1, 1]} : vector<256x16xf32> to vector<256x8xf32>
    %15 = vector.shape_cast %14 : vector<256x8xf32> to vector<1x16x16x8xf32>
    %c0_9 = arith.constant 0 : index
    %c0_10 = arith.constant 0 : index
    %c0_11 = arith.constant 0 : index
    %c0_12 = arith.constant 0 : index
    %16 = vector.load %arg10[%c0_9, %c0_10, %c0_11, %c0_12] : memref<1x16x16x32xf32, #tpu.memory_space<vmem>>, vector<1x16x16x8xf32>
    tpu.vector_store %arg10[%c0_9, %c0_10, %c0_11, %c0_12], %15 {strides = array<i32>} : memref<1x16x16x32xf32, #tpu.memory_space<vmem>>, vector<1x16x16x8xf32>,
    %17 = vector.extract_strided_slice %13 {offsets = [0, 8], sizes = [256, 4], strides = [1, 1]} : vector<256x16xf32> to vector<256x4xf32>
    %18 = vector.shape_cast %17 : vector<256x4xf32> to vector<16x16x4xf32>
    %19 = arith.truncf %18 : vector<16x16x4xf32> to vector<16x16x4xbf16>
    %c1 = arith.constant 1 : index
    %c1_13 = arith.constant 1 : index
    %c0_14 = arith.constant 0 : index
    %20 = vector.load %arg11[%c1, %c1_13, %c0_14] : memref<18x18x4xbf16, #tpu.memory_space<vmem>>, vector<16x16x4xbf16>
    tpu.vector_store %arg11[%c1, %c1_13, %c0_14], %19 {strides = array<i32>} : memref<18x18x4xbf16, #tpu.memory_space<vmem>>, vector<16x16x4xbf16>,
    %c0_15 = arith.constant 0 : index
    %c0_16 = arith.constant 0 : index
    %c0_17 = arith.constant 0 : index
    %21 = vector.load %arg11[%c0_15, %c0_16, %c0_17] : memref<18x18x4xbf16, #tpu.memory_space<vmem>>, vector<18x18x4xbf16>
    %22 = vector.extract_strided_slice %21 {offsets = [0, 0, 0], sizes = [18, 16, 4], strides = [1, 1, 1]} : vector<18x18x4xbf16> to vector<18x16x4xbf16>
    %23 = vector.extract_strided_slice %21 {offsets = [0, 1, 0], sizes = [18, 16, 4], strides = [1, 1, 1]} : vector<18x18x4xbf16> to vector<18x16x4xbf16>
    %24 = vector.extract_strided_slice %21 {offsets = [0, 2, 0], sizes = [18, 16, 4], strides = [1, 1, 1]} : vector<18x18x4xbf16> to vector<18x16x4xbf16>
    %25 = tpu.concatenate %22, %23, %24 in 2 : vector<18x16x4xbf16>, vector<18x16x4xbf16>, vector<18x16x4xbf16> -> vector<18x16x12xbf16>
    %26 = vector.extract_strided_slice %25 {offsets = [0, 0, 0], sizes = [16, 16, 12], strides = [1, 1, 1]} : vector<18x16x12xbf16> to vector<16x16x12xbf16>
    %27 = vector.shape_cast %26 : vector<16x16x12xbf16> to vector<256x12xbf16>
    %c0_18 = arith.constant 0 : index
    %c0_19 = arith.constant 0 : index
    %c0_20 = arith.constant 0 : index
    %28 = vector.load %arg4[%c0_18, %c0_19, %c0_20] : memref<3x12x8xbf16, #tpu.memory_space<vmem>>, vector<1x12x8xbf16>
    %29 = vector.shape_cast %28 : vector<1x12x8xbf16> to vector<12x8xbf16>
    %cst_21 = arith.constant dense<0.000000e+00> : vector<256x8xf32>
    %30 = tpu.matmul %27, %29, %cst_21 {dimension_numbers = #tpu.dot_dimension_numbers<[1], [0], [0], [1], [0, 0, 1, 1], [], []>} : vector<256x12xbf16>, vector<12x8xbf16>, vector<256x8xf32> -> vector<256x8xf32>
    %31 = vector.extract_strided_slice %25 {offsets = [1, 0, 0], sizes = [16, 16, 12], strides = [1, 1, 1]} : vector<18x16x12xbf16> to vector<16x16x12xbf16>
    %32 = vector.shape_cast %31 : vector<16x16x12xbf16> to vector<256x12xbf16>
    %c1_22 = arith.constant 1 : index
    %c0_23 = arith.constant 0 : index
    %c0_24 = arith.constant 0 : index
    %33 = vector.load %arg4[%c1_22, %c0_23, %c0_24] : memref<3x12x8xbf16, #tpu.memory_space<vmem>>, vector<1x12x8xbf16>
    %34 = vector.shape_cast %33 : vector<1x12x8xbf16> to vector<12x8xbf16>
    %cst_25 = arith.constant dense<0.000000e+00> : vector<256x8xf32>
    %35 = tpu.matmul %32, %34, %cst_25 {dimension_numbers = #tpu.dot_dimension_numbers<[1], [0], [0], [1], [0, 0, 1, 1], [], []>} : vector<256x12xbf16>, vector<12x8xbf16>, vector<256x8xf32> -> vector<256x8xf32>
    %36 = arith.addf %30, %35 : vector<256x8xf32>
    %37 = vector.extract_strided_slice %25 {offsets = [2, 0, 0], sizes = [16, 16, 12], strides = [1, 1, 1]} : vector<18x16x12xbf16> to vector<16x16x12xbf16>
    %38 = vector.shape_cast %37 : vector<16x16x12xbf16> to vector<256x12xbf16>
    %c2 = arith.constant 2 : index
    %c0_26 = arith.constant 0 : index
    %c0_27 = arith.constant 0 : index
    %39 = vector.load %arg4[%c2, %c0_26, %c0_27] : memref<3x12x8xbf16, #tpu.memory_space<vmem>>, vector<1x12x8xbf16>
    %40 = vector.shape_cast %39 : vector<1x12x8xbf16> to vector<12x8xbf16>
    %cst_28 = arith.constant dense<0.000000e+00> : vector<256x8xf32>
    %41 = tpu.matmul %38, %40, %cst_28 {dimension_numbers = #tpu.dot_dimension_numbers<[1], [0], [0], [1], [0, 0, 1, 1], [], []>} : vector<256x12xbf16>, vector<12x8xbf16>, vector<256x8xf32> -> vector<256x8xf32>
    %42 = arith.addf %36, %41 : vector<256x8xf32>
    %c0_29 = arith.constant 0 : index
    %c0_30 = arith.constant 0 : index
    %43 = vector.load %arg5[%c0_29, %c0_30] : memref<1x8xf32, #tpu.memory_space<vmem>>, vector<1x8xf32>
    %44 = vector.broadcast %43 : vector<1x8xf32> to vector<256x8xf32>
    %45 = arith.addf %42, %44 : vector<256x8xf32>
    %cst_31 = arith.constant 0.000000e+00 : f32
    %46 = vector.broadcast %cst_31 : f32 to vector<256x8xf32>
    %47 = arith.maximumf %45, %46 : vector<256x8xf32>
    %48 = vector.shape_cast %47 : vector<256x8xf32> to vector<1x16x16x8xf32>
    %c0_32 = arith.constant 0 : index
    %c0_33 = arith.constant 0 : index
    %c0_34 = arith.constant 0 : index
    %c8 = arith.constant 8 : index
    %49 = vector.load %arg10[%c0_32, %c0_33, %c0_34, %c8] : memref<1x16x16x32xf32, #tpu.memory_space<vmem>>, vector<1x16x16x8xf32>
    tpu.vector_store %arg10[%c0_32, %c0_33, %c0_34, %c8], %48 {strides = array<i32>} : memref<1x16x16x32xf32, #tpu.memory_space<vmem>>, vector<1x16x16x8xf32>,
    %50 = vector.extract_strided_slice %13 {offsets = [0, 12], sizes = [256, 4], strides = [1, 1]} : vector<256x16xf32> to vector<256x4xf32>
    %51 = vector.shape_cast %50 : vector<256x4xf32> to vector<16x16x4xf32>
    %52 = arith.truncf %51 : vector<16x16x4xf32> to vector<16x16x4xbf16>
    %c2_35 = arith.constant 2 : index
    %c2_36 = arith.constant 2 : index
    %c0_37 = arith.constant 0 : index
    %53 = vector.load %arg12[%c2_35, %c2_36, %c0_37] : memref<20x20x4xbf16, #tpu.memory_space<vmem>>, vector<16x16x4xbf16>
    tpu.vector_store %arg12[%c2_35, %c2_36, %c0_37], %52 {strides = array<i32>} : memref<20x20x4xbf16, #tpu.memory_space<vmem>>, vector<16x16x4xbf16>,
    %c0_38 = arith.constant 0 : index
    %c0_39 = arith.constant 0 : index
    %c0_40 = arith.constant 0 : index
    %54 = vector.load %arg12[%c0_38, %c0_39, %c0_40] : memref<20x20x4xbf16, #tpu.memory_space<vmem>>, vector<20x20x4xbf16>
    %55 = vector.extract_strided_slice %54 {offsets = [0, 0, 0], sizes = [20, 16, 4], strides = [1, 1, 1]} : vector<20x20x4xbf16> to vector<20x16x4xbf16>
    %56 = vector.extract_strided_slice %54 {offsets = [0, 1, 0], sizes = [20, 16, 4], strides = [1, 1, 1]} : vector<20x20x4xbf16> to vector<20x16x4xbf16>
    %57 = vector.extract_strided_slice %54 {offsets = [0, 2, 0], sizes = [20, 16, 4], strides = [1, 1, 1]} : vector<20x20x4xbf16> to vector<20x16x4xbf16>
    %58 = vector.extract_strided_slice %54 {offsets = [0, 3, 0], sizes = [20, 16, 4], strides = [1, 1, 1]} : vector<20x20x4xbf16> to vector<20x16x4xbf16>
    %59 = vector.extract_strided_slice %54 {offsets = [0, 4, 0], sizes = [20, 16, 4], strides = [1, 1, 1]} : vector<20x20x4xbf16> to vector<20x16x4xbf16>
    %60 = tpu.concatenate %55, %56, %57, %58, %59 in 2 : vector<20x16x4xbf16>, vector<20x16x4xbf16>, vector<20x16x4xbf16>, vector<20x16x4xbf16>, vector<20x16x4xbf16> -> vector<20x16x20xbf16>
    %61 = vector.extract_strided_slice %60 {offsets = [0, 0, 0], sizes = [16, 16, 20], strides = [1, 1, 1]} : vector<20x16x20xbf16> to vector<16x16x20xbf16>
    %62 = vector.shape_cast %61 : vector<16x16x20xbf16> to vector<256x20xbf16>
    %c0_41 = arith.constant 0 : index
    %c0_42 = arith.constant 0 : index
    %c0_43 = arith.constant 0 : index
    %63 = vector.load %arg6[%c0_41, %c0_42, %c0_43] : memref<5x20x8xbf16, #tpu.memory_space<vmem>>, vector<1x20x8xbf16>
    %64 = vector.shape_cast %63 : vector<1x20x8xbf16> to vector<20x8xbf16>
    %cst_44 = arith.constant dense<0.000000e+00> : vector<256x8xf32>
    %65 = tpu.matmul %62, %64, %cst_44 {dimension_numbers = #tpu.dot_dimension_numbers<[1], [0], [0], [1], [0, 0, 1, 1], [], []>} : vector<256x20xbf16>, vector<20x8xbf16>, vector<256x8xf32> -> vector<256x8xf32>
    %66 = vector.extract_strided_slice %60 {offsets = [1, 0, 0], sizes = [16, 16, 20], strides = [1, 1, 1]} : vector<20x16x20xbf16> to vector<16x16x20xbf16>
    %67 = vector.shape_cast %66 : vector<16x16x20xbf16> to vector<256x20xbf16>
    %c1_45 = arith.constant 1 : index
    %c0_46 = arith.constant 0 : index
    %c0_47 = arith.constant 0 : index
    %68 = vector.load %arg6[%c1_45, %c0_46, %c0_47] : memref<5x20x8xbf16, #tpu.memory_space<vmem>>, vector<1x20x8xbf16>
    %69 = vector.shape_cast %68 : vector<1x20x8xbf16> to vector<20x8xbf16>
    %cst_48 = arith.constant dense<0.000000e+00> : vector<256x8xf32>
    %70 = tpu.matmul %67, %69, %cst_48 {dimension_numbers = #tpu.dot_dimension_numbers<[1], [0], [0], [1], [0, 0, 1, 1], [], []>} : vector<256x20xbf16>, vector<20x8xbf16>, vector<256x8xf32> -> vector<256x8xf32>
    %71 = arith.addf %65, %70 : vector<256x8xf32>
    %72 = vector.extract_strided_slice %60 {offsets = [2, 0, 0], sizes = [16, 16, 20], strides = [1, 1, 1]} : vector<20x16x20xbf16> to vector<16x16x20xbf16>
    %73 = vector.shape_cast %72 : vector<16x16x20xbf16> to vector<256x20xbf16>
    %c2_49 = arith.constant 2 : index
    %c0_50 = arith.constant 0 : index
    %c0_51 = arith.constant 0 : index
    %74 = vector.load %arg6[%c2_49, %c0_50, %c0_51] : memref<5x20x8xbf16, #tpu.memory_space<vmem>>, vector<1x20x8xbf16>
    %75 = vector.shape_cast %74 : vector<1x20x8xbf16> to vector<20x8xbf16>
    %cst_52 = arith.constant dense<0.000000e+00> : vector<256x8xf32>
    %76 = tpu.matmul %73, %75, %cst_52 {dimension_numbers = #tpu.dot_dimension_numbers<[1], [0], [0], [1], [0, 0, 1, 1], [], []>} : vector<256x20xbf16>, vector<20x8xbf16>, vector<256x8xf32> -> vector<256x8xf32>
    %77 = arith.addf %71, %76 : vector<256x8xf32>
    %78 = vector.extract_strided_slice %60 {offsets = [3, 0, 0], sizes = [16, 16, 20], strides = [1, 1, 1]} : vector<20x16x20xbf16> to vector<16x16x20xbf16>
    %79 = vector.shape_cast %78 : vector<16x16x20xbf16> to vector<256x20xbf16>
    %c3 = arith.constant 3 : index
    %c0_53 = arith.constant 0 : index
    %c0_54 = arith.constant 0 : index
    %80 = vector.load %arg6[%c3, %c0_53, %c0_54] : memref<5x20x8xbf16, #tpu.memory_space<vmem>>, vector<1x20x8xbf16>
    %81 = vector.shape_cast %80 : vector<1x20x8xbf16> to vector<20x8xbf16>
    %cst_55 = arith.constant dense<0.000000e+00> : vector<256x8xf32>
    %82 = tpu.matmul %79, %81, %cst_55 {dimension_numbers = #tpu.dot_dimension_numbers<[1], [0], [0], [1], [0, 0, 1, 1], [], []>} : vector<256x20xbf16>, vector<20x8xbf16>, vector<256x8xf32> -> vector<256x8xf32>
    %83 = arith.addf %77, %82 : vector<256x8xf32>
    %84 = vector.extract_strided_slice %60 {offsets = [4, 0, 0], sizes = [16, 16, 20], strides = [1, 1, 1]} : vector<20x16x20xbf16> to vector<16x16x20xbf16>
    %85 = vector.shape_cast %84 : vector<16x16x20xbf16> to vector<256x20xbf16>
    %c4 = arith.constant 4 : index
    %c0_56 = arith.constant 0 : index
    %c0_57 = arith.constant 0 : index
    %86 = vector.load %arg6[%c4, %c0_56, %c0_57] : memref<5x20x8xbf16, #tpu.memory_space<vmem>>, vector<1x20x8xbf16>
    %87 = vector.shape_cast %86 : vector<1x20x8xbf16> to vector<20x8xbf16>
    %cst_58 = arith.constant dense<0.000000e+00> : vector<256x8xf32>
    %88 = tpu.matmul %85, %87, %cst_58 {dimension_numbers = #tpu.dot_dimension_numbers<[1], [0], [0], [1], [0, 0, 1, 1], [], []>} : vector<256x20xbf16>, vector<20x8xbf16>, vector<256x8xf32> -> vector<256x8xf32>
    %89 = arith.addf %83, %88 : vector<256x8xf32>
    %c0_59 = arith.constant 0 : index
    %c0_60 = arith.constant 0 : index
    %90 = vector.load %arg7[%c0_59, %c0_60] : memref<1x8xf32, #tpu.memory_space<vmem>>, vector<1x8xf32>
    %91 = vector.broadcast %90 : vector<1x8xf32> to vector<256x8xf32>
    %92 = arith.addf %89, %91 : vector<256x8xf32>
    %cst_61 = arith.constant 0.000000e+00 : f32
    %93 = vector.broadcast %cst_61 : f32 to vector<256x8xf32>
    %94 = arith.maximumf %92, %93 : vector<256x8xf32>
    %95 = vector.shape_cast %94 : vector<256x8xf32> to vector<1x16x16x8xf32>
    %c0_62 = arith.constant 0 : index
    %c0_63 = arith.constant 0 : index
    %c0_64 = arith.constant 0 : index
    %c16 = arith.constant 16 : index
    %96 = vector.load %arg10[%c0_62, %c0_63, %c0_64, %c16] : memref<1x16x16x32xf32, #tpu.memory_space<vmem>>, vector<1x16x16x8xf32>
    tpu.vector_store %arg10[%c0_62, %c0_63, %c0_64, %c16], %95 {strides = array<i32>} : memref<1x16x16x32xf32, #tpu.memory_space<vmem>>, vector<1x16x16x8xf32>,
    %97 = vector.extract_strided_slice %5 {offsets = [0, 0, 0], sizes = [1, 16, 4], strides = [1, 1, 1]} : vector<16x16x4xbf16> to vector<1x16x4xbf16>
    %98 = vector.extract_strided_slice %5 {offsets = [0, 0, 0], sizes = [15, 16, 4], strides = [1, 1, 1]} : vector<16x16x4xbf16> to vector<15x16x4xbf16>
    %99 = tpu.concatenate %97, %98 in 0 : vector<1x16x4xbf16>, vector<15x16x4xbf16> -> vector<16x16x4xbf16>
    %100 = vector.extract_strided_slice %5 {offsets = [1, 0, 0], sizes = [15, 16, 4], strides = [1, 1, 1]} : vector<16x16x4xbf16> to vector<15x16x4xbf16>
    %101 = vector.extract_strided_slice %5 {offsets = [15, 0, 0], sizes = [1, 16, 4], strides = [1, 1, 1]} : vector<16x16x4xbf16> to vector<1x16x4xbf16>
    %102 = tpu.concatenate %100, %101 in 0 : vector<15x16x4xbf16>, vector<1x16x4xbf16> -> vector<16x16x4xbf16>
    %103 = arith.maximumf %99, %5 : vector<16x16x4xbf16>
    %104 = arith.maximumf %103, %102 : vector<16x16x4xbf16>
    %105 = vector.extract_strided_slice %104 {offsets = [0, 0, 0], sizes = [16, 1, 4], strides = [1, 1, 1]} : vector<16x16x4xbf16> to vector<16x1x4xbf16>
    %106 = vector.extract_strided_slice %104 {offsets = [0, 0, 0], sizes = [16, 15, 4], strides = [1, 1, 1]} : vector<16x16x4xbf16> to vector<16x15x4xbf16>
    %107 = tpu.concatenate %105, %106 in 1 : vector<16x1x4xbf16>, vector<16x15x4xbf16> -> vector<16x16x4xbf16>
    %108 = vector.extract_strided_slice %104 {offsets = [0, 1, 0], sizes = [16, 15, 4], strides = [1, 1, 1]} : vector<16x16x4xbf16> to vector<16x15x4xbf16>
    %109 = vector.extract_strided_slice %104 {offsets = [0, 15, 0], sizes = [16, 1, 4], strides = [1, 1, 1]} : vector<16x16x4xbf16> to vector<16x1x4xbf16>
    %110 = tpu.concatenate %108, %109 in 1 : vector<16x15x4xbf16>, vector<16x1x4xbf16> -> vector<16x16x4xbf16>
    %111 = arith.maximumf %107, %104 : vector<16x16x4xbf16>
    %112 = arith.maximumf %111, %110 : vector<16x16x4xbf16>
    %113 = vector.shape_cast %112 : vector<16x16x4xbf16> to vector<256x4xbf16>
    %c0_65 = arith.constant 0 : index
    %c0_66 = arith.constant 0 : index
    %114 = vector.load %arg8[%c0_65, %c0_66] : memref<4x8xbf16, #tpu.memory_space<vmem>>, vector<4x8xbf16>
    %cst_67 = arith.constant dense<0.000000e+00> : vector<256x8xf32>
    %115 = tpu.matmul %113, %114, %cst_67 {dimension_numbers = #tpu.dot_dimension_numbers<[1], [0], [0], [1], [0, 0, 1, 1], [], []>} : vector<256x4xbf16>, vector<4x8xbf16>, vector<256x8xf32> -> vector<256x8xf32>
    %c0_68 = arith.constant 0 : index
    %c0_69 = arith.constant 0 : index
    %116 = vector.load %arg9[%c0_68, %c0_69] : memref<1x8xf32, #tpu.memory_space<vmem>>, vector<1x8xf32>
    %117 = vector.broadcast %116 : vector<1x8xf32> to vector<256x8xf32>
    %118 = arith.addf %115, %117 : vector<256x8xf32>
    %cst_70 = arith.constant 0.000000e+00 : f32
    %119 = vector.broadcast %cst_70 : f32 to vector<256x8xf32>
    %120 = arith.maximumf %118, %119 : vector<256x8xf32>
    %121 = vector.shape_cast %120 : vector<256x8xf32> to vector<1x16x16x8xf32>
    %c0_71 = arith.constant 0 : index
    %c0_72 = arith.constant 0 : index
    %c0_73 = arith.constant 0 : index
    %c24 = arith.constant 24 : index
    %122 = vector.load %arg10[%c0_71, %c0_72, %c0_73, %c24] : memref<1x16x16x32xf32, #tpu.memory_space<vmem>>, vector<1x16x16x8xf32>
    tpu.vector_store %arg10[%c0_71, %c0_72, %c0_73, %c24], %121 {strides = array<i32>} : memref<1x16x16x32xf32, #tpu.memory_space<vmem>>, vector<1x16x16x8xf32>,
    return
  }
  func.func @transform_0(%arg0: i32) -> (i32, i32, i32, i32) {
    %c0_i32 = arith.constant 0 : i32
    %c0_i32_0 = arith.constant 0 : i32
    %c0_i32_1 = arith.constant 0 : i32
    %c0_i32_2 = arith.constant 0 : i32
    return %arg0, %c0_i32, %c0_i32_0, %c0_i32_1 : i32, i32, i32, i32
  }
  func.func @transform_1(%arg0: i32) -> (i32, i32) {
    %c0_i32 = arith.constant 0 : i32
    %c0_i32_0 = arith.constant 0 : i32
    %c0_i32_1 = arith.constant 0 : i32
    return %c0_i32, %c0_i32_0 : i32, i32
  }
  func.func @transform_2(%arg0: i32) -> (i32, i32) {
    %c0_i32 = arith.constant 0 : i32
    %c0_i32_0 = arith.constant 0 : i32
    %c0_i32_1 = arith.constant 0 : i32
    return %c0_i32, %c0_i32_0 : i32, i32
  }
  func.func @transform_3(%arg0: i32) -> (i32, i32, i32) {
    %c0_i32 = arith.constant 0 : i32
    %c0_i32_0 = arith.constant 0 : i32
    %c0_i32_1 = arith.constant 0 : i32
    %c0_i32_2 = arith.constant 0 : i32
    return %c0_i32, %c0_i32_0, %c0_i32_1 : i32, i32, i32
  }
  func.func @transform_4(%arg0: i32) -> (i32, i32) {
    %c0_i32 = arith.constant 0 : i32
    %c0_i32_0 = arith.constant 0 : i32
    %c0_i32_1 = arith.constant 0 : i32
    return %c0_i32, %c0_i32_0 : i32, i32
  }
  func.func @transform_5(%arg0: i32) -> (i32, i32, i32) {
    %c0_i32 = arith.constant 0 : i32
    %c0_i32_0 = arith.constant 0 : i32
    %c0_i32_1 = arith.constant 0 : i32
    %c0_i32_2 = arith.constant 0 : i32
    return %c0_i32, %c0_i32_0, %c0_i32_1 : i32, i32, i32
  }
  func.func @transform_6(%arg0: i32) -> (i32, i32) {
    %c0_i32 = arith.constant 0 : i32
    %c0_i32_0 = arith.constant 0 : i32
    %c0_i32_1 = arith.constant 0 : i32
    return %c0_i32, %c0_i32_0 : i32, i32
  }
  func.func @transform_7(%arg0: i32) -> (i32, i32) {
    %c0_i32 = arith.constant 0 : i32
    %c0_i32_0 = arith.constant 0 : i32
    %c0_i32_1 = arith.constant 0 : i32
    return %c0_i32, %c0_i32_0 : i32, i32
  }
  func.func @transform_8(%arg0: i32) -> (i32, i32) {
    %c0_i32 = arith.constant 0 : i32
    %c0_i32_0 = arith.constant 0 : i32
    %c0_i32_1 = arith.constant 0 : i32
    return %c0_i32, %c0_i32_0 : i32, i32
  }
  func.func @transform_9(%arg0: i32) -> (i32, i32, i32, i32) {
    %c0_i32 = arith.constant 0 : i32
    %c0_i32_0 = arith.constant 0 : i32
    %c0_i32_1 = arith.constant 0 : i32
    %c0_i32_2 = arith.constant 0 : i32
    return %arg0, %c0_i32, %c0_i32_0, %c0_i32_1 : i32, i32, i32, i32
  }
}

</mosaic_0001>

<llo_original>
// kernel: inception_block.1
$region0: #{inception_block.1}
  #allocation0 [shape = 'u32[]', space=smem, size = 0x4, offset = 0x4, fixed_abs, tag = 'smem constant byte address 0x4 - core index']
  #allocation1 [shape = 'u32[72,128]{1,0:T(1,128)}', space=vmem, size = 0x9000, scoped, tag = 'internal scratch']
  #allocation2 [shape = 'bf16[18,18,4]{2,1,0:T(8,128)(2,1)}', space=vmem, size = 0x1b000, scoped, tag = 'scratch operand']
  #allocation3 [shape = 'bf16[20,20,4]{2,1,0:T(8,128)(2,1)}', space=vmem, size = 0x1e000, scoped, tag = 'scratch operand']
  %s0 = inlined_call_operand.vmem [shape: f32[2,16,16,4], index: 0, kind: input, shape index: {}]
  %s1 = inlined_call_operand.vmem [shape: bf16[4,16], index: 1, kind: input, shape index: {}]
  %s2 = inlined_call_operand.vmem [shape: f32[1,16], index: 2, kind: input, shape index: {}]
  %s3 = inlined_call_operand.vmem [shape: bf16[3,12,8], index: 3, kind: input, shape index: {}]
  %s4 = inlined_call_operand.vmem [shape: f32[1,8], index: 4, kind: input, shape index: {}]
  %s5 = inlined_call_operand.vmem [shape: bf16[5,20,8], index: 5, kind: input, shape index: {}]
  %s6 = inlined_call_operand.vmem [shape: f32[1,8], index: 6, kind: input, shape index: {}]
  %s7 = inlined_call_operand.vmem [shape: bf16[4,8], index: 7, kind: input, shape index: {}]
  %s8 = inlined_call_operand.vmem [shape: f32[1,8], index: 8, kind: input, shape index: {}]
  %s9 = inlined_call_operand.hbm [shape: f32[2,16,16,32], index: 9, kind: output, shape index: {}]
  %s10 = sld [smem:[#allocation0]]
  $region73: #{inception_block.1} parent=0
    _
  %s12 = ssub.s32 1, %s10
  %s13 = scalar_select 0, %s12, %s10
  $region1: #{inception_block.1} parent=0
    #allocation4 [shape = 'u8[262144]{0}', space=vmem, size = 0x40000, scoped, tag = 'output window, operand 0']
    #allocation5 [shape = 's32[2]{0}', space=sflag, size = 0x8, scoped, tag = 'scoped memory for inception_block.1']
    %14 = vsyncpa [#allocation5], 0
    %s15 = scalar_lea.sflag [#allocation5], 1
    %16 = vsyncpa %s15, 0
    loop: start=0, step=1, limit=4
    $region2: #{inception_block.1} parent=1 // loop_pre_header
      _
    $region3: #{inception_block.1} parent=1 // loop_header
      %s18 = sphi 0, %s22
      %p19 = scmp.ge.s32.totalorder %s18, 4
      %s28 = sphi 0, %s30
      %s31 = sphi 0, %s28
      %s32 = sphi 0, %s31
      %s48 = sphi 0, %s32
      %s52 = sphi 0, %s52
      %s54 = sphi 0, %s52
      %s55 = sphi 0, %s54
      %s69 = sphi 0, %s55
      %s73 = sphi 0, %s73
      %s75 = sphi 0, %s73
      %s76 = sphi 0, %s75
      %s90 = sphi 0, %s76
      %s94 = sphi 0, %s94
      %s96 = sphi 0, %s94
      %s97 = sphi 0, %s96
      %s111 = sphi 0, %s97
      %s115 = sphi 0, %s115
      %s117 = sphi 0, %s115
      %s118 = sphi 0, %s117
      %s132 = sphi 0, %s118
      %s136 = sphi 0, %s136
      %s138 = sphi 0, %s136
      %s139 = sphi 0, %s138
      %s153 = sphi 0, %s139
      %s157 = sphi 0, %s157
      %s159 = sphi 0, %s157
      %s160 = sphi 0, %s159
      %s174 = sphi 0, %s160
      %s178 = sphi 0, %s178
      %s180 = sphi 0, %s178
      %s181 = sphi 0, %s180
      %s195 = sphi 0, %s181
      %s199 = sphi 0, %s199
      %s201 = sphi 0, %s199
      %s202 = sphi 0, %s201
      %s216 = sphi 0, %s202
      %s222 = sphi 0, %s224
      %s225 = sphi 0, %s222
      %s226 = sphi 0, %s225
      %s242 = sphi 0, %s226
    $region4: #{inception_block.1} parent=1 // loop_header_branch
      %21 = sbr.rel (%p19) target = $region8
    $region5: #{inception_block.1} parent=1 // loop_body
      %s23 = ssub.s32 %s18, 1
      %s24 = ssub.s32 %s18, 2
      %s25 = sadd.s32 %s18, 1
      %s26 = ssub.s32 %s18, %s25
      %p27 = scmp.eq.s32.totalorder %s26, 0
      %s29 = sadd.s32 %s28, 1
      %s30 = scalar_select %p27, %s28, %s29
      %p33 = pneg %p27
      %p34 = scmp.eq.s32.totalorder %s18, 1
      %p35 = por %p33, %p34
      %p36 = scmp.ne.s32.totalorder %s28, %s31
      %p37 = scmp.eq.s32.totalorder %s18, 0
      %p38 = por %p36, %p37
      %p39 = scmp.ne.s32.totalorder %s28, %s31
      %p40 = scmp.eq.s32.totalorder %s23, 1
      %p41 = por %p39, %p40
      %p42 = scmp.ne.s32.totalorder %s31, %s32
      %p43 = scmp.eq.s32.totalorder %s23, 0
      %p44 = por %p42, %p43
      %p45 = scmp.ne.s32.totalorder %s31, %s32
      %p46 = scmp.eq.s32.totalorder %s24, 1
      %p47 = por %p45, %p46
      %p49 = scmp.ne.s32.totalorder %s32, %s48
      %p50 = scmp.eq.s32.totalorder %s24, 0
      %p51 = por %p49, %p50
      %s53 = sadd.s32 %s52, 1
      %p56 = scmp.eq.s32.totalorder %s18, 1
      %p57 = scmp.ne.s32.totalorder %s52, %s54
      %p58 = scmp.eq.s32.totalorder %s18, 0
      %p59 = por %p57, %p58
      %p60 = scmp.ne.s32.totalorder %s52, %s54
      %p61 = scmp.eq.s32.totalorder %s23, 1
      %p62 = por %p60, %p61
      %p63 = scmp.ne.s32.totalorder %s54, %s55
      %p64 = scmp.eq.s32.totalorder %s23, 0
      %p65 = por %p63, %p64
      %p66 = scmp.ne.s32.totalorder %s54, %s55
      %p67 = scmp.eq.s32.totalorder %s24, 1
      %p68 = por %p66, %p67
      %p70 = scmp.ne.s32.totalorder %s55, %s69
      %p71 = scmp.eq.s32.totalorder %s24, 0
      %p72 = por %p70, %p71
      %s74 = sadd.s32 %s73, 1
      %p77 = scmp.eq.s32.totalorder %s18, 1
      %p78 = scmp.ne.s32.totalorder %s73, %s75
      %p79 = scmp.eq.s32.totalorder %s18, 0
      %p80 = por %p78, %p79
      %p81 = scmp.ne.s32.totalorder %s73, %s75
      %p82 = scmp.eq.s32.totalorder %s23, 1
      %p83 = por %p81, %p82
      %p84 = scmp.ne.s32.totalorder %s75, %s76
      %p85 = scmp.eq.s32.totalorder %s23, 0
      %p86 = por %p84, %p85
      %p87 = scmp.ne.s32.totalorder %s75, %s76
      %p88 = scmp.eq.s32.totalorder %s24, 1
      %p89 = por %p87, %p88
      %p91 = scmp.ne.s32.totalorder %s76, %s90
      %p92 = scmp.eq.s32.totalorder %s24, 0
      %p93 = por %p91, %p92
      %s95 = sadd.s32 %s94, 1
      %p98 = scmp.eq.s32.totalorder %s18, 1
      %p99 = scmp.ne.s32.totalorder %s94, %s96
      %p100 = scmp.eq.s32.totalorder %s18, 0
      %p101 = por %p99, %p100
      %p102 = scmp.ne.s32.totalorder %s94, %s96
      %p103 = scmp.eq.s32.totalorder %s23, 1
      %p104 = por %p102, %p103
      %p105 = scmp.ne.s32.totalorder %s96, %s97
      %p106 = scmp.eq.s32.totalorder %s23, 0
      %p107 = por %p105, %p106
      %p108 = scmp.ne.s32.totalorder %s96, %s97
      %p109 = scmp.eq.s32.totalorder %s24, 1
      %p110 = por %p108, %p109
      %p112 = scmp.ne.s32.totalorder %s97, %s111
      %p113 = scmp.eq.s32.totalorder %s24, 0
      %p114 = por %p112, %p113
      %s116 = sadd.s32 %s115, 1
      %p119 = scmp.eq.s32.totalorder %s18, 1
      %p120 = scmp.ne.s32.totalorder %s115, %s117
      %p121 = scmp.eq.s32.totalorder %s18, 0
      %p122 = por %p120, %p121
      %p123 = scmp.ne.s32.totalorder %s115, %s117
      %p124 = scmp.eq.s32.totalorder %s23, 1
      %p125 = por %p123, %p124
      %p126 = scmp.ne.s32.totalorder %s117, %s118
      %p127 = scmp.eq.s32.totalorder %s23, 0
      %p128 = por %p126, %p127
      %p129 = scmp.ne.s32.totalorder %s117, %s118
      %p130 = scmp.eq.s32.totalorder %s24, 1
      %p131 = por %p129, %p130
      %p133 = scmp.ne.s32.totalorder %s118, %s132
      %p134 = scmp.eq.s32.totalorder %s24, 0
      %p135 = por %p133, %p134
      %s137 = sadd.s32 %s136, 1
      %p140 = scmp.eq.s32.totalorder %s18, 1
      %p141 = scmp.ne.s32.totalorder %s136, %s138
      %p142 = scmp.eq.s32.totalorder %s18, 0
      %p143 = por %p141, %p142
      %p144 = scmp.ne.s32.totalorder %s136, %s138
      %p145 = scmp.eq.s32.totalorder %s23, 1
      %p146 = por %p144, %p145
      %p147 = scmp.ne.s32.totalorder %s138, %s139
      %p148 = scmp.eq.s32.totalorder %s23, 0
      %p149 = por %p147, %p148
      %p150 = scmp.ne.s32.totalorder %s138, %s139
      %p151 = scmp.eq.s32.totalorder %s24, 1
      %p152 = por %p150, %p151
      %p154 = scmp.ne.s32.totalorder %s139, %s153
      %p155 = scmp.eq.s32.totalorder %s24, 0
      %p156 = por %p154, %p155
      %s158 = sadd.s32 %s157, 1
      %p161 = scmp.eq.s32.totalorder %s18, 1
      %p162 = scmp.ne.s32.totalorder %s157, %s159
      %p163 = scmp.eq.s32.totalorder %s18, 0
      %p164 = por %p162, %p163
      %p165 = scmp.ne.s32.totalorder %s157, %s159
      %p166 = scmp.eq.s32.totalorder %s23, 1
      %p167 = por %p165, %p166
      %p168 = scmp.ne.s32.totalorder %s159, %s160
      %p169 = scmp.eq.s32.totalorder %s23, 0
      %p170 = por %p168, %p169
      %p171 = scmp.ne.s32.totalorder %s159, %s160
      %p172 = scmp.eq.s32.totalorder %s24, 1
      %p173 = por %p171, %p172
      %p175 = scmp.ne.s32.totalorder %s160, %s174
      %p176 = scmp.eq.s32.totalorder %s24, 0
      %p177 = por %p175, %p176
      %s179 = sadd.s32 %s178, 1
      %p182 = scmp.eq.s32.totalorder %s18, 1
      %p183 = scmp.ne.s32.totalorder %s178, %s180
      %p184 = scmp.eq.s32.totalorder %s18, 0
      %p185 = por %p183, %p184
      %p186 = scmp.ne.s32.totalorder %s178, %s180
      %p187 = scmp.eq.s32.totalorder %s23, 1
      %p188 = por %p186, %p187
      %p189 = scmp.ne.s32.totalorder %s180, %s181
      %p190 = scmp.eq.s32.totalorder %s23, 0
      %p191 = por %p189, %p190
      %p192 = scmp.ne.s32.totalorder %s180, %s181
      %p193 = scmp.eq.s32.totalorder %s24, 1
      %p194 = por %p192, %p193
      %p196 = scmp.ne.s32.totalorder %s181, %s195
      %p197 = scmp.eq.s32.totalorder %s24, 0
      %p198 = por %p196, %p197
      %s200 = sadd.s32 %s199, 1
      %p203 = scmp.eq.s32.totalorder %s18, 1
      %p204 = scmp.ne.s32.totalorder %s199, %s201
      %p205 = scmp.eq.s32.totalorder %s18, 0
      %p206 = por %p204, %p205
      %p207 = scmp.ne.s32.totalorder %s199, %s201
      %p208 = scmp.eq.s32.totalorder %s23, 1
      %p209 = por %p207, %p208
      %p210 = scmp.ne.s32.totalorder %s201, %s202
      %p211 = scmp.eq.s32.totalorder %s23, 0
      %p212 = por %p210, %p211
      %p213 = scmp.ne.s32.totalorder %s201, %s202
      %p214 = scmp.eq.s32.totalorder %s24, 1
      %p215 = por %p213, %p214
      %p217 = scmp.ne.s32.totalorder %s202, %s216
      %p218 = scmp.eq.s32.totalorder %s24, 0
      %p219 = por %p217, %p218
      %s220 = ssub.s32 %s18, %s25
      %p221 = scmp.eq.s32.totalorder %s220, 0
      %s223 = sadd.s32 %s222, 1
      %s224 = scalar_select %p221, %s222, %s223
      %p227 = pneg %p221
      %p228 = scmp.eq.s32.totalorder %s18, 1
      %p229 = por %p227, %p228
      %p230 = scmp.ne.s32.totalorder %s222, %s225
      %p231 = scmp.eq.s32.totalorder %s18, 0
      %p232 = por %p230, %p231
      %p233 = scmp.ne.s32.totalorder %s222, %s225
      %p234 = scmp.eq.s32.totalorder %s23, 1
      %p235 = por %p233, %p234
      %p236 = scmp.ne.s32.totalorder %s225, %s226
      %p237 = scmp.eq.s32.totalorder %s23, 0
      %p238 = por %p236, %p237
      %p239 = scmp.ne.s32.totalorder %s225, %s226
      %p240 = scmp.eq.s32.totalorder %s24, 1
      %p241 = por %p239, %p240
      %p243 = scmp.ne.s32.totalorder %s226, %s242
      %p244 = scmp.eq.s32.totalorder %s24, 0
      %p245 = por %p243, %p244
      %p246 = scmp.le.s32.totalorder 1, %s18
      %p247 = scmp.lt.s32.totalorder %s18, 3
      %p248 = pnand %p246, %p247
      %p249 = pneg %p248
      // Predicated region
      $region9: #{inception_block.1} parent=5 // pred_check
        _
      $region10: #{inception_block.1} parent=5 // pred_check_branch
        %251 = sbr.rel (%p248) target = $region12
      $region11: #{inception_block.1} parent=5 // pred_region
        %s252 = ssub.s32 %s18, 1
        // Predicated region
        $region13: #{inception_block.1} parent=11 // pred_check
          %p253 = pneg %p65
        $region14: #{inception_block.1} parent=11 // pred_check_branch
          %255 = sbr.rel (%p253) target = $region16
        $region15: #{inception_block.1} parent=11 // pred_region
          _
        $region16: #{inception_block.1} parent=11 // pred_fallthru
          _
        // Predicated region
        $region17: #{inception_block.1} parent=11 // pred_check
          %p256 = pneg %p86
        $region18: #{inception_block.1} parent=11 // pred_check_branch
          %258 = sbr.rel (%p256) target = $region20
        $region19: #{inception_block.1} parent=11 // pred_region
          _
        $region20: #{inception_block.1} parent=11 // pred_fallthru
          _
        // Predicated region
        $region21: #{inception_block.1} parent=11 // pred_check
          %p259 = pneg %p107
        $region22: #{inception_block.1} parent=11 // pred_check_branch
          %261 = sbr.rel (%p259) target = $region24
        $region23: #{inception_block.1} parent=11 // pred_region
          _
        $region24: #{inception_block.1} parent=11 // pred_fallthru
          _
        // Predicated region
        $region25: #{inception_block.1} parent=11 // pred_check
          %p262 = pneg %p128
        $region26: #{inception_block.1} parent=11 // pred_check_branch
          %264 = sbr.rel (%p262) target = $region28
        $region27: #{inception_block.1} parent=11 // pred_region
          _
        $region28: #{inception_block.1} parent=11 // pred_fallthru
          _
        // Predicated region
        $region29: #{inception_block.1} parent=11 // pred_check
          %p265 = pneg %p149
        $region30: #{inception_block.1} parent=11 // pred_check_branch
          %267 = sbr.rel (%p265) target = $region32
        $region31: #{inception_block.1} parent=11 // pred_region
          _
        $region32: #{inception_block.1} parent=11 // pred_fallthru
          _
        // Predicated region
        $region33: #{inception_block.1} parent=11 // pred_check
          %p268 = pneg %p170
        $region34: #{inception_block.1} parent=11 // pred_check_branch
          %270 = sbr.rel (%p268) target = $region36
        $region35: #{inception_block.1} parent=11 // pred_region
          _
        $region36: #{inception_block.1} parent=11 // pred_fallthru
          _
        // Predicated region
        $region37: #{inception_block.1} parent=11 // pred_check
          %p271 = pneg %p191
        $region38: #{inception_block.1} parent=11 // pred_check_branch
          %273 = sbr.rel (%p271) target = $region40
        $region39: #{inception_block.1} parent=11 // pred_region
          _
        $region40: #{inception_block.1} parent=11 // pred_fallthru
          _
        // Predicated region
        $region41: #{inception_block.1} parent=11 // pred_check
          %p274 = pneg %p212
        $region42: #{inception_block.1} parent=11 // pred_check_branch
          %276 = sbr.rel (%p274) target = $region44
        $region43: #{inception_block.1} parent=11 // pred_region
          _
        $region44: #{inception_block.1} parent=11 // pred_fallthru
          _
      $region12: #{inception_block.1} parent=5 // pred_fallthru
        _
      %p277 = scmp.lt.s32.totalorder %s18, 2
      // Predicated region
      $region45: #{inception_block.1} parent=5 // pred_check
        %p278 = pneg %p277
      $region46: #{inception_block.1} parent=5 // pred_check_branch
        %280 = sbr.rel (%p278) target = $region48
      $region47: #{inception_block.1} parent=5 // pred_region
        // Predicated region
        $region49: #{inception_block.1} parent=47 // pred_check
          %p281 = pneg %p38
        $region50: #{inception_block.1} parent=47 // pred_check_branch
          %283 = sbr.rel (%p281) target = $region52
        $region51: #{inception_block.1} parent=47 // pred_region
          %p284 = scmp.lt.s32.totalorder %s18, 1
          %s285 = scalar_select %p284, %s18, 1
          %s286 = smul.addr %s285, 32
          %s287 = smul.addr %s286, 8
          %s288 = scalar_lea.vmem %s0, %s287
        $region52: #{inception_block.1} parent=47 // pred_fallthru
          _
      $region48: #{inception_block.1} parent=5 // pred_fallthru
        _
      %p289 = scmp.le.s32.totalorder 1, %s18
      %p290 = scmp.lt.s32.totalorder %s18, 3
      %p291 = pnand %p289, %p290
      %p292 = pneg %p291
      // Predicated region
      $region53: #{inception_block.1} parent=5 // pred_check
        _
      $region54: #{inception_block.1} parent=5 // pred_check_branch
        %294 = sbr.rel (%p291) target = $region56
      $region55: #{inception_block.1} parent=5 // pred_region
        %s295 = ssub.s32 %s18, 1
        %p296 = scmp.lt.s32.totalorder %s23, 1
        %s297 = scalar_select %p296, %s23, 1
        %s298 = smul.addr %s297, 32
        %s299 = smul.addr %s298, 8
        %s300 = scalar_lea.vmem %s0, %s299
        %p301 = pneg %p44
        %p302 = pneg %p41
        %p303 = pneg %p65
        %p304 = pneg %p62
        %p305 = pneg %p86
        %p306 = pneg %p83
        %p307 = pneg %p107
        %p308 = pneg %p104
        %p309 = pneg %p128
        %p310 = pneg %p125
        %p311 = pneg %p149
        %p312 = pneg %p146
        %p313 = pneg %p170
        %p314 = pneg %p167
        %p315 = pneg %p191
        %p316 = pneg %p188
        %p317 = pneg %p212
        %p318 = pneg %p209
        %p319 = pneg %p238
        %p320 = pneg %p235
        %s321 = sand.u32 %s225, 1
        %s322 = scalar_lea.sflag [#allocation5], %s321
        %s323 = sand.u32 %s225, 1
        %s324 = smul.addr %s323, 256
        %s325 = scalar_lea.vmem [#allocation4], %s324
        %p326 = scmp.lt.s32.totalorder %s23, 1
        %s327 = scalar_select %p326, %s23, 1
        %s328 = smul.addr %s327, 32
        %s329 = smul.addr %s328, 8
        %s330 = scalar_lea.vmem %s0, %s329
        %p332 = scmp.eq.s32.totalorder %s23, 0
        // Predicated region
        $region57: #{inception_block.1} parent=55 // pred_check
          %p333 = pneg %p332
        $region58: #{inception_block.1} parent=55 // pred_check_branch
          %335 = sbr.rel (%p333) target = $region60
        $region59: #{inception_block.1} parent=55 // pred_region
          %vm336 = vcmask 27648
          %337 = vst.msk [vmem:[#allocation2] sm:$0xf] %vm336, 0
          %338 = vst.msk [vmem:[#allocation2 + $0x4] sm:$0xf] %vm336, 0
          %vm339 = vcmask 24576
          %340 = vst.msk [vmem:[#allocation2 + $0x8] sm:$0x1] %vm339, 0
          %341 = vst.msk [vmem:[#allocation2 + $0xc] sm:$0xf] %vm336, 0
          %342 = vst.msk [vmem:[#allocation2 + $0x10] sm:$0xf] %vm336, 0
          %343 = vst.msk [vmem:[#allocation2 + $0x14] sm:$0x1] %vm339, 0
          %344 = vst.msk [vmem:[#allocation2 + $0x18] sm:$0xf] %vm336, 0
          %345 = vst.msk [vmem:[#allocation2 + $0x1c] sm:$0xf] %vm336, 0
          %346 = vst.msk [vmem:[#allocation2 + $0x20] sm:$0x1] %vm339, 0
          %347 = vst.msk [vmem:[#allocation2 + $0x24] sm:$0xf] %vm336, 0
          %348 = vst.msk [vmem:[#allocation2 + $0x28] sm:$0xf] %vm336, 0
          %349 = vst.msk [vmem:[#allocation2 + $0x2c] sm:$0x1] %vm339, 0
          %350 = vst.msk [vmem:[#allocation2 + $0x30] sm:$0xf] %vm336, 0
          %351 = vst.msk [vmem:[#allocation2 + $0x34] sm:$0xf] %vm336, 0
          %352 = vst.msk [vmem:[#allocation2 + $0x38] sm:$0x1] %vm339, 0
          %353 = vst.msk [vmem:[#allocation2 + $0x3c] sm:$0xf] %vm336, 0
          %354 = vst.msk [vmem:[#allocation2 + $0x40] sm:$0xf] %vm336, 0
          %355 = vst.msk [vmem:[#allocation2 + $0x44] sm:$0x1] %vm339, 0
          %356 = vst.msk [vmem:[#allocation2 + $0x48] sm:$0xf] %vm336, 0
          %357 = vst.msk [vmem:[#allocation2 + $0x4c] sm:$0xf] %vm336, 0
          %358 = vst.msk [vmem:[#allocation2 + $0x50] sm:$0x1] %vm339, 0
          %359 = vst.msk [vmem:[#allocation2 + $0x54] sm:$0xf] %vm336, 0
          %360 = vst.msk [vmem:[#allocation2 + $0x58] sm:$0xf] %vm336, 0
          %361 = vst.msk [vmem:[#allocation2 + $0x5c] sm:$0x1] %vm339, 0
          %362 = vst.msk [vmem:[#allocation2 + $0x60] sm:$0xf] %vm336, 0
          %363 = vst.msk [vmem:[#allocation2 + $0x64] sm:$0xf] %vm336, 0
          %364 = vst.msk [vmem:[#allocation2 + $0x68] sm:$0x1] %vm339, 0
          %365 = vst.msk [vmem:[#allocation2 + $0x6c] sm:$0xf] %vm336, 0
          %366 = vst.msk [vmem:[#allocation2 + $0x70] sm:$0xf] %vm336, 0
          %367 = vst.msk [vmem:[#allocation2 + $0x74] sm:$0x1] %vm339, 0
          %368 = vst.msk [vmem:[#allocation2 + $0x78] sm:$0xf] %vm336, 0
          %369 = vst.msk [vmem:[#allocation2 + $0x7c] sm:$0xf] %vm336, 0
          %370 = vst.msk [vmem:[#allocation2 + $0x80] sm:$0x1] %vm339, 0
          %371 = vst.msk [vmem:[#allocation2 + $0x84] sm:$0xf] %vm336, 0
          %372 = vst.msk [vmem:[#allocation2 + $0x88] sm:$0xf] %vm336, 0
          %373 = vst.msk [vmem:[#allocation2 + $0x8c] sm:$0x1] %vm339, 0
          %374 = vst.msk [vmem:[#allocation2 + $0x90] sm:$0xf] %vm336, 0
          %375 = vst.msk [vmem:[#allocation2 + $0x94] sm:$0xf] %vm336, 0
          %376 = vst.msk [vmem:[#allocation2 + $0x98] sm:$0x1] %vm339, 0
          %377 = vst.msk [vmem:[#allocation2 + $0x9c] sm:$0xf] %vm336, 0
          %378 = vst.msk [vmem:[#allocation2 + $0xa0] sm:$0xf] %vm336, 0
          %379 = vst.msk [vmem:[#allocation2 + $0xa4] sm:$0x1] %vm339, 0
          %380 = vst.msk [vmem:[#allocation2 + $0xa8] sm:$0xf] %vm336, 0
          %381 = vst.msk [vmem:[#allocation2 + $0xac] sm:$0xf] %vm336, 0
          %382 = vst.msk [vmem:[#allocation2 + $0xb0] sm:$0x1] %vm339, 0
          %383 = vst.msk [vmem:[#allocation2 + $0xb4] sm:$0xf] %vm336, 0
          %384 = vst.msk [vmem:[#allocation2 + $0xb8] sm:$0xf] %vm336, 0
          %385 = vst.msk [vmem:[#allocation2 + $0xbc] sm:$0x1] %vm339, 0
          %386 = vst.msk [vmem:[#allocation2 + $0xc0] sm:$0xf] %vm336, 0
          %387 = vst.msk [vmem:[#allocation2 + $0xc4] sm:$0xf] %vm336, 0
          %388 = vst.msk [vmem:[#allocation2 + $0xc8] sm:$0x1] %vm339, 0
          %389 = vst.msk [vmem:[#allocation2 + $0xcc] sm:$0xf] %vm336, 0
          %390 = vst.msk [vmem:[#allocation2 + $0xd0] sm:$0xf] %vm336, 0
          %391 = vst.msk [vmem:[#allocation2 + $0xd4] sm:$0x1] %vm339, 0
          %392 = vst.msk [vmem:[#allocation3] sm:$0xf] %vm336, 0
          %393 = vst.msk [vmem:[#allocation3 + $0x4] sm:$0xf] %vm336, 0
          %vm394 = vcmask 25600
          %395 = vst.msk [vmem:[#allocation3 + $0x8] sm:$0x3] %vm394, 0
          %396 = vst.msk [vmem:[#allocation3 + $0xc] sm:$0xf] %vm336, 0
          %397 = vst.msk [vmem:[#allocation3 + $0x10] sm:$0xf] %vm336, 0
          %398 = vst.msk [vmem:[#allocation3 + $0x14] sm:$0x3] %vm394, 0
          %399 = vst.msk [vmem:[#allocation3 + $0x18] sm:$0xf] %vm336, 0
          %400 = vst.msk [vmem:[#allocation3 + $0x1c] sm:$0xf] %vm336, 0
          %401 = vst.msk [vmem:[#allocation3 + $0x20] sm:$0x3] %vm394, 0
          %402 = vst.msk [vmem:[#allocation3 + $0x24] sm:$0xf] %vm336, 0
          %403 = vst.msk [vmem:[#allocation3 + $0x28] sm:$0xf] %vm336, 0
          %404 = vst.msk [vmem:[#allocation3 + $0x2c] sm:$0x3] %vm394, 0
          %405 = vst.msk [vmem:[#allocation3 + $0x30] sm:$0xf] %vm336, 0
          %406 = vst.msk [vmem:[#allocation3 + $0x34] sm:$0xf] %vm336, 0
          %407 = vst.msk [vmem:[#allocation3 + $0x38] sm:$0x3] %vm394, 0
          %408 = vst.msk [vmem:[#allocation3 + $0x3c] sm:$0xf] %vm336, 0
          %409 = vst.msk [vmem:[#allocation3 + $0x40] sm:$0xf] %vm336, 0
          %410 = vst.msk [vmem:[#allocation3 + $0x44] sm:$0x3] %vm394, 0
          %411 = vst.msk [vmem:[#allocation3 + $0x48] sm:$0xf] %vm336, 0
          %412 = vst.msk [vmem:[#allocation3 + $0x4c] sm:$0xf] %vm336, 0
          %413 = vst.msk [vmem:[#allocation3 + $0x50] sm:$0x3] %vm394, 0
          %414 = vst.msk [vmem:[#allocation3 + $0x54] sm:$0xf] %vm336, 0
          %415 = vst.msk [vmem:[#allocation3 + $0x58] sm:$0xf] %vm336, 0
          %416 = vst.msk [vmem:[#allocation3 + $0x5c] sm:$0x3] %vm394, 0
          %417 = vst.msk [vmem:[#allocation3 + $0x60] sm:$0xf] %vm336, 0
          %418 = vst.msk [vmem:[#allocation3 + $0x64] sm:$0xf] %vm336, 0
          %419 = vst.msk [vmem:[#allocation3 + $0x68] sm:$0x3] %vm394, 0
          %420 = vst.msk [vmem:[#allocation3 + $0x6c] sm:$0xf] %vm336, 0
          %421 = vst.msk [vmem:[#allocation3 + $0x70] sm:$0xf] %vm336, 0
          %422 = vst.msk [vmem:[#allocation3 + $0x74] sm:$0x3] %vm394, 0
          %423 = vst.msk [vmem:[#allocation3 + $0x78] sm:$0xf] %vm336, 0
          %424 = vst.msk [vmem:[#allocation3 + $0x7c] sm:$0xf] %vm336, 0
          %425 = vst.msk [vmem:[#allocation3 + $0x80] sm:$0x3] %vm394, 0
          %426 = vst.msk [vmem:[#allocation3 + $0x84] sm:$0xf] %vm336, 0
          %427 = vst.msk [vmem:[#allocation3 + $0x88] sm:$0xf] %vm336, 0
          %428 = vst.msk [vmem:[#allocation3 + $0x8c] sm:$0x3] %vm394, 0
          %429 = vst.msk [vmem:[#allocation3 + $0x90] sm:$0xf] %vm336, 0
          %430 = vst.msk [vmem:[#allocation3 + $0x94] sm:$0xf] %vm336, 0
          %431 = vst.msk [vmem:[#allocation3 + $0x98] sm:$0x3] %vm394, 0
          %432 = vst.msk [vmem:[#allocation3 + $0x9c] sm:$0xf] %vm336, 0
          %433 = vst.msk [vmem:[#allocation3 + $0xa0] sm:$0xf] %vm336, 0
          %434 = vst.msk [vmem:[#allocation3 + $0xa4] sm:$0x3] %vm394, 0
          %435 = vst.msk [vmem:[#allocation3 + $0xa8] sm:$0xf] %vm336, 0
          %436 = vst.msk [vmem:[#allocation3 + $0xac] sm:$0xf] %vm336, 0
          %437 = vst.msk [vmem:[#allocation3 + $0xb0] sm:$0x3] %vm394, 0
          %438 = vst.msk [vmem:[#allocation3 + $0xb4] sm:$0xf] %vm336, 0
          %439 = vst.msk [vmem:[#allocation3 + $0xb8] sm:$0xf] %vm336, 0
          %440 = vst.msk [vmem:[#allocation3 + $0xbc] sm:$0x3] %vm394, 0
          %441 = vst.msk [vmem:[#allocation3 + $0xc0] sm:$0xf] %vm336, 0
          %442 = vst.msk [vmem:[#allocation3 + $0xc4] sm:$0xf] %vm336, 0
          %443 = vst.msk [vmem:[#allocation3 + $0xc8] sm:$0x3] %vm394, 0
          %444 = vst.msk [vmem:[#allocation3 + $0xcc] sm:$0xf] %vm336, 0
          %445 = vst.msk [vmem:[#allocation3 + $0xd0] sm:$0xf] %vm336, 0
          %446 = vst.msk [vmem:[#allocation3 + $0xd4] sm:$0x3] %vm394, 0
          %447 = vst.msk [vmem:[#allocation3 + $0xd8] sm:$0xf] %vm336, 0
          %448 = vst.msk [vmem:[#allocation3 + $0xdc] sm:$0xf] %vm336, 0
          %449 = vst.msk [vmem:[#allocation3 + $0xe0] sm:$0x3] %vm394, 0
          %450 = vst.msk [vmem:[#allocation3 + $0xe4] sm:$0xf] %vm336, 0
          %451 = vst.msk [vmem:[#allocation3 + $0xe8] sm:$0xf] %vm336, 0
          %452 = vst.msk [vmem:[#allocation3 + $0xec] sm:$0x3] %vm394, 0
        $region60: #{inception_block.1} parent=55 // pred_fallthru
          _
        %v453 = vld [vmem:[%s330] sm:$0xff]
        %v454 = vld [vmem:[%s330 + $0x8] sm:$0xff]
        %v455 = vld [vmem:[%s330 + $0x10] sm:$0xff]
        %v456 = vld [vmem:[%s330 + $0x18] sm:$0xff]
        %v457 = vld [vmem:[%s330 + $0x20] sm:$0xff]
        %v458 = vld [vmem:[%s330 + $0x28] sm:$0xff]
        %v459 = vld [vmem:[%s330 + $0x30] sm:$0xff]
        %v460 = vld [vmem:[%s330 + $0x38] sm:$0xff]
        %v461 = vld [vmem:[%s330 + $0x40] sm:$0xff]
        %v462 = vld [vmem:[%s330 + $0x48] sm:$0xff]
        %v463 = vld [vmem:[%s330 + $0x50] sm:$0xff]
        %v464 = vld [vmem:[%s330 + $0x58] sm:$0xff]
        %v465 = vld [vmem:[%s330 + $0x60] sm:$0xff]
        %v466 = vld [vmem:[%s330 + $0x68] sm:$0xff]
        %v467 = vld [vmem:[%s330 + $0x70] sm:$0xff]
        %v468 = vld [vmem:[%s330 + $0x78] sm:$0xff]
        %v469 = vld [vmem:[%s330 + $0x80] sm:$0xff]
        %v470 = vld [vmem:[%s330 + $0x88] sm:$0xff]
        %v471 = vld [vmem:[%s330 + $0x90] sm:$0xff]
        %v472 = vld [vmem:[%s330 + $0x98] sm:$0xff]
        %v473 = vld [vmem:[%s330 + $0xa0] sm:$0xff]
        %v474 = vld [vmem:[%s330 + $0xa8] sm:$0xff]
        %v475 = vld [vmem:[%s330 + $0xb0] sm:$0xff]
        %v476 = vld [vmem:[%s330 + $0xb8] sm:$0xff]
        %v477 = vld [vmem:[%s330 + $0xc0] sm:$0xff]
        %v478 = vld [vmem:[%s330 + $0xc8] sm:$0xff]
        %v479 = vld [vmem:[%s330 + $0xd0] sm:$0xff]
        %v480 = vld [vmem:[%s330 + $0xd8] sm:$0xff]
        %v481 = vld [vmem:[%s330 + $0xe0] sm:$0xff]
        %v482 = vld [vmem:[%s330 + $0xe8] sm:$0xff]
        %v483 = vld [vmem:[%s330 + $0xf0] sm:$0xff]
        %v484 = vld [vmem:[%s330 + $0xf8] sm:$0xff]
        %v485 = vpack.c.bf16 %v453, %v453
        %v486 = vpack.c.bf16 %v454, %v454
        %v487 = vpack.c.bf16 %v455, %v455
        %v488 = vpack.c.bf16 %v456, %v456
        %v489 = vpack.c.bf16 %v457, %v457
        %v490 = vpack.c.bf16 %v458, %v458
        %v491 = vpack.c.bf16 %v459, %v459
        %v492 = vpack.c.bf16 %v460, %v460
        %v493 = vpack.c.bf16 %v461, %v461
        %v494 = vpack.c.bf16 %v462, %v462
        %v495 = vpack.c.bf16 %v463, %v463
        %v496 = vpack.c.bf16 %v464, %v464
        %v497 = vpack.c.bf16 %v465, %v465
        %v498 = vpack.c.bf16 %v466, %v466
        %v499 = vpack.c.bf16 %v467, %v467
        %v500 = vpack.c.bf16 %v468, %v468
        %v501 = vpack.c.bf16 %v469, %v469
        %v502 = vpack.c.bf16 %v470, %v470
        %v503 = vpack.c.bf16 %v471, %v471
        %v504 = vpack.c.bf16 %v472, %v472
        %v505 = vpack.c.bf16 %v473, %v473
        %v506 = vpack.c.bf16 %v474, %v474
        %v507 = vpack.c.bf16 %v475, %v475
        %v508 = vpack.c.bf16 %v476, %v476
        %v509 = vpack.c.bf16 %v477, %v477
        %v510 = vpack.c.bf16 %v478, %v478
        %v511 = vpack.c.bf16 %v479, %v479
        %v512 = vpack.c.bf16 %v480, %v480
        %v513 = vpack.c.bf16 %v481, %v481
        %v514 = vpack.c.bf16 %v482, %v482
        %v515 = vpack.c.bf16 %v483, %v483
        %v516 = vpack.c.bf16 %v484, %v484
        %v517 = vld [vmem:[%s1] sm:$0x3]
        %v518 = vld [vmem:[%s2] sm:$0x1]
        %v520 = vperm.slane %v518, 0
        %v554 = vunpack.c.l.b16 %v485
        %v555 = vunpack.c.l.b16 %v486
        %v556 = vunpack.c.l.b16 %v487
        %v557 = vunpack.c.l.b16 %v488
        %v558 = vunpack.c.l.b16 %v489
        %v559 = vunpack.c.l.b16 %v490
        %v560 = vunpack.c.l.b16 %v491
        %v561 = vunpack.c.l.b16 %v492
        %v562 = vunpack.c.l.b16 %v493
        %v563 = vunpack.c.l.b16 %v494
        %v564 = vunpack.c.l.b16 %v495
        %v565 = vunpack.c.l.b16 %v496
        %v566 = vunpack.c.l.b16 %v497
        %v567 = vunpack.c.l.b16 %v498
        %v568 = vunpack.c.l.b16 %v499
        %v569 = vunpack.c.l.b16 %v500
        %v570 = vunpack.c.l.b16 %v501
        %v571 = vunpack.c.l.b16 %v502
        %v572 = vunpack.c.l.b16 %v503
        %v573 = vunpack.c.l.b16 %v504
        %v574 = vunpack.c.l.b16 %v505
        %v575 = vunpack.c.l.b16 %v506
        %v576 = vunpack.c.l.b16 %v507
        %v577 = vunpack.c.l.b16 %v508
        %v578 = vunpack.c.l.b16 %v509
        %v579 = vunpack.c.l.b16 %v510
        %v580 = vunpack.c.l.b16 %v511
        %v581 = vunpack.c.l.b16 %v512
        %v582 = vunpack.c.l.b16 %v513
        %v583 = vunpack.c.l.b16 %v514
        %v584 = vunpack.c.l.b16 %v515
        %v585 = vunpack.c.l.b16 %v516
        %v586 = vpack.c.b16 %v555, %v554
        %v587 = vpack.c.b16 %v557, %v556
        %v588 = vpack.c.b16 %v559, %v558
        %v589 = vpack.c.b16 %v561, %v560
        %v590 = vpack.c.b16 %v563, %v562
        %v591 = vpack.c.b16 %v565, %v564
        %v592 = vpack.c.b16 %v567, %v566
        %v593 = vpack.c.b16 %v569, %v568
        %v594 = vpack.c.b16 %v571, %v570
        %v595 = vpack.c.b16 %v573, %v572
        %v596 = vpack.c.b16 %v575, %v574
        %v597 = vpack.c.b16 %v577, %v576
        %v598 = vpack.c.b16 %v579, %v578
        %v599 = vpack.c.b16 %v581, %v580
        %v600 = vpack.c.b16 %v583, %v582
        %v601 = vpack.c.b16 %v585, %v584
        %vm602 = vcmask 31744
        %v604 = vsel %vm602, %v586, 0
        %v607 = vsel %vm602, %v587, 0
        %v610 = vsel %vm602, %v588, 0
        %v613 = vsel %vm602, %v589, 0
        %v616 = vsel %vm602, %v590, 0
        %v619 = vsel %vm602, %v591, 0
        %v622 = vsel %vm602, %v592, 0
        %v625 = vsel %vm602, %v593, 0
        %v628 = vsel %vm602, %v594, 0
        %v631 = vsel %vm602, %v595, 0
        %v634 = vsel %vm602, %v596, 0
        %v637 = vsel %vm602, %v597, 0
        %v640 = vsel %vm602, %v598, 0
        %v643 = vsel %vm602, %v599, 0
        %v646 = vsel %vm602, %v600, 0
        %v649 = vsel %vm602, %v601, 0
        %vm651 = vcmask 1041408
        %v653 = vsel %vm651, %v517, 0
        %655 = vmatpush.bf16.msra.mxu0 0
        %656 = vmatpush.bf16.msra.mxu0 0
        %657 = vmatpush.bf16.msra.mxu0 0
        %658 = vmatpush.bf16.msra.mxu0 0
        %659 = vmatpush.bf16.msra.mxu0 0
        %660 = vmatpush.bf16.msra.mxu0 0
        %661 = vmatpush.bf16.msra.mxu0 0
        %662 = vmatpush.bf16.msra.mxu0 %v653
        %663 = vmatmul.bf16.gmra.mxu0 %v604
        %v664 = vpop.f32.mrf.mxu0
        %v665 = vadd.f32 %v520, %v664
        %v666 = vpop.f32.mrf.mxu0
        %v667 = vadd.f32 %v520, %v666
        %668 = vmatmul.bf16.gmra.mxu0 %v607
        %v669 = vpop.f32.mrf.mxu0
        %v670 = vadd.f32 %v520, %v669
        %v671 = vpop.f32.mrf.mxu0
        %v672 = vadd.f32 %v520, %v671
        %673 = vmatmul.bf16.gmra.mxu0 %v610
        %v674 = vpop.f32.mrf.mxu0
        %v675 = vadd.f32 %v520, %v674
        %v676 = vpop.f32.mrf.mxu0
        %v677 = vadd.f32 %v520, %v676
        %678 = vmatmul.bf16.gmra.mxu0 %v613
        %v679 = vpop.f32.mrf.mxu0
        %v680 = vadd.f32 %v520, %v679
        %v681 = vpop.f32.mrf.mxu0
        %v682 = vadd.f32 %v520, %v681
        %683 = vmatmul.bf16.gmra.mxu0 %v616
        %v684 = vpop.f32.mrf.mxu0
        %v685 = vadd.f32 %v520, %v684
        %v686 = vpop.f32.mrf.mxu0
        %v687 = vadd.f32 %v520, %v686
        %688 = vmatmul.bf16.gmra.mxu0 %v619
        %v689 = vpop.f32.mrf.mxu0
        %v690 = vadd.f32 %v520, %v689
        %v691 = vpop.f32.mrf.mxu0
        %v692 = vadd.f32 %v520, %v691
        %693 = vmatmul.bf16.gmra.mxu0 %v622
        %v694 = vpop.f32.mrf.mxu0
        %v695 = vadd.f32 %v520, %v694
        %v696 = vpop.f32.mrf.mxu0
        %v697 = vadd.f32 %v520, %v696
        %698 = vmatmul.bf16.gmra.mxu0 %v625
        %v699 = vpop.f32.mrf.mxu0
        %v700 = vadd.f32 %v520, %v699
        %v701 = vpop.f32.mrf.mxu0
        %v702 = vadd.f32 %v520, %v701
        %703 = vmatmul.bf16.gmra.mxu0 %v628
        %v704 = vpop.f32.mrf.mxu0
        %v705 = vadd.f32 %v520, %v704
        %v706 = vpop.f32.mrf.mxu0
        %v707 = vadd.f32 %v520, %v706
        %708 = vmatmul.bf16.gmra.mxu0 %v631
        %v709 = vpop.f32.mrf.mxu0
        %v710 = vadd.f32 %v520, %v709
        %v711 = vpop.f32.mrf.mxu0
        %v712 = vadd.f32 %v520, %v711
        %713 = vmatmul.bf16.gmra.mxu0 %v634
        %v714 = vpop.f32.mrf.mxu0
        %v715 = vadd.f32 %v520, %v714
        %v716 = vpop.f32.mrf.mxu0
        %v717 = vadd.f32 %v520, %v716
        %718 = vmatmul.bf16.gmra.mxu0 %v637
        %v719 = vpop.f32.mrf.mxu0
        %v720 = vadd.f32 %v520, %v719
        %v721 = vpop.f32.mrf.mxu0
        %v722 = vadd.f32 %v520, %v721
        %723 = vmatmul.bf16.gmra.mxu0 %v640
        %v724 = vpop.f32.mrf.mxu0
        %v725 = vadd.f32 %v520, %v724
        %v726 = vpop.f32.mrf.mxu0
        %v727 = vadd.f32 %v520, %v726
        %728 = vmatmul.bf16.gmra.mxu0 %v643
        %v729 = vpop.f32.mrf.mxu0
        %v730 = vadd.f32 %v520, %v729
        %v731 = vpop.f32.mrf.mxu0
        %v732 = vadd.f32 %v520, %v731
        %733 = vmatmul.bf16.gmra.mxu0 %v646
        %v734 = vpop.f32.mrf.mxu0
        %v735 = vadd.f32 %v520, %v734
        %v736 = vpop.f32.mrf.mxu0
        %v737 = vadd.f32 %v520, %v736
        %738 = vmatmul.bf16.gmra.mxu0 %v649
        %v739 = vpop.f32.mrf.mxu0
        %v740 = vadd.f32 %v520, %v739
        %v741 = vpop.f32.mrf.mxu0
        %v742 = vadd.f32 %v520, %v741
        %743 = vdwg.mxu0
        %v744 = vmax.f32 %v665, 0.0
        %v745 = vmax.f32 %v667, 0.0
        %v746 = vmax.f32 %v670, 0.0
        %v747 = vmax.f32 %v672, 0.0
        %v748 = vmax.f32 %v675, 0.0
        %v749 = vmax.f32 %v677, 0.0
        %v750 = vmax.f32 %v680, 0.0
        %v751 = vmax.f32 %v682, 0.0
        %v752 = vmax.f32 %v685, 0.0
        %v753 = vmax.f32 %v687, 0.0
        %v754 = vmax.f32 %v690, 0.0
        %v755 = vmax.f32 %v692, 0.0
        %v756 = vmax.f32 %v695, 0.0
        %v757 = vmax.f32 %v697, 0.0
        %v758 = vmax.f32 %v700, 0.0
        %v759 = vmax.f32 %v702, 0.0
        %v760 = vmax.f32 %v705, 0.0
        %v761 = vmax.f32 %v707, 0.0
        %v762 = vmax.f32 %v710, 0.0
        %v763 = vmax.f32 %v712, 0.0
        %v764 = vmax.f32 %v715, 0.0
        %v765 = vmax.f32 %v717, 0.0
        %v766 = vmax.f32 %v720, 0.0
        %v767 = vmax.f32 %v722, 0.0
        %v768 = vmax.f32 %v725, 0.0
        %v769 = vmax.f32 %v727, 0.0
        %v770 = vmax.f32 %v730, 0.0
        %v771 = vmax.f32 %v732, 0.0
        %v772 = vmax.f32 %v735, 0.0
        %v773 = vmax.f32 %v737, 0.0
        %v774 = vmax.f32 %v740, 0.0
        %v775 = vmax.f32 %v742, 0.0
        %vm776 = vcmask 64512
        %777 = vst.msk [vmem:[%s325] sm:$0xff] %vm776, %v744
        %778 = vst.msk [vmem:[%s325 + $0x8] sm:$0xff] %vm776, %v745
        %779 = vst.msk [vmem:[%s325 + $0x10] sm:$0xff] %vm776, %v746
        %780 = vst.msk [vmem:[%s325 + $0x18] sm:$0xff] %vm776, %v747
        %781 = vst.msk [vmem:[%s325 + $0x20] sm:$0xff] %vm776, %v748
        %782 = vst.msk [vmem:[%s325 + $0x28] sm:$0xff] %vm776, %v749
        %783 = vst.msk [vmem:[%s325 + $0x30] sm:$0xff] %vm776, %v750
        %784 = vst.msk [vmem:[%s325 + $0x38] sm:$0xff] %vm776, %v751
        %785 = vst.msk [vmem:[%s325 + $0x40] sm:$0xff] %vm776, %v752
        %786 = vst.msk [vmem:[%s325 + $0x48] sm:$0xff] %vm776, %v753
        %787 = vst.msk [vmem:[%s325 + $0x50] sm:$0xff] %vm776, %v754
        %788 = vst.msk [vmem:[%s325 + $0x58] sm:$0xff] %vm776, %v755
        %789 = vst.msk [vmem:[%s325 + $0x60] sm:$0xff] %vm776, %v756
        %790 = vst.msk [vmem:[%s325 + $0x68] sm:$0xff] %vm776, %v757
        %791 = vst.msk [vmem:[%s325 + $0x70] sm:$0xff] %vm776, %v758
        %792 = vst.msk [vmem:[%s325 + $0x78] sm:$0xff] %vm776, %v759
        %793 = vst.msk [vmem:[%s325 + $0x80] sm:$0xff] %vm776, %v760
        %794 = vst.msk [vmem:[%s325 + $0x88] sm:$0xff] %vm776, %v761
        %795 = vst.msk [vmem:[%s325 + $0x90] sm:$0xff] %vm776, %v762
        %796 = vst.msk [vmem:[%s325 + $0x98] sm:$0xff] %vm776, %v763
        %797 = vst.msk [vmem:[%s325 + $0xa0] sm:$0xff] %vm776, %v764
        %798 = vst.msk [vmem:[%s325 + $0xa8] sm:$0xff] %vm776, %v765
        %799 = vst.msk [vmem:[%s325 + $0xb0] sm:$0xff] %vm776, %v766
        %800 = vst.msk [vmem:[%s325 + $0xb8] sm:$0xff] %vm776, %v767
        %801 = vst.msk [vmem:[%s325 + $0xc0] sm:$0xff] %vm776, %v768
        %802 = vst.msk [vmem:[%s325 + $0xc8] sm:$0xff] %vm776, %v769
        %803 = vst.msk [vmem:[%s325 + $0xd0] sm:$0xff] %vm776, %v770
        %804 = vst.msk [vmem:[%s325 + $0xd8] sm:$0xff] %vm776, %v771
        %805 = vst.msk [vmem:[%s325 + $0xe0] sm:$0xff] %vm776, %v772
        %806 = vst.msk [vmem:[%s325 + $0xe8] sm:$0xff] %vm776, %v773
        %807 = vst.msk [vmem:[%s325 + $0xf0] sm:$0xff] %vm776, %v774
        %808 = vst.msk [vmem:[%s325 + $0xf8] sm:$0xff] %vm776, %v775
        %v809 = vpack.c.bf16 %v744, %v744
        %v810 = vpack.c.bf16 %v745, %v745
        %v811 = vpack.c.bf16 %v746, %v746
        %v812 = vpack.c.bf16 %v747, %v747
        %v813 = vpack.c.bf16 %v748, %v748
        %v814 = vpack.c.bf16 %v749, %v749
        %v815 = vpack.c.bf16 %v750, %v750
        %v816 = vpack.c.bf16 %v751, %v751
        %v817 = vpack.c.bf16 %v752, %v752
        %v818 = vpack.c.bf16 %v753, %v753
        %v819 = vpack.c.bf16 %v754, %v754
        %v820 = vpack.c.bf16 %v755, %v755
        %v821 = vpack.c.bf16 %v756, %v756
        %v822 = vpack.c.bf16 %v757, %v757
        %v823 = vpack.c.bf16 %v758, %v758
        %v824 = vpack.c.bf16 %v759, %v759
        %v825 = vpack.c.bf16 %v760, %v760
        %v826 = vpack.c.bf16 %v761, %v761
        %v827 = vpack.c.bf16 %v762, %v762
        %v828 = vpack.c.bf16 %v763, %v763
        %v829 = vpack.c.bf16 %v764, %v764
        %v830 = vpack.c.bf16 %v765, %v765
        %v831 = vpack.c.bf16 %v766, %v766
        %v832 = vpack.c.bf16 %v767, %v767
        %v833 = vpack.c.bf16 %v768, %v768
        %v834 = vpack.c.bf16 %v769, %v769
        %v835 = vpack.c.bf16 %v770, %v770
        %v836 = vpack.c.bf16 %v771, %v771
        %v837 = vpack.c.bf16 %v772, %v772
        %v838 = vpack.c.bf16 %v773, %v773
        %v839 = vpack.c.bf16 %v774, %v774
        %v840 = vpack.c.bf16 %v775, %v775
        %vm841 = vsmask.f32 256
        %vm842 = vsmask.f32 4368
        %vm843 = vmor %vm841, %vm842
        %v845 = vshrl.u32 %v809, 16
        %v847 = vrot.slane %v845, 7
        %v848 = vshll.u32 %v809, 16
        %v850 = vor.u32 %v847, %v848
        %v851 = vrot.slane %v847, 4
        %v853 = vshrl.u32 %v810, 16
        %v855 = vrot.slane %v853, 7
        %v856 = vshll.u32 %v810, 16
        %v858 = vor.u32 %v855, %v856
        %v859 = vsel %vm843, %v851, %v858
        %v860 = vrot.slane %v855, 4
        %v862 = vshrl.u32 %v811, 16
        %v864 = vrot.slane %v862, 7
        %v865 = vshll.u32 %v811, 16
        %v867 = vor.u32 %v864, %v865
        %v868 = vrot.slane %v864, 4
        %v870 = vshrl.u32 %v812, 16
        %v872 = vrot.slane %v870, 7
        %v873 = vshll.u32 %v812, 16
        %v875 = vor.u32 %v872, %v873
        %v876 = vsel %vm843, %v868, %v875
        %v877 = vrot.slane %v872, 4
        %v879 = vshrl.u32 %v813, 16
        %v881 = vrot.slane %v879, 7
        %v882 = vshll.u32 %v813, 16
        %v884 = vor.u32 %v881, %v882
        %v885 = vrot.slane %v881, 4
        %v887 = vshrl.u32 %v814, 16
        %v889 = vrot.slane %v887, 7
        %v890 = vshll.u32 %v814, 16
        %v892 = vor.u32 %v889, %v890
        %v893 = vsel %vm843, %v885, %v892
        %v894 = vrot.slane %v889, 4
        %v896 = vshrl.u32 %v815, 16
        %v898 = vrot.slane %v896, 7
        %v899 = vshll.u32 %v815, 16
        %v901 = vor.u32 %v898, %v899
        %v902 = vrot.slane %v898, 4
        %v904 = vshrl.u32 %v816, 16
        %v906 = vrot.slane %v904, 7
        %v907 = vshll.u32 %v816, 16
        %v909 = vor.u32 %v906, %v907
        %v910 = vsel %vm843, %v902, %v909
        %v911 = vrot.slane %v906, 4
        %v913 = vshrl.u32 %v817, 16
        %v915 = vrot.slane %v913, 7
        %v916 = vshll.u32 %v817, 16
        %v918 = vor.u32 %v915, %v916
        %v919 = vrot.slane %v915, 4
        %v921 = vshrl.u32 %v818, 16
        %v923 = vrot.slane %v921, 7
        %v924 = vshll.u32 %v818, 16
        %v926 = vor.u32 %v923, %v924
        %v927 = vsel %vm843, %v919, %v926
        %v928 = vrot.slane %v923, 4
        %v930 = vshrl.u32 %v819, 16
        %v932 = vrot.slane %v930, 7
        %v933 = vshll.u32 %v819, 16
        %v935 = vor.u32 %v932, %v933
        %v936 = vrot.slane %v932, 4
        %v938 = vshrl.u32 %v820, 16
        %v940 = vrot.slane %v938, 7
        %v941 = vshll.u32 %v820, 16
        %v943 = vor.u32 %v940, %v941
        %v944 = vsel %vm843, %v936, %v943
        %v945 = vrot.slane %v940, 4
        %v947 = vshrl.u32 %v821, 16
        %v949 = vrot.slane %v947, 7
        %v950 = vshll.u32 %v821, 16
        %v952 = vor.u32 %v949, %v950
        %v953 = vrot.slane %v949, 4
        %v955 = vshrl.u32 %v822, 16
        %v957 = vrot.slane %v955, 7
        %v958 = vshll.u32 %v822, 16
        %v960 = vor.u32 %v957, %v958
        %v961 = vsel %vm843, %v953, %v960
        %v962 = vrot.slane %v957, 4
        %v964 = vshrl.u32 %v823, 16
        %v966 = vrot.slane %v964, 7
        %v967 = vshll.u32 %v823, 16
        %v969 = vor.u32 %v966, %v967
        %v970 = vrot.slane %v966, 4
        %v972 = vshrl.u32 %v824, 16
        %v974 = vrot.slane %v972, 7
        %v975 = vshll.u32 %v824, 16
        %v977 = vor.u32 %v974, %v975
        %v978 = vsel %vm843, %v970, %v977
        %v979 = vrot.slane %v974, 4
        %v981 = vshrl.u32 %v825, 16
        %v983 = vrot.slane %v981, 7
        %v984 = vshll.u32 %v825, 16
        %v986 = vor.u32 %v983, %v984
        %v987 = vrot.slane %v983, 4
        %v989 = vshrl.u32 %v826, 16
        %v991 = vrot.slane %v989, 7
        %v992 = vshll.u32 %v826, 16
        %v994 = vor.u32 %v991, %v992
        %v995 = vsel %vm843, %v987, %v994
        %v996 = vrot.slane %v991, 4
        %v998 = vshrl.u32 %v827, 16
        %v1000 = vrot.slane %v998, 7
        %v1001 = vshll.u32 %v827, 16
        %v1003 = vor.u32 %v1000, %v1001
        %v1004 = vrot.slane %v1000, 4
        %v1006 = vshrl.u32 %v828, 16
        %v1008 = vrot.slane %v1006, 7
        %v1009 = vshll.u32 %v828, 16
        %v1011 = vor.u32 %v1008, %v1009
        %v1012 = vsel %vm843, %v1004, %v1011
        %v1013 = vrot.slane %v1008, 4
        %v1015 = vshrl.u32 %v829, 16
        %v1017 = vrot.slane %v1015, 7
        %v1018 = vshll.u32 %v829, 16
        %v1020 = vor.u32 %v1017, %v1018
        %v1021 = vrot.slane %v1017, 4
        %v1023 = vshrl.u32 %v830, 16
        %v1025 = vrot.slane %v1023, 7
        %v1026 = vshll.u32 %v830, 16
        %v1028 = vor.u32 %v1025, %v1026
        %v1029 = vsel %vm843, %v1021, %v1028
        %v1030 = vrot.slane %v1025, 4
        %v1032 = vshrl.u32 %v831, 16
        %v1034 = vrot.slane %v1032, 7
        %v1035 = vshll.u32 %v831, 16
        %v1037 = vor.u32 %v1034, %v1035
        %v1038 = vrot.slane %v1034, 4
        %v1040 = vshrl.u32 %v832, 16
        %v1042 = vrot.slane %v1040, 7
        %v1043 = vshll.u32 %v832, 16
        %v1045 = vor.u32 %v1042, %v1043
        %v1046 = vsel %vm843, %v1038, %v1045
        %v1047 = vrot.slane %v1042, 4
        %v1049 = vshrl.u32 %v833, 16
        %v1051 = vrot.slane %v1049, 7
        %v1052 = vshll.u32 %v833, 16
        %v1054 = vor.u32 %v1051, %v1052
        %v1055 = vrot.slane %v1051, 4
        %v1057 = vshrl.u32 %v834, 16
        %v1059 = vrot.slane %v1057, 7
        %v1060 = vshll.u32 %v834, 16
        %v1062 = vor.u32 %v1059, %v1060
        %v1063 = vsel %vm843, %v1055, %v1062
        %v1064 = vrot.slane %v1059, 4
        %v1066 = vshrl.u32 %v835, 16
        %v1068 = vrot.slane %v1066, 7
        %v1069 = vshll.u32 %v835, 16
        %v1071 = vor.u32 %v1068, %v1069
        %v1072 = vrot.slane %v1068, 4
        %v1074 = vshrl.u32 %v836, 16
        %v1076 = vrot.slane %v1074, 7
        %v1077 = vshll.u32 %v836, 16
        %v1079 = vor.u32 %v1076, %v1077
        %v1080 = vsel %vm843, %v1072, %v1079
        %v1081 = vrot.slane %v1076, 4
        %v1083 = vshrl.u32 %v837, 16
        %v1085 = vrot.slane %v1083, 7
        %v1086 = vshll.u32 %v837, 16
        %v1088 = vor.u32 %v1085, %v1086
        %v1089 = vrot.slane %v1085, 4
        %v1091 = vshrl.u32 %v838, 16
        %v1093 = vrot.slane %v1091, 7
        %v1094 = vshll.u32 %v838, 16
        %v1096 = vor.u32 %v1093, %v1094
        %v1097 = vsel %vm843, %v1089, %v1096
        %v1098 = vrot.slane %v1093, 4
        %v1100 = vshrl.u32 %v839, 16
        %v1102 = vrot.slane %v1100, 7
        %v1103 = vshll.u32 %v839, 16
        %v1105 = vor.u32 %v1102, %v1103
        %v1106 = vrot.slane %v1102, 4
        %v1108 = vshrl.u32 %v840, 16
        %v1110 = vrot.slane %v1108, 7
        %v1111 = vshll.u32 %v840, 16
        %v1113 = vor.u32 %v1110, %v1111
        %v1114 = vsel %vm843, %v1106, %v1113
        %v1115 = vrot.slane %v1110, 4
        %1116 = vrot.lane.b32.xlu0 %v850, 120
        %v1117 = vpop.permute.xlu0 %1116
        %1118 = vrot.lane.b32.xlu0 %v859, 120
        %v1119 = vpop.permute.xlu0 %1118
        %1120 = vrot.lane.b32.xlu0 %v860, 120
        %v1121 = vpop.permute.xlu0 %1120
        %1122 = vrot.lane.b32.xlu0 %v867, 120
        %v1123 = vpop.permute.xlu0 %1122
        %1124 = vrot.lane.b32.xlu0 %v876, 120
        %v1125 = vpop.permute.xlu0 %1124
        %1126 = vrot.lane.b32.xlu0 %v877, 120
        %v1127 = vpop.permute.xlu0 %1126
        %1128 = vrot.lane.b32.xlu0 %v884, 120
        %v1129 = vpop.permute.xlu0 %1128
        %1130 = vrot.lane.b32.xlu0 %v893, 120
        %v1131 = vpop.permute.xlu0 %1130
        %1132 = vrot.lane.b32.xlu0 %v894, 120
        %v1133 = vpop.permute.xlu0 %1132
        %1134 = vrot.lane.b32.xlu0 %v901, 120
        %v1135 = vpop.permute.xlu0 %1134
        %1136 = vrot.lane.b32.xlu0 %v910, 120
        %v1137 = vpop.permute.xlu0 %1136
        %1138 = vrot.lane.b32.xlu0 %v911, 120
        %v1139 = vpop.permute.xlu0 %1138
        %1140 = vrot.lane.b32.xlu0 %v918, 120
        %v1141 = vpop.permute.xlu0 %1140
        %1142 = vrot.lane.b32.xlu0 %v927, 120
        %v1143 = vpop.permute.xlu0 %1142
        %1144 = vrot.lane.b32.xlu0 %v928, 120
        %v1145 = vpop.permute.xlu0 %1144
        %1146 = vrot.lane.b32.xlu0 %v935, 120
        %v1147 = vpop.permute.xlu0 %1146
        %1148 = vrot.lane.b32.xlu0 %v944, 120
        %v1149 = vpop.permute.xlu0 %1148
        %1150 = vrot.lane.b32.xlu0 %v945, 120
        %v1151 = vpop.permute.xlu0 %1150
        %1152 = vrot.lane.b32.xlu0 %v952, 120
        %v1153 = vpop.permute.xlu0 %1152
        %1154 = vrot.lane.b32.xlu0 %v961, 120
        %v1155 = vpop.permute.xlu0 %1154
        %1156 = vrot.lane.b32.xlu0 %v962, 120
        %v1157 = vpop.permute.xlu0 %1156
        %1158 = vrot.lane.b32.xlu0 %v969, 120
        %v1159 = vpop.permute.xlu0 %1158
        %1160 = vrot.lane.b32.xlu0 %v978, 120
        %v1161 = vpop.permute.xlu0 %1160
        %1162 = vrot.lane.b32.xlu0 %v979, 120
        %v1163 = vpop.permute.xlu0 %1162
        %1164 = vrot.lane.b32.xlu0 %v986, 120
        %v1165 = vpop.permute.xlu0 %1164
        %1166 = vrot.lane.b32.xlu0 %v995, 120
        %v1167 = vpop.permute.xlu0 %1166
        %1168 = vrot.lane.b32.xlu0 %v996, 120
        %v1169 = vpop.permute.xlu0 %1168
        %1170 = vrot.lane.b32.xlu0 %v1003, 120
        %v1171 = vpop.permute.xlu0 %1170
        %1172 = vrot.lane.b32.xlu0 %v1012, 120
        %v1173 = vpop.permute.xlu0 %1172
        %1174 = vrot.lane.b32.xlu0 %v1013, 120
        %v1175 = vpop.permute.xlu0 %1174
        %1176 = vrot.lane.b32.xlu0 %v1020, 120
        %v1177 = vpop.permute.xlu0 %1176
        %1178 = vrot.lane.b32.xlu0 %v1029, 120
        %v1179 = vpop.permute.xlu0 %1178
        %1180 = vrot.lane.b32.xlu0 %v1030, 120
        %v1181 = vpop.permute.xlu0 %1180
        %1182 = vrot.lane.b32.xlu0 %v1037, 120
        %v1183 = vpop.permute.xlu0 %1182
        %1184 = vrot.lane.b32.xlu0 %v1046, 120
        %v1185 = vpop.permute.xlu0 %1184
        %1186 = vrot.lane.b32.xlu0 %v1047, 120
        %v1187 = vpop.permute.xlu0 %1186
        %1188 = vrot.lane.b32.xlu0 %v1054, 120
        %v1189 = vpop.permute.xlu0 %1188
        %1190 = vrot.lane.b32.xlu0 %v1063, 120
        %v1191 = vpop.permute.xlu0 %1190
        %1192 = vrot.lane.b32.xlu0 %v1064, 120
        %v1193 = vpop.permute.xlu0 %1192
        %1194 = vrot.lane.b32.xlu0 %v1071, 120
        %v1195 = vpop.permute.xlu0 %1194
        %1196 = vrot.lane.b32.xlu0 %v1080, 120
        %v1197 = vpop.permute.xlu0 %1196
        %1198 = vrot.lane.b32.xlu0 %v1081, 120
        %v1199 = vpop.permute.xlu0 %1198
        %1200 = vrot.lane.b32.xlu0 %v1088, 120
        %v1201 = vpop.permute.xlu0 %1200
        %1202 = vrot.lane.b32.xlu0 %v1097, 120
        %v1203 = vpop.permute.xlu0 %1202
        %1204 = vrot.lane.b32.xlu0 %v1098, 120
        %v1205 = vpop.permute.xlu0 %1204
        %1206 = vrot.lane.b32.xlu0 %v1105, 120
        %v1207 = vpop.permute.xlu0 %1206
        %1208 = vrot.lane.b32.xlu0 %v1114, 120
        %v1209 = vpop.permute.xlu0 %1208
        %1210 = vrot.lane.b32.xlu0 %v1115, 120
        %v1211 = vpop.permute.xlu0 %1210
        %s1260 = scalar_lea.vmem [#allocation2], 12
        %vm1261 = vcmask 27648
        %vm1262 = vsmask.f32 7938
        %vm1263 = vmand %vm1261, %vm1262
        %v1264 = vld [vmem:[%s1260] sm:$0xf]
        %v1265 = vsel %vm1263, %v1117, %v1264
        %1266 = vst [vmem:[%s1260] sm:$0xf] %v1265
        %vm1267 = vcmask 27648
        %1268 = vst.msk [vmem:[%s1260 + $0x4] sm:$0xf] %vm1267, %v1119
        %vm1269 = vcmask 24576
        %vm1270 = vmand %vm1269, %vm841
        %v1271 = vld [vmem:[%s1260 + $0x8] sm:$0x1]
        %v1272 = vsel %vm1270, %v1121, %v1271
        %1273 = vst [vmem:[%s1260 + $0x8] sm:$0x1] %v1272
        %v1274 = vld [vmem:[%s1260 + $0xc] sm:$0xf]
        %v1275 = vsel %vm1263, %v1123, %v1274
        %1276 = vst [vmem:[%s1260 + $0xc] sm:$0xf] %v1275
        %1277 = vst.msk [vmem:[%s1260 + $0x10] sm:$0xf] %vm1267, %v1125
        %v1278 = vld [vmem:[%s1260 + $0x14] sm:$0x1]
        %v1279 = vsel %vm1270, %v1127, %v1278
        %1280 = vst [vmem:[%s1260 + $0x14] sm:$0x1] %v1279
        %v1281 = vld [vmem:[%s1260 + $0x18] sm:$0xf]
        %v1282 = vsel %vm1263, %v1129, %v1281
        %1283 = vst [vmem:[%s1260 + $0x18] sm:$0xf] %v1282
        %1284 = vst.msk [vmem:[%s1260 + $0x1c] sm:$0xf] %vm1267, %v1131
        %v1285 = vld [vmem:[%s1260 + $0x20] sm:$0x1]
        %v1286 = vsel %vm1270, %v1133, %v1285
        %1287 = vst [vmem:[%s1260 + $0x20] sm:$0x1] %v1286
        %v1288 = vld [vmem:[%s1260 + $0x24] sm:$0xf]
        %v1289 = vsel %vm1263, %v1135, %v1288
        %1290 = vst [vmem:[%s1260 + $0x24] sm:$0xf] %v1289
        %1291 = vst.msk [vmem:[%s1260 + $0x28] sm:$0xf] %vm1267, %v1137
        %v1292 = vld [vmem:[%s1260 + $0x2c] sm:$0x1]
        %v1293 = vsel %vm1270, %v1139, %v1292
        %1294 = vst [vmem:[%s1260 + $0x2c] sm:$0x1] %v1293
        %v1295 = vld [vmem:[%s1260 + $0x30] sm:$0xf]
        %v1296 = vsel %vm1263, %v1141, %v1295
        %1297 = vst [vmem:[%s1260 + $0x30] sm:$0xf] %v1296
        %1298 = vst.msk [vmem:[%s1260 + $0x34] sm:$0xf] %vm1267, %v1143
        %v1299 = vld [vmem:[%s1260 + $0x38] sm:$0x1]
        %v1300 = vsel %vm1270, %v1145, %v1299
        %1301 = vst [vmem:[%s1260 + $0x38] sm:$0x1] %v1300
        %v1302 = vld [vmem:[%s1260 + $0x3c] sm:$0xf]
        %v1303 = vsel %vm1263, %v1147, %v1302
        %1304 = vst [vmem:[%s1260 + $0x3c] sm:$0xf] %v1303
        %1305 = vst.msk [vmem:[%s1260 + $0x40] sm:$0xf] %vm1267, %v1149
        %v1306 = vld [vmem:[%s1260 + $0x44] sm:$0x1]
        %v1307 = vsel %vm1270, %v1151, %v1306
        %1308 = vst [vmem:[%s1260 + $0x44] sm:$0x1] %v1307
        %v1309 = vld [vmem:[%s1260 + $0x48] sm:$0xf]
        %v1310 = vsel %vm1263, %v1153, %v1309
        %1311 = vst [vmem:[%s1260 + $0x48] sm:$0xf] %v1310
        %1312 = vst.msk [vmem:[%s1260 + $0x4c] sm:$0xf] %vm1267, %v1155
        %v1313 = vld [vmem:[%s1260 + $0x50] sm:$0x1]
        %v1314 = vsel %vm1270, %v1157, %v1313
        %1315 = vst [vmem:[%s1260 + $0x50] sm:$0x1] %v1314
        %v1316 = vld [vmem:[%s1260 + $0x54] sm:$0xf]
        %v1317 = vsel %vm1263, %v1159, %v1316
        %1318 = vst [vmem:[%s1260 + $0x54] sm:$0xf] %v1317
        %1319 = vst.msk [vmem:[%s1260 + $0x58] sm:$0xf] %vm1267, %v1161
        %v1320 = vld [vmem:[%s1260 + $0x5c] sm:$0x1]
        %v1321 = vsel %vm1270, %v1163, %v1320
        %1322 = vst [vmem:[%s1260 + $0x5c] sm:$0x1] %v1321
        %v1323 = vld [vmem:[%s1260 + $0x60] sm:$0xf]
        %v1324 = vsel %vm1263, %v1165, %v1323
        %1325 = vst [vmem:[%s1260 + $0x60] sm:$0xf] %v1324
        %1326 = vst.msk [vmem:[%s1260 + $0x64] sm:$0xf] %vm1267, %v1167
        %v1327 = vld [vmem:[%s1260 + $0x68] sm:$0x1]
        %v1328 = vsel %vm1270, %v1169, %v1327
        %1329 = vst [vmem:[%s1260 + $0x68] sm:$0x1] %v1328
        %v1330 = vld [vmem:[%s1260 + $0x6c] sm:$0xf]
        %v1331 = vsel %vm1263, %v1171, %v1330
        %1332 = vst [vmem:[%s1260 + $0x6c] sm:$0xf] %v1331
        %1333 = vst.msk [vmem:[%s1260 + $0x70] sm:$0xf] %vm1267, %v1173
        %v1334 = vld [vmem:[%s1260 + $0x74] sm:$0x1]
        %v1335 = vsel %vm1270, %v1175, %v1334
        %1336 = vst [vmem:[%s1260 + $0x74] sm:$0x1] %v1335
        %v1337 = vld [vmem:[%s1260 + $0x78] sm:$0xf]
        %v1338 = vsel %vm1263, %v1177, %v1337
        %1339 = vst [vmem:[%s1260 + $0x78] sm:$0xf] %v1338
        %1340 = vst.msk [vmem:[%s1260 + $0x7c] sm:$0xf] %vm1267, %v1179
        %v1341 = vld [vmem:[%s1260 + $0x80] sm:$0x1]
        %v1342 = vsel %vm1270, %v1181, %v1341
        %1343 = vst [vmem:[%s1260 + $0x80] sm:$0x1] %v1342
        %v1344 = vld [vmem:[%s1260 + $0x84] sm:$0xf]
        %v1345 = vsel %vm1263, %v1183, %v1344
        %1346 = vst [vmem:[%s1260 + $0x84] sm:$0xf] %v1345
        %1347 = vst.msk [vmem:[%s1260 + $0x88] sm:$0xf] %vm1267, %v1185
        %v1348 = vld [vmem:[%s1260 + $0x8c] sm:$0x1]
        %v1349 = vsel %vm1270, %v1187, %v1348
        %1350 = vst [vmem:[%s1260 + $0x8c] sm:$0x1] %v1349
        %v1351 = vld [vmem:[%s1260 + $0x90] sm:$0xf]
        %v1352 = vsel %vm1263, %v1189, %v1351
        %1353 = vst [vmem:[%s1260 + $0x90] sm:$0xf] %v1352
        %1354 = vst.msk [vmem:[%s1260 + $0x94] sm:$0xf] %vm1267, %v1191
        %v1355 = vld [vmem:[%s1260 + $0x98] sm:$0x1]
        %v1356 = vsel %vm1270, %v1193, %v1355
        %1357 = vst [vmem:[%s1260 + $0x98] sm:$0x1] %v1356
        %v1358 = vld [vmem:[%s1260 + $0x9c] sm:$0xf]
        %v1359 = vsel %vm1263, %v1195, %v1358
        %1360 = vst [vmem:[%s1260 + $0x9c] sm:$0xf] %v1359
        %1361 = vst.msk [vmem:[%s1260 + $0xa0] sm:$0xf] %vm1267, %v1197
        %v1362 = vld [vmem:[%s1260 + $0xa4] sm:$0x1]
        %v1363 = vsel %vm1270, %v1199, %v1362
        %1364 = vst [vmem:[%s1260 + $0xa4] sm:$0x1] %v1363
        %v1365 = vld [vmem:[%s1260 + $0xa8] sm:$0xf]
        %v1366 = vsel %vm1263, %v1201, %v1365
        %1367 = vst [vmem:[%s1260 + $0xa8] sm:$0xf] %v1366
        %1368 = vst.msk [vmem:[%s1260 + $0xac] sm:$0xf] %vm1267, %v1203
        %v1369 = vld [vmem:[%s1260 + $0xb0] sm:$0x1]
        %v1370 = vsel %vm1270, %v1205, %v1369
        %1371 = vst [vmem:[%s1260 + $0xb0] sm:$0x1] %v1370
        %v1372 = vld [vmem:[%s1260 + $0xb4] sm:$0xf]
        %v1373 = vsel %vm1263, %v1207, %v1372
        %1374 = vst [vmem:[%s1260 + $0xb4] sm:$0xf] %v1373
        %1375 = vst.msk [vmem:[%s1260 + $0xb8] sm:$0xf] %vm1267, %v1209
        %v1376 = vld [vmem:[%s1260 + $0xbc] sm:$0x1]
        %v1377 = vsel %vm1270, %v1211, %v1376
        %1378 = vst [vmem:[%s1260 + $0xbc] sm:$0x1] %v1377
        %v1379 = vld [vmem:[#allocation2] sm:$0xf]
        %v1380 = vld [vmem:[#allocation2 + $0x4] sm:$0xf]
        %v1381 = vld [vmem:[#allocation2 + $0x8] sm:$0x1]
        %v1382 = vld [vmem:[#allocation2 + $0xc] sm:$0xf]
        %v1383 = vld [vmem:[#allocation2 + $0x10] sm:$0xf]
        %v1384 = vld [vmem:[#allocation2 + $0x14] sm:$0x1]
        %v1385 = vld [vmem:[#allocation2 + $0x18] sm:$0xf]
        %v1386 = vld [vmem:[#allocation2 + $0x1c] sm:$0xf]
        %v1387 = vld [vmem:[#allocation2 + $0x20] sm:$0x1]
        %v1388 = vld [vmem:[#allocation2 + $0x24] sm:$0xf]
        %v1389 = vld [vmem:[#allocation2 + $0x28] sm:$0xf]
        %v1390 = vld [vmem:[#allocation2 + $0x2c] sm:$0x1]
        %v1391 = vld [vmem:[#allocation2 + $0x30] sm:$0xf]
        %v1392 = vld [vmem:[#allocation2 + $0x34] sm:$0xf]
        %v1393 = vld [vmem:[#allocation2 + $0x38] sm:$0x1]
        %v1394 = vld [vmem:[#allocation2 + $0x3c] sm:$0xf]
        %v1395 = vld [vmem:[#allocation2 + $0x40] sm:$0xf]
        %v1396 = vld [vmem:[#allocation2 + $0x44] sm:$0x1]
        %v1397 = vld [vmem:[#allocation2 + $0x48] sm:$0xf]
        %v1398 = vld [vmem:[#allocation2 + $0x4c] sm:$0xf]
        %v1399 = vld [vmem:[#allocation2 + $0x50] sm:$0x1]
        %v1400 = vld [vmem:[#allocation2 + $0x54] sm:$0xf]
        %v1401 = vld [vmem:[#allocation2 + $0x58] sm:$0xf]
        %v1402 = vld [vmem:[#allocation2 + $0x5c] sm:$0x1]
        %v1403 = vld [vmem:[#allocation2 + $0x60] sm:$0xf]
        %v1404 = vld [vmem:[#allocation2 + $0x64] sm:$0xf]
        %v1405 = vld [vmem:[#allocation2 + $0x68] sm:$0x1]
        %v1406 = vld [vmem:[#allocation2 + $0x6c] sm:$0xf]
        %v1407 = vld [vmem:[#allocation2 + $0x70] sm:$0xf]
        %v1408 = vld [vmem:[#allocation2 + $0x74] sm:$0x1]
        %v1409 = vld [vmem:[#allocation2 + $0x78] sm:$0xf]
        %v1410 = vld [vmem:[#allocation2 + $0x7c] sm:$0xf]
        %v1411 = vld [vmem:[#allocation2 + $0x80] sm:$0x1]
        %v1412 = vld [vmem:[#allocation2 + $0x84] sm:$0xf]
        %v1413 = vld [vmem:[#allocation2 + $0x88] sm:$0xf]
        %v1414 = vld [vmem:[#allocation2 + $0x8c] sm:$0x1]
        %v1415 = vld [vmem:[#allocation2 + $0x90] sm:$0xf]
        %v1416 = vld [vmem:[#allocation2 + $0x94] sm:$0xf]
        %v1417 = vld [vmem:[#allocation2 + $0x98] sm:$0x1]
        %v1418 = vld [vmem:[#allocation2 + $0x9c] sm:$0xf]
        %v1419 = vld [vmem:[#allocation2 + $0xa0] sm:$0xf]
        %v1420 = vld [vmem:[#allocation2 + $0xa4] sm:$0x1]
        %v1421 = vld [vmem:[#allocation2 + $0xa8] sm:$0xf]
        %v1422 = vld [vmem:[#allocation2 + $0xac] sm:$0xf]
        %v1423 = vld [vmem:[#allocation2 + $0xb0] sm:$0x1]
        %v1424 = vld [vmem:[#allocation2 + $0xb4] sm:$0xf]
        %v1425 = vld [vmem:[#allocation2 + $0xb8] sm:$0xf]
        %v1426 = vld [vmem:[#allocation2 + $0xbc] sm:$0x1]
        %v1427 = vld [vmem:[#allocation2 + $0xc0] sm:$0xf]
        %v1428 = vld [vmem:[#allocation2 + $0xc4] sm:$0xf]
        %v1429 = vld [vmem:[#allocation2 + $0xc8] sm:$0x1]
        %v1430 = vld [vmem:[#allocation2 + $0xcc] sm:$0xf]
        %v1431 = vld [vmem:[#allocation2 + $0xd0] sm:$0xf]
        %v1432 = vld [vmem:[#allocation2 + $0xd4] sm:$0x1]
        %v1469 = vunpack.c.l.b16 %v1379
        %v1470 = vunpack.c.l.b16 %v1380
        %v1471 = vunpack.c.l.b16 %v1382
        %v1472 = vunpack.c.l.b16 %v1383
        %v1473 = vunpack.c.l.b16 %v1385
        %v1474 = vunpack.c.l.b16 %v1386
        %v1475 = vunpack.c.l.b16 %v1388
        %v1476 = vunpack.c.l.b16 %v1389
        %v1477 = vunpack.c.l.b16 %v1391
        %v1478 = vunpack.c.l.b16 %v1392
        %v1479 = vunpack.c.l.b16 %v1394
        %v1480 = vunpack.c.l.b16 %v1395
        %v1481 = vunpack.c.l.b16 %v1397
        %v1482 = vunpack.c.l.b16 %v1398
        %v1483 = vunpack.c.l.b16 %v1400
        %v1484 = vunpack.c.l.b16 %v1401
        %v1485 = vunpack.c.l.b16 %v1403
        %v1486 = vunpack.c.l.b16 %v1404
        %v1487 = vunpack.c.l.b16 %v1406
        %v1488 = vunpack.c.l.b16 %v1407
        %v1489 = vunpack.c.l.b16 %v1409
        %v1490 = vunpack.c.l.b16 %v1410
        %v1491 = vunpack.c.l.b16 %v1412
        %v1492 = vunpack.c.l.b16 %v1413
        %v1493 = vunpack.c.l.b16 %v1415
        %v1494 = vunpack.c.l.b16 %v1416
        %v1495 = vunpack.c.l.b16 %v1418
        %v1496 = vunpack.c.l.b16 %v1419
        %v1497 = vunpack.c.l.b16 %v1421
        %v1498 = vunpack.c.l.b16 %v1422
        %v1499 = vunpack.c.l.b16 %v1424
        %v1500 = vunpack.c.l.b16 %v1425
        %v1501 = vunpack.c.l.b16 %v1427
        %v1502 = vunpack.c.l.b16 %v1428
        %v1503 = vunpack.c.l.b16 %v1430
        %v1504 = vunpack.c.l.b16 %v1431
        %v1505 = vpack.c.b16 %v1470, %v1469
        %v1506 = vpack.c.b16 %v1472, %v1471
        %v1507 = vpack.c.b16 %v1474, %v1473
        %v1508 = vpack.c.b16 %v1476, %v1475
        %v1509 = vpack.c.b16 %v1478, %v1477
        %v1510 = vpack.c.b16 %v1480, %v1479
        %v1511 = vpack.c.b16 %v1482, %v1481
        %v1512 = vpack.c.b16 %v1484, %v1483
        %v1513 = vpack.c.b16 %v1486, %v1485
        %v1514 = vpack.c.b16 %v1488, %v1487
        %v1515 = vpack.c.b16 %v1490, %v1489
        %v1516 = vpack.c.b16 %v1492, %v1491
        %v1517 = vpack.c.b16 %v1494, %v1493
        %v1518 = vpack.c.b16 %v1496, %v1495
        %v1519 = vpack.c.b16 %v1498, %v1497
        %v1520 = vpack.c.b16 %v1500, %v1499
        %v1521 = vpack.c.b16 %v1502, %v1501
        %v1522 = vpack.c.b16 %v1504, %v1503
        %v1541 = vunpack.c.l.b16 %v1381
        %v1542 = vunpack.c.l.b16 %v1384
        %v1543 = vunpack.c.l.b16 %v1387
        %v1544 = vunpack.c.l.b16 %v1390
        %v1545 = vunpack.c.l.b16 %v1393
        %v1546 = vunpack.c.l.b16 %v1396
        %v1547 = vunpack.c.l.b16 %v1399
        %v1548 = vunpack.c.l.b16 %v1402
        %v1549 = vunpack.c.l.b16 %v1405
        %v1550 = vunpack.c.l.b16 %v1408
        %v1551 = vunpack.c.l.b16 %v1411
        %v1552 = vunpack.c.l.b16 %v1414
        %v1553 = vunpack.c.l.b16 %v1417
        %v1554 = vunpack.c.l.b16 %v1420
        %v1555 = vunpack.c.l.b16 %v1423
        %v1556 = vunpack.c.l.b16 %v1426
        %v1557 = vunpack.c.l.b16 %v1429
        %v1558 = vunpack.c.l.b16 %v1432
        %v1559 = vpack.c.b16 %v1541, %v1541
        %v1560 = vpack.c.b16 %v1542, %v1542
        %v1561 = vpack.c.b16 %v1543, %v1543
        %v1562 = vpack.c.b16 %v1544, %v1544
        %v1563 = vpack.c.b16 %v1545, %v1545
        %v1564 = vpack.c.b16 %v1546, %v1546
        %v1565 = vpack.c.b16 %v1547, %v1547
        %v1566 = vpack.c.b16 %v1548, %v1548
        %v1567 = vpack.c.b16 %v1549, %v1549
        %v1568 = vpack.c.b16 %v1550, %v1550
        %v1569 = vpack.c.b16 %v1551, %v1551
        %v1570 = vpack.c.b16 %v1552, %v1552
        %v1571 = vpack.c.b16 %v1553, %v1553
        %v1572 = vpack.c.b16 %v1554, %v1554
        %v1573 = vpack.c.b16 %v1555, %v1555
        %v1574 = vpack.c.b16 %v1556, %v1556
        %v1575 = vpack.c.b16 %v1557, %v1557
        %v1576 = vpack.c.b16 %v1558, %v1558
        %vm1577 = vsmask.f32 7424
        %v1579 = vshrl.u32 %v1505, 16
        %v1581 = vshll.u32 %v1505, 16
        %v1583 = vrot.slane %v1581, 1
        %v1584 = vor.u32 %v1579, %v1583
        %v1586 = vshll.u32 %v1559, 16
        %v1588 = vrot.slane %v1586, 1
        %v1589 = vsel %vm1577, %v1584, %v1588
        %v1591 = vshrl.u32 %v1506, 16
        %v1593 = vshll.u32 %v1506, 16
        %v1595 = vrot.slane %v1593, 1
        %v1596 = vor.u32 %v1591, %v1595
        %v1598 = vshll.u32 %v1560, 16
        %v1600 = vrot.slane %v1598, 1
        %v1601 = vsel %vm1577, %v1596, %v1600
        %v1603 = vshrl.u32 %v1507, 16
        %v1605 = vshll.u32 %v1507, 16
        %v1607 = vrot.slane %v1605, 1
        %v1608 = vor.u32 %v1603, %v1607
        %v1610 = vshll.u32 %v1561, 16
        %v1612 = vrot.slane %v1610, 1
        %v1613 = vsel %vm1577, %v1608, %v1612
        %v1615 = vshrl.u32 %v1508, 16
        %v1617 = vshll.u32 %v1508, 16
        %v1619 = vrot.slane %v1617, 1
        %v1620 = vor.u32 %v1615, %v1619
        %v1622 = vshll.u32 %v1562, 16
        %v1624 = vrot.slane %v1622, 1
        %v1625 = vsel %vm1577, %v1620, %v1624
        %v1627 = vshrl.u32 %v1509, 16
        %v1629 = vshll.u32 %v1509, 16
        %v1631 = vrot.slane %v1629, 1
        %v1632 = vor.u32 %v1627, %v1631
        %v1634 = vshll.u32 %v1563, 16
        %v1636 = vrot.slane %v1634, 1
        %v1637 = vsel %vm1577, %v1632, %v1636
        %v1639 = vshrl.u32 %v1510, 16
        %v1641 = vshll.u32 %v1510, 16
        %v1643 = vrot.slane %v1641, 1
        %v1644 = vor.u32 %v1639, %v1643
        %v1646 = vshll.u32 %v1564, 16
        %v1648 = vrot.slane %v1646, 1
        %v1649 = vsel %vm1577, %v1644, %v1648
        %v1651 = vshrl.u32 %v1511, 16
        %v1653 = vshll.u32 %v1511, 16
        %v1655 = vrot.slane %v1653, 1
        %v1656 = vor.u32 %v1651, %v1655
        %v1658 = vshll.u32 %v1565, 16
        %v1660 = vrot.slane %v1658, 1
        %v1661 = vsel %vm1577, %v1656, %v1660
        %v1663 = vshrl.u32 %v1512, 16
        %v1665 = vshll.u32 %v1512, 16
        %v1667 = vrot.slane %v1665, 1
        %v1668 = vor.u32 %v1663, %v1667
        %v1670 = vshll.u32 %v1566, 16
        %v1672 = vrot.slane %v1670, 1
        %v1673 = vsel %vm1577, %v1668, %v1672
        %v1675 = vshrl.u32 %v1513, 16
        %v1677 = vshll.u32 %v1513, 16
        %v1679 = vrot.slane %v1677, 1
        %v1680 = vor.u32 %v1675, %v1679
        %v1682 = vshll.u32 %v1567, 16
        %v1684 = vrot.slane %v1682, 1
        %v1685 = vsel %vm1577, %v1680, %v1684
        %v1687 = vshrl.u32 %v1514, 16
        %v1689 = vshll.u32 %v1514, 16
        %v1691 = vrot.slane %v1689, 1
        %v1692 = vor.u32 %v1687, %v1691
        %v1694 = vshll.u32 %v1568, 16
        %v1696 = vrot.slane %v1694, 1
        %v1697 = vsel %vm1577, %v1692, %v1696
        %v1699 = vshrl.u32 %v1515, 16
        %v1701 = vshll.u32 %v1515, 16
        %v1703 = vrot.slane %v1701, 1
        %v1704 = vor.u32 %v1699, %v1703
        %v1706 = vshll.u32 %v1569, 16
        %v1708 = vrot.slane %v1706, 1
        %v1709 = vsel %vm1577, %v1704, %v1708
        %v1711 = vshrl.u32 %v1516, 16
        %v1713 = vshll.u32 %v1516, 16
        %v1715 = vrot.slane %v1713, 1
        %v1716 = vor.u32 %v1711, %v1715
        %v1718 = vshll.u32 %v1570, 16
        %v1720 = vrot.slane %v1718, 1
        %v1721 = vsel %vm1577, %v1716, %v1720
        %v1723 = vshrl.u32 %v1517, 16
        %v1725 = vshll.u32 %v1517, 16
        %v1727 = vrot.slane %v1725, 1
        %v1728 = vor.u32 %v1723, %v1727
        %v1730 = vshll.u32 %v1571, 16
        %v1732 = vrot.slane %v1730, 1
        %v1733 = vsel %vm1577, %v1728, %v1732
        %v1735 = vshrl.u32 %v1518, 16
        %v1737 = vshll.u32 %v1518, 16
        %v1739 = vrot.slane %v1737, 1
        %v1740 = vor.u32 %v1735, %v1739
        %v1742 = vshll.u32 %v1572, 16
        %v1744 = vrot.slane %v1742, 1
        %v1745 = vsel %vm1577, %v1740, %v1744
        %v1747 = vshrl.u32 %v1519, 16
        %v1749 = vshll.u32 %v1519, 16
        %v1751 = vrot.slane %v1749, 1
        %v1752 = vor.u32 %v1747, %v1751
        %v1754 = vshll.u32 %v1573, 16
        %v1756 = vrot.slane %v1754, 1
        %v1757 = vsel %vm1577, %v1752, %v1756
        %v1759 = vshrl.u32 %v1520, 16
        %v1761 = vshll.u32 %v1520, 16
        %v1763 = vrot.slane %v1761, 1
        %v1764 = vor.u32 %v1759, %v1763
        %v1766 = vshll.u32 %v1574, 16
        %v1768 = vrot.slane %v1766, 1
        %v1769 = vsel %vm1577, %v1764, %v1768
        %v1771 = vshrl.u32 %v1521, 16
        %v1773 = vshll.u32 %v1521, 16
        %v1775 = vrot.slane %v1773, 1
        %v1776 = vor.u32 %v1771, %v1775
        %v1778 = vshll.u32 %v1575, 16
        %v1780 = vrot.slane %v1778, 1
        %v1781 = vsel %vm1577, %v1776, %v1780
        %v1783 = vshrl.u32 %v1522, 16
        %v1785 = vshll.u32 %v1522, 16
        %v1787 = vrot.slane %v1785, 1
        %v1788 = vor.u32 %v1783, %v1787
        %v1790 = vshll.u32 %v1576, 16
        %v1792 = vrot.slane %v1790, 1
        %v1793 = vsel %vm1577, %v1788, %v1792
        %1794 = vrot.lane.b32.xlu0 %v1589, 4
        %v1795 = vpop.permute.xlu0 %1794
        %1796 = vrot.lane.b32.xlu0 %v1601, 4
        %v1797 = vpop.permute.xlu0 %1796
        %1798 = vrot.lane.b32.xlu0 %v1613, 4
        %v1799 = vpop.permute.xlu0 %1798
        %1800 = vrot.lane.b32.xlu0 %v1625, 4
        %v1801 = vpop.permute.xlu0 %1800
        %1802 = vrot.lane.b32.xlu0 %v1637, 4
        %v1803 = vpop.permute.xlu0 %1802
        %1804 = vrot.lane.b32.xlu0 %v1649, 4
        %v1805 = vpop.permute.xlu0 %1804
        %1806 = vrot.lane.b32.xlu0 %v1661, 4
        %v1807 = vpop.permute.xlu0 %1806
        %1808 = vrot.lane.b32.xlu0 %v1673, 4
        %v1809 = vpop.permute.xlu0 %1808
        %1810 = vrot.lane.b32.xlu0 %v1685, 4
        %v1811 = vpop.permute.xlu0 %1810
        %1812 = vrot.lane.b32.xlu0 %v1697, 4
        %v1813 = vpop.permute.xlu0 %1812
        %1814 = vrot.lane.b32.xlu0 %v1709, 4
        %v1815 = vpop.permute.xlu0 %1814
        %1816 = vrot.lane.b32.xlu0 %v1721, 4
        %v1817 = vpop.permute.xlu0 %1816
        %1818 = vrot.lane.b32.xlu0 %v1733, 4
        %v1819 = vpop.permute.xlu0 %1818
        %1820 = vrot.lane.b32.xlu0 %v1745, 4
        %v1821 = vpop.permute.xlu0 %1820
        %1822 = vrot.lane.b32.xlu0 %v1757, 4
        %v1823 = vpop.permute.xlu0 %1822
        %1824 = vrot.lane.b32.xlu0 %v1769, 4
        %v1825 = vpop.permute.xlu0 %1824
        %1826 = vrot.lane.b32.xlu0 %v1781, 4
        %v1827 = vpop.permute.xlu0 %1826
        %1828 = vrot.lane.b32.xlu0 %v1793, 4
        %v1829 = vpop.permute.xlu0 %1828
        %vm1830 = vcmask 1046528
        %v1831 = vrot.slane %v1505, 1
        %v1832 = vrot.slane %v1559, 1
        %v1833 = vsel %vm1830, %v1831, %v1832
        %v1834 = vrot.slane %v1506, 1
        %v1835 = vrot.slane %v1560, 1
        %v1836 = vsel %vm1830, %v1834, %v1835
        %v1837 = vrot.slane %v1507, 1
        %v1838 = vrot.slane %v1561, 1
        %v1839 = vsel %vm1830, %v1837, %v1838
        %v1840 = vrot.slane %v1508, 1
        %v1841 = vrot.slane %v1562, 1
        %v1842 = vsel %vm1830, %v1840, %v1841
        %v1843 = vrot.slane %v1509, 1
        %v1844 = vrot.slane %v1563, 1
        %v1845 = vsel %vm1830, %v1843, %v1844
        %v1846 = vrot.slane %v1510, 1
        %v1847 = vrot.slane %v1564, 1
        %v1848 = vsel %vm1830, %v1846, %v1847
        %v1849 = vrot.slane %v1511, 1
        %v1850 = vrot.slane %v1565, 1
        %v1851 = vsel %vm1830, %v1849, %v1850
        %v1852 = vrot.slane %v1512, 1
        %v1853 = vrot.slane %v1566, 1
        %v1854 = vsel %vm1830, %v1852, %v1853
        %v1855 = vrot.slane %v1513, 1
        %v1856 = vrot.slane %v1567, 1
        %v1857 = vsel %vm1830, %v1855, %v1856
        %v1858 = vrot.slane %v1514, 1
        %v1859 = vrot.slane %v1568, 1
        %v1860 = vsel %vm1830, %v1858, %v1859
        %v1861 = vrot.slane %v1515, 1
        %v1862 = vrot.slane %v1569, 1
        %v1863 = vsel %vm1830, %v1861, %v1862
        %v1864 = vrot.slane %v1516, 1
        %v1865 = vrot.slane %v1570, 1
        %v1866 = vsel %vm1830, %v1864, %v1865
        %v1867 = vrot.slane %v1517, 1
        %v1868 = vrot.slane %v1571, 1
        %v1869 = vsel %vm1830, %v1867, %v1868
        %v1870 = vrot.slane %v1518, 1
        %v1871 = vrot.slane %v1572, 1
        %v1872 = vsel %vm1830, %v1870, %v1871
        %v1873 = vrot.slane %v1519, 1
        %v1874 = vrot.slane %v1573, 1
        %v1875 = vsel %vm1830, %v1873, %v1874
        %v1876 = vrot.slane %v1520, 1
        %v1877 = vrot.slane %v1574, 1
        %v1878 = vsel %vm1830, %v1876, %v1877
        %v1879 = vrot.slane %v1521, 1
        %v1880 = vrot.slane %v1575, 1
        %v1881 = vsel %vm1830, %v1879, %v1880
        %v1882 = vrot.slane %v1522, 1
        %v1883 = vrot.slane %v1576, 1
        %v1884 = vsel %vm1830, %v1882, %v1883
        %1885 = vrot.lane.b32.xlu0 %v1833, 8
        %v1886 = vpop.permute.xlu0 %1885
        %1887 = vrot.lane.b32.xlu0 %v1836, 8
        %v1888 = vpop.permute.xlu0 %1887
        %1889 = vrot.lane.b32.xlu0 %v1839, 8
        %v1890 = vpop.permute.xlu0 %1889
        %1891 = vrot.lane.b32.xlu0 %v1842, 8
        %v1892 = vpop.permute.xlu0 %1891
        %1893 = vrot.lane.b32.xlu0 %v1845, 8
        %v1894 = vpop.permute.xlu0 %1893
        %1895 = vrot.lane.b32.xlu0 %v1848, 8
        %v1896 = vpop.permute.xlu0 %1895
        %1897 = vrot.lane.b32.xlu0 %v1851, 8
        %v1898 = vpop.permute.xlu0 %1897
        %1899 = vrot.lane.b32.xlu0 %v1854, 8
        %v1900 = vpop.permute.xlu0 %1899
        %1901 = vrot.lane.b32.xlu0 %v1857, 8
        %v1902 = vpop.permute.xlu0 %1901
        %1903 = vrot.lane.b32.xlu0 %v1860, 8
        %v1904 = vpop.permute.xlu0 %1903
        %1905 = vrot.lane.b32.xlu0 %v1863, 8
        %v1906 = vpop.permute.xlu0 %1905
        %1907 = vrot.lane.b32.xlu0 %v1866, 8
        %v1908 = vpop.permute.xlu0 %1907
        %1909 = vrot.lane.b32.xlu0 %v1869, 8
        %v1910 = vpop.permute.xlu0 %1909
        %1911 = vrot.lane.b32.xlu0 %v1872, 8
        %v1912 = vpop.permute.xlu0 %1911
        %1913 = vrot.lane.b32.xlu0 %v1875, 8
        %v1914 = vpop.permute.xlu0 %1913
        %1915 = vrot.lane.b32.xlu0 %v1878, 8
        %v1916 = vpop.permute.xlu0 %1915
        %1917 = vrot.lane.b32.xlu0 %v1881, 8
        %v1918 = vpop.permute.xlu0 %1917
        %1919 = vrot.lane.b32.xlu0 %v1884, 8
        %v1920 = vpop.permute.xlu0 %1919
        %v1922 = vsel %vm602, %v1505, %v1795
        %v1924 = vsel %vm602, %v1506, %v1797
        %v1926 = vsel %vm602, %v1507, %v1799
        %v1928 = vsel %vm602, %v1508, %v1801
        %v1930 = vsel %vm602, %v1509, %v1803
        %v1932 = vsel %vm602, %v1510, %v1805
        %v1934 = vsel %vm602, %v1511, %v1807
        %v1936 = vsel %vm602, %v1512, %v1809
        %v1938 = vsel %vm602, %v1513, %v1811
        %v1940 = vsel %vm602, %v1514, %v1813
        %v1942 = vsel %vm602, %v1515, %v1815
        %v1944 = vsel %vm602, %v1516, %v1817
        %v1946 = vsel %vm602, %v1517, %v1819
        %v1948 = vsel %vm602, %v1518, %v1821
        %v1950 = vsel %vm602, %v1519, %v1823
        %v1952 = vsel %vm602, %v1520, %v1825
        %v1954 = vsel %vm602, %v1521, %v1827
        %v1956 = vsel %vm602, %v1522, %v1829
        %v1958 = vsel %vm776, %v1922, %v1886
        %v1960 = vsel %vm776, %v1924, %v1888
        %v1962 = vsel %vm776, %v1926, %v1890
        %v1964 = vsel %vm776, %v1928, %v1892
        %v1966 = vsel %vm776, %v1930, %v1894
        %v1968 = vsel %vm776, %v1932, %v1896
        %v1970 = vsel %vm776, %v1934, %v1898
        %v1972 = vsel %vm776, %v1936, %v1900
        %v1974 = vsel %vm776, %v1938, %v1902
        %v1976 = vsel %vm776, %v1940, %v1904
        %v1978 = vsel %vm776, %v1942, %v1906
        %v1980 = vsel %vm776, %v1944, %v1908
        %v1982 = vsel %vm776, %v1946, %v1910
        %v1984 = vsel %vm776, %v1948, %v1912
        %v1986 = vsel %vm776, %v1950, %v1914
        %v1988 = vsel %vm776, %v1952, %v1916
        %v1990 = vsel %vm776, %v1954, %v1918
        %v1992 = vsel %vm776, %v1956, %v1920
        %v1993 = vld [vmem:[%s3] sm:$0xf]
        %v1994 = vld [vmem:[%s3 + $0x4] sm:$0x3]
        %s1995 = scalar_lea.vmem %s3, 8
        %v1996 = vld [vmem:[%s1995] sm:$0xf]
        %v1997 = vld [vmem:[%s1995 + $0x4] sm:$0x3]
        %v2000 = vunpack.c.l.b16 %v1996
        %v2001 = vunpack.c.l.b16 %v1997
        %v2002 = vpack.c.b16 %v2001, %v2000
        %vm2003 = vcmask 97280
        %v2004 = vsel %vm2003, %v1960, 0
        %v2006 = vsel %vm2003, %v1962, 0
        %v2008 = vsel %vm2003, %v1964, 0
        %v2010 = vsel %vm2003, %v1966, 0
        %v2012 = vsel %vm2003, %v1968, 0
        %v2014 = vsel %vm2003, %v1970, 0
        %v2016 = vsel %vm2003, %v1972, 0
        %v2018 = vsel %vm2003, %v1974, 0
        %v2020 = vsel %vm2003, %v1976, 0
        %v2022 = vsel %vm2003, %v1978, 0
        %v2024 = vsel %vm2003, %v1980, 0
        %v2026 = vsel %vm2003, %v1982, 0
        %v2028 = vsel %vm2003, %v1984, 0
        %v2030 = vsel %vm2003, %v1986, 0
        %v2032 = vsel %vm2003, %v1988, 0
        %v2034 = vsel %vm2003, %v1990, 0
        %vm2036 = vcmask 1045504
        %v2038 = vsel %vm2036, %v2002, 0
        %2040 = vmatpush.bf16.msra.mxu0 0
        %2041 = vmatpush.bf16.msra.mxu0 0
        %2042 = vmatpush.bf16.msra.mxu0 0
        %2043 = vmatpush.bf16.msra.mxu0 0
        %2044 = vmatpush.bf16.msra.mxu0 0
        %2045 = vmatpush.bf16.msra.mxu0 0
        %2046 = vmatpush.bf16.msra.mxu0 0
        %2047 = vmatpush.bf16.msra.mxu0 %v2038
        %2048 = vmatmul.bf16.gmra.mxu0 %v2004
        %v2049 = vpop.f32.mrf.mxu0
        %v2050 = vadd.f32 0.0, %v2049
        %v2051 = vpop.f32.mrf.mxu0
        %v2052 = vadd.f32 0.0, %v2051
        %2053 = vmatmul.bf16.gmra.mxu0 %v2006
        %v2054 = vpop.f32.mrf.mxu0
        %v2055 = vadd.f32 0.0, %v2054
        %v2056 = vpop.f32.mrf.mxu0
        %v2057 = vadd.f32 0.0, %v2056
        %2058 = vmatmul.bf16.gmra.mxu0 %v2008
        %v2059 = vpop.f32.mrf.mxu0
        %v2060 = vadd.f32 0.0, %v2059
        %v2061 = vpop.f32.mrf.mxu0
        %v2062 = vadd.f32 0.0, %v2061
        %2063 = vmatmul.bf16.gmra.mxu0 %v2010
        %v2064 = vpop.f32.mrf.mxu0
        %v2065 = vadd.f32 0.0, %v2064
        %v2066 = vpop.f32.mrf.mxu0
        %v2067 = vadd.f32 0.0, %v2066
        %2068 = vmatmul.bf16.gmra.mxu0 %v2012
        %v2069 = vpop.f32.mrf.mxu0
        %v2070 = vadd.f32 0.0, %v2069
        %v2071 = vpop.f32.mrf.mxu0
        %v2072 = vadd.f32 0.0, %v2071
        %2073 = vmatmul.bf16.gmra.mxu0 %v2014
        %v2074 = vpop.f32.mrf.mxu0
        %v2075 = vadd.f32 0.0, %v2074
        %v2076 = vpop.f32.mrf.mxu0
        %v2077 = vadd.f32 0.0, %v2076
        %2078 = vmatmul.bf16.gmra.mxu0 %v2016
        %v2079 = vpop.f32.mrf.mxu0
        %v2080 = vadd.f32 0.0, %v2079
        %v2081 = vpop.f32.mrf.mxu0
        %v2082 = vadd.f32 0.0, %v2081
        %2083 = vmatmul.bf16.gmra.mxu0 %v2018
        %v2084 = vpop.f32.mrf.mxu0
        %v2085 = vadd.f32 0.0, %v2084
        %v2086 = vpop.f32.mrf.mxu0
        %v2087 = vadd.f32 0.0, %v2086
        %2088 = vmatmul.bf16.gmra.mxu0 %v2020
        %v2089 = vpop.f32.mrf.mxu0
        %v2090 = vadd.f32 0.0, %v2089
        %v2091 = vpop.f32.mrf.mxu0
        %v2092 = vadd.f32 0.0, %v2091
        %2093 = vmatmul.bf16.gmra.mxu0 %v2022
        %v2094 = vpop.f32.mrf.mxu0
        %v2095 = vadd.f32 0.0, %v2094
        %v2096 = vpop.f32.mrf.mxu0
        %v2097 = vadd.f32 0.0, %v2096
        %2098 = vmatmul.bf16.gmra.mxu0 %v2024
        %v2099 = vpop.f32.mrf.mxu0
        %v2100 = vadd.f32 0.0, %v2099
        %v2101 = vpop.f32.mrf.mxu0
        %v2102 = vadd.f32 0.0, %v2101
        %2103 = vmatmul.bf16.gmra.mxu0 %v2026
        %v2104 = vpop.f32.mrf.mxu0
        %v2105 = vadd.f32 0.0, %v2104
        %v2106 = vpop.f32.mrf.mxu0
        %v2107 = vadd.f32 0.0, %v2106
        %2108 = vmatmul.bf16.gmra.mxu0 %v2028
        %v2109 = vpop.f32.mrf.mxu0
        %v2110 = vadd.f32 0.0, %v2109
        %v2111 = vpop.f32.mrf.mxu0
        %v2112 = vadd.f32 0.0, %v2111
        %2113 = vmatmul.bf16.gmra.mxu0 %v2030
        %v2114 = vpop.f32.mrf.mxu0
        %v2115 = vadd.f32 0.0, %v2114
        %v2116 = vpop.f32.mrf.mxu0
        %v2117 = vadd.f32 0.0, %v2116
        %2118 = vmatmul.bf16.gmra.mxu0 %v2032
        %v2119 = vpop.f32.mrf.mxu0
        %v2120 = vadd.f32 0.0, %v2119
        %v2121 = vpop.f32.mrf.mxu0
        %v2122 = vadd.f32 0.0, %v2121
        %2123 = vmatmul.bf16.gmra.mxu0 %v2034
        %v2124 = vpop.f32.mrf.mxu0
        %v2125 = vadd.f32 0.0, %v2124
        %v2126 = vpop.f32.mrf.mxu0
        %v2127 = vadd.f32 0.0, %v2126
        %2128 = vdwg.mxu0
        %v2131 = vunpack.c.l.b16 %v1993
        %v2132 = vunpack.c.l.b16 %v1994
        %v2133 = vpack.c.b16 %v2132, %v2131
        %v2134 = vsel %vm2003, %v1958, 0
        %v2137 = vsel %vm2036, %v2133, 0
        %2139 = vmatpush.bf16.msra.mxu0 0
        %2140 = vmatpush.bf16.msra.mxu0 0
        %2141 = vmatpush.bf16.msra.mxu0 0
        %2142 = vmatpush.bf16.msra.mxu0 0
        %2143 = vmatpush.bf16.msra.mxu0 0
        %2144 = vmatpush.bf16.msra.mxu0 0
        %2145 = vmatpush.bf16.msra.mxu0 0
        %2146 = vmatpush.bf16.msra.mxu0 %v2137
        %2147 = vmatmul.bf16.gmra.mxu0 %v2134
        %v2148 = vpop.f32.mrf.mxu0
        %v2149 = vadd.f32 %v2050, %v2148
        %v2150 = vpop.f32.mrf.mxu0
        %v2151 = vadd.f32 %v2052, %v2150
        %2152 = vmatmul.bf16.gmra.mxu0 %v2004
        %v2153 = vpop.f32.mrf.mxu0
        %v2154 = vadd.f32 %v2055, %v2153
        %v2155 = vpop.f32.mrf.mxu0
        %v2156 = vadd.f32 %v2057, %v2155
        %2157 = vmatmul.bf16.gmra.mxu0 %v2006
        %v2158 = vpop.f32.mrf.mxu0
        %v2159 = vadd.f32 %v2060, %v2158
        %v2160 = vpop.f32.mrf.mxu0
        %v2161 = vadd.f32 %v2062, %v2160
        %2162 = vmatmul.bf16.gmra.mxu0 %v2008
        %v2163 = vpop.f32.mrf.mxu0
        %v2164 = vadd.f32 %v2065, %v2163
        %v2165 = vpop.f32.mrf.mxu0
        %v2166 = vadd.f32 %v2067, %v2165
        %2167 = vmatmul.bf16.gmra.mxu0 %v2010
        %v2168 = vpop.f32.mrf.mxu0
        %v2169 = vadd.f32 %v2070, %v2168
        %v2170 = vpop.f32.mrf.mxu0
        %v2171 = vadd.f32 %v2072, %v2170
        %2172 = vmatmul.bf16.gmra.mxu0 %v2012
        %v2173 = vpop.f32.mrf.mxu0
        %v2174 = vadd.f32 %v2075, %v2173
        %v2175 = vpop.f32.mrf.mxu0
        %v2176 = vadd.f32 %v2077, %v2175
        %2177 = vmatmul.bf16.gmra.mxu0 %v2014
        %v2178 = vpop.f32.mrf.mxu0
        %v2179 = vadd.f32 %v2080, %v2178
        %v2180 = vpop.f32.mrf.mxu0
        %v2181 = vadd.f32 %v2082, %v2180
        %2182 = vmatmul.bf16.gmra.mxu0 %v2016
        %v2183 = vpop.f32.mrf.mxu0
        %v2184 = vadd.f32 %v2085, %v2183
        %v2185 = vpop.f32.mrf.mxu0
        %v2186 = vadd.f32 %v2087, %v2185
        %2187 = vmatmul.bf16.gmra.mxu0 %v2018
        %v2188 = vpop.f32.mrf.mxu0
        %v2189 = vadd.f32 %v2090, %v2188
        %v2190 = vpop.f32.mrf.mxu0
        %v2191 = vadd.f32 %v2092, %v2190
        %2192 = vmatmul.bf16.gmra.mxu0 %v2020
        %v2193 = vpop.f32.mrf.mxu0
        %v2194 = vadd.f32 %v2095, %v2193
        %v2195 = vpop.f32.mrf.mxu0
        %v2196 = vadd.f32 %v2097, %v2195
        %2197 = vmatmul.bf16.gmra.mxu0 %v2022
        %v2198 = vpop.f32.mrf.mxu0
        %v2199 = vadd.f32 %v2100, %v2198
        %v2200 = vpop.f32.mrf.mxu0
        %v2201 = vadd.f32 %v2102, %v2200
        %2202 = vmatmul.bf16.gmra.mxu0 %v2024
        %v2203 = vpop.f32.mrf.mxu0
        %v2204 = vadd.f32 %v2105, %v2203
        %v2205 = vpop.f32.mrf.mxu0
        %v2206 = vadd.f32 %v2107, %v2205
        %2207 = vmatmul.bf16.gmra.mxu0 %v2026
        %v2208 = vpop.f32.mrf.mxu0
        %v2209 = vadd.f32 %v2110, %v2208
        %v2210 = vpop.f32.mrf.mxu0
        %v2211 = vadd.f32 %v2112, %v2210
        %2212 = vmatmul.bf16.gmra.mxu0 %v2028
        %v2213 = vpop.f32.mrf.mxu0
        %v2214 = vadd.f32 %v2115, %v2213
        %v2215 = vpop.f32.mrf.mxu0
        %v2216 = vadd.f32 %v2117, %v2215
        %2217 = vmatmul.bf16.gmra.mxu0 %v2030
        %v2218 = vpop.f32.mrf.mxu0
        %v2219 = vadd.f32 %v2120, %v2218
        %v2220 = vpop.f32.mrf.mxu0
        %v2221 = vadd.f32 %v2122, %v2220
        %2222 = vmatmul.bf16.gmra.mxu0 %v2032
        %v2223 = vpop.f32.mrf.mxu0
        %v2224 = vadd.f32 %v2125, %v2223
        %v2225 = vpop.f32.mrf.mxu0
        %v2226 = vadd.f32 %v2127, %v2225
        %2227 = vdwg.mxu0
        %s2228 = scalar_lea.vmem %s3, 16
        %v2229 = vld [vmem:[%s2228] sm:$0xf]
        %v2230 = vld [vmem:[%s2228 + $0x4] sm:$0x3]
        %v2233 = vunpack.c.l.b16 %v2229
        %v2234 = vunpack.c.l.b16 %v2230
        %v2235 = vpack.c.b16 %v2234, %v2233
        %v2236 = vsel %vm2003, %v1992, 0
        %v2239 = vsel %vm2036, %v2235, 0
        %2241 = vmatpush.bf16.msra.mxu0 0
        %2242 = vmatpush.bf16.msra.mxu0 0
        %2243 = vmatpush.bf16.msra.mxu0 0
        %2244 = vmatpush.bf16.msra.mxu0 0
        %2245 = vmatpush.bf16.msra.mxu0 0
        %2246 = vmatpush.bf16.msra.mxu0 0
        %2247 = vmatpush.bf16.msra.mxu0 0
        %2248 = vmatpush.bf16.msra.mxu0 %v2239
        %2249 = vmatmul.bf16.gmra.mxu0 %v2006
        %v2250 = vpop.f32.mrf.mxu0
        %v2251 = vadd.f32 0.0, %v2250
        %v2252 = vpop.f32.mrf.mxu0
        %v2253 = vadd.f32 0.0, %v2252
        %2254 = vmatmul.bf16.gmra.mxu0 %v2008
        %v2255 = vpop.f32.mrf.mxu0
        %v2256 = vadd.f32 0.0, %v2255
        %v2257 = vpop.f32.mrf.mxu0
        %v2258 = vadd.f32 0.0, %v2257
        %2259 = vmatmul.bf16.gmra.mxu0 %v2010
        %v2260 = vpop.f32.mrf.mxu0
        %v2261 = vadd.f32 0.0, %v2260
        %v2262 = vpop.f32.mrf.mxu0
        %v2263 = vadd.f32 0.0, %v2262
        %2264 = vmatmul.bf16.gmra.mxu0 %v2012
        %v2265 = vpop.f32.mrf.mxu0
        %v2266 = vadd.f32 0.0, %v2265
        %v2267 = vpop.f32.mrf.mxu0
        %v2268 = vadd.f32 0.0, %v2267
        %2269 = vmatmul.bf16.gmra.mxu0 %v2014
        %v2270 = vpop.f32.mrf.mxu0
        %v2271 = vadd.f32 0.0, %v2270
        %v2272 = vpop.f32.mrf.mxu0
        %v2273 = vadd.f32 0.0, %v2272
        %2274 = vmatmul.bf16.gmra.mxu0 %v2016
        %v2275 = vpop.f32.mrf.mxu0
        %v2276 = vadd.f32 0.0, %v2275
        %v2277 = vpop.f32.mrf.mxu0
        %v2278 = vadd.f32 0.0, %v2277
        %2279 = vmatmul.bf16.gmra.mxu0 %v2018
        %v2280 = vpop.f32.mrf.mxu0
        %v2281 = vadd.f32 0.0, %v2280
        %v2282 = vpop.f32.mrf.mxu0
        %v2283 = vadd.f32 0.0, %v2282
        %2284 = vmatmul.bf16.gmra.mxu0 %v2020
        %v2285 = vpop.f32.mrf.mxu0
        %v2286 = vadd.f32 0.0, %v2285
        %v2287 = vpop.f32.mrf.mxu0
        %v2288 = vadd.f32 0.0, %v2287
        %2289 = vmatmul.bf16.gmra.mxu0 %v2022
        %v2290 = vpop.f32.mrf.mxu0
        %v2291 = vadd.f32 0.0, %v2290
        %v2292 = vpop.f32.mrf.mxu0
        %v2293 = vadd.f32 0.0, %v2292
        %2294 = vmatmul.bf16.gmra.mxu0 %v2024
        %v2295 = vpop.f32.mrf.mxu0
        %v2296 = vadd.f32 0.0, %v2295
        %v2297 = vpop.f32.mrf.mxu0
        %v2298 = vadd.f32 0.0, %v2297
        %2299 = vmatmul.bf16.gmra.mxu0 %v2026
        %v2300 = vpop.f32.mrf.mxu0
        %v2301 = vadd.f32 0.0, %v2300
        %v2302 = vpop.f32.mrf.mxu0
        %v2303 = vadd.f32 0.0, %v2302
        %2304 = vmatmul.bf16.gmra.mxu0 %v2028
        %v2305 = vpop.f32.mrf.mxu0
        %v2306 = vadd.f32 0.0, %v2305
        %v2307 = vpop.f32.mrf.mxu0
        %v2308 = vadd.f32 0.0, %v2307
        %2309 = vmatmul.bf16.gmra.mxu0 %v2030
        %v2310 = vpop.f32.mrf.mxu0
        %v2311 = vadd.f32 0.0, %v2310
        %v2312 = vpop.f32.mrf.mxu0
        %v2313 = vadd.f32 0.0, %v2312
        %2314 = vmatmul.bf16.gmra.mxu0 %v2032
        %v2315 = vpop.f32.mrf.mxu0
        %v2316 = vadd.f32 0.0, %v2315
        %v2317 = vpop.f32.mrf.mxu0
        %v2318 = vadd.f32 0.0, %v2317
        %2319 = vmatmul.bf16.gmra.mxu0 %v2034
        %v2320 = vpop.f32.mrf.mxu0
        %v2321 = vadd.f32 0.0, %v2320
        %v2322 = vpop.f32.mrf.mxu0
        %v2323 = vadd.f32 0.0, %v2322
        %2324 = vmatmul.bf16.gmra.mxu0 %v2236
        %v2325 = vpop.f32.mrf.mxu0
        %v2326 = vadd.f32 0.0, %v2325
        %v2327 = vpop.f32.mrf.mxu0
        %v2328 = vadd.f32 0.0, %v2327
        %2329 = vdwg.mxu0
        %v2330 = vadd.f32 %v2149, %v2251
        %v2331 = vadd.f32 %v2151, %v2253
        %v2332 = vadd.f32 %v2154, %v2256
        %v2333 = vadd.f32 %v2156, %v2258
        %v2334 = vadd.f32 %v2159, %v2261
        %v2335 = vadd.f32 %v2161, %v2263
        %v2336 = vadd.f32 %v2164, %v2266
        %v2337 = vadd.f32 %v2166, %v2268
        %v2338 = vadd.f32 %v2169, %v2271
        %v2339 = vadd.f32 %v2171, %v2273
        %v2340 = vadd.f32 %v2174, %v2276
        %v2341 = vadd.f32 %v2176, %v2278
        %v2342 = vadd.f32 %v2179, %v2281
        %v2343 = vadd.f32 %v2181, %v2283
        %v2344 = vadd.f32 %v2184, %v2286
        %v2345 = vadd.f32 %v2186, %v2288
        %v2346 = vadd.f32 %v2189, %v2291
        %v2347 = vadd.f32 %v2191, %v2293
        %v2348 = vadd.f32 %v2194, %v2296
        %v2349 = vadd.f32 %v2196, %v2298
        %v2350 = vadd.f32 %v2199, %v2301
        %v2351 = vadd.f32 %v2201, %v2303
        %v2352 = vadd.f32 %v2204, %v2306
        %v2353 = vadd.f32 %v2206, %v2308
        %v2354 = vadd.f32 %v2209, %v2311
        %v2355 = vadd.f32 %v2211, %v2313
        %v2356 = vadd.f32 %v2214, %v2316
        %v2357 = vadd.f32 %v2216, %v2318
        %v2358 = vadd.f32 %v2219, %v2321
        %v2359 = vadd.f32 %v2221, %v2323
        %v2360 = vadd.f32 %v2224, %v2326
        %v2361 = vadd.f32 %v2226, %v2328
        %v2362 = vld [vmem:[%s4] sm:$0x1]
        %v2364 = vperm.slane %v2362, 0
        %v2366 = vadd.f32 %v2330, %v2364
        %v2367 = vadd.f32 %v2331, %v2364
        %v2368 = vadd.f32 %v2332, %v2364
        %v2369 = vadd.f32 %v2333, %v2364
        %v2370 = vadd.f32 %v2334, %v2364
        %v2371 = vadd.f32 %v2335, %v2364
        %v2372 = vadd.f32 %v2336, %v2364
        %v2373 = vadd.f32 %v2337, %v2364
        %v2374 = vadd.f32 %v2338, %v2364
        %v2375 = vadd.f32 %v2339, %v2364
        %v2376 = vadd.f32 %v2340, %v2364
        %v2377 = vadd.f32 %v2341, %v2364
        %v2378 = vadd.f32 %v2342, %v2364
        %v2379 = vadd.f32 %v2343, %v2364
        %v2380 = vadd.f32 %v2344, %v2364
        %v2381 = vadd.f32 %v2345, %v2364
        %v2382 = vadd.f32 %v2346, %v2364
        %v2383 = vadd.f32 %v2347, %v2364
        %v2384 = vadd.f32 %v2348, %v2364
        %v2385 = vadd.f32 %v2349, %v2364
        %v2386 = vadd.f32 %v2350, %v2364
        %v2387 = vadd.f32 %v2351, %v2364
        %v2388 = vadd.f32 %v2352, %v2364
        %v2389 = vadd.f32 %v2353, %v2364
        %v2390 = vadd.f32 %v2354, %v2364
        %v2391 = vadd.f32 %v2355, %v2364
        %v2392 = vadd.f32 %v2356, %v2364
        %v2393 = vadd.f32 %v2357, %v2364
        %v2394 = vadd.f32 %v2358, %v2364
        %v2395 = vadd.f32 %v2359, %v2364
        %v2396 = vadd.f32 %v2360, %v2364
        %v2397 = vadd.f32 %v2361, %v2364
        %v2398 = vmax.f32 %v2366, 0.0
        %v2399 = vmax.f32 %v2367, 0.0
        %v2400 = vmax.f32 %v2368, 0.0
        %v2401 = vmax.f32 %v2369, 0.0
        %v2402 = vmax.f32 %v2370, 0.0
        %v2403 = vmax.f32 %v2371, 0.0
        %v2404 = vmax.f32 %v2372, 0.0
        %v2405 = vmax.f32 %v2373, 0.0
        %v2406 = vmax.f32 %v2374, 0.0
        %v2407 = vmax.f32 %v2375, 0.0
        %v2408 = vmax.f32 %v2376, 0.0
        %v2409 = vmax.f32 %v2377, 0.0
        %v2410 = vmax.f32 %v2378, 0.0
        %v2411 = vmax.f32 %v2379, 0.0
        %v2412 = vmax.f32 %v2380, 0.0
        %v2413 = vmax.f32 %v2381, 0.0
        %v2414 = vmax.f32 %v2382, 0.0
        %v2415 = vmax.f32 %v2383, 0.0
        %v2416 = vmax.f32 %v2384, 0.0
        %v2417 = vmax.f32 %v2385, 0.0
        %v2418 = vmax.f32 %v2386, 0.0
        %v2419 = vmax.f32 %v2387, 0.0
        %v2420 = vmax.f32 %v2388, 0.0
        %v2421 = vmax.f32 %v2389, 0.0
        %v2422 = vmax.f32 %v2390, 0.0
        %v2423 = vmax.f32 %v2391, 0.0
        %v2424 = vmax.f32 %v2392, 0.0
        %v2425 = vmax.f32 %v2393, 0.0
        %v2426 = vmax.f32 %v2394, 0.0
        %v2427 = vmax.f32 %v2395, 0.0
        %v2428 = vmax.f32 %v2396, 0.0
        %v2429 = vmax.f32 %v2397, 0.0
        %2462 = vrot.lane.b32.xlu0 %v2398, 8
        %v2463 = vpop.permute.xlu0 %2462
        %2464 = vrot.lane.b32.xlu0 %v2399, 8
        %v2465 = vpop.permute.xlu0 %2464
        %2466 = vrot.lane.b32.xlu0 %v2400, 8
        %v2467 = vpop.permute.xlu0 %2466
        %2468 = vrot.lane.b32.xlu0 %v2401, 8
        %v2469 = vpop.permute.xlu0 %2468
        %2470 = vrot.lane.b32.xlu0 %v2402, 8
        %v2471 = vpop.permute.xlu0 %2470
        %2472 = vrot.lane.b32.xlu0 %v2403, 8
        %v2473 = vpop.permute.xlu0 %2472
        %2474 = vrot.lane.b32.xlu0 %v2404, 8
        %v2475 = vpop.permute.xlu0 %2474
        %2476 = vrot.lane.b32.xlu0 %v2405, 8
        %v2477 = vpop.permute.xlu0 %2476
        %2478 = vrot.lane.b32.xlu0 %v2406, 8
        %v2479 = vpop.permute.xlu0 %2478
        %2480 = vrot.lane.b32.xlu0 %v2407, 8
        %v2481 = vpop.permute.xlu0 %2480
        %2482 = vrot.lane.b32.xlu0 %v2408, 8
        %v2483 = vpop.permute.xlu0 %2482
        %2484 = vrot.lane.b32.xlu0 %v2409, 8
        %v2485 = vpop.permute.xlu0 %2484
        %2486 = vrot.lane.b32.xlu0 %v2410, 8
        %v2487 = vpop.permute.xlu0 %2486
        %2488 = vrot.lane.b32.xlu0 %v2411, 8
        %v2489 = vpop.permute.xlu0 %2488
        %2490 = vrot.lane.b32.xlu0 %v2412, 8
        %v2491 = vpop.permute.xlu0 %2490
        %2492 = vrot.lane.b32.xlu0 %v2413, 8
        %v2493 = vpop.permute.xlu0 %2492
        %2494 = vrot.lane.b32.xlu0 %v2414, 8
        %v2495 = vpop.permute.xlu0 %2494
        %2496 = vrot.lane.b32.xlu0 %v2415, 8
        %v2497 = vpop.permute.xlu0 %2496
        %2498 = vrot.lane.b32.xlu0 %v2416, 8
        %v2499 = vpop.permute.xlu0 %2498
        %2500 = vrot.lane.b32.xlu0 %v2417, 8
        %v2501 = vpop.permute.xlu0 %2500
        %2502 = vrot.lane.b32.xlu0 %v2418, 8
        %v2503 = vpop.permute.xlu0 %2502
        %2504 = vrot.lane.b32.xlu0 %v2419, 8
        %v2505 = vpop.permute.xlu0 %2504
        %2506 = vrot.lane.b32.xlu0 %v2420, 8
        %v2507 = vpop.permute.xlu0 %2506
        %2508 = vrot.lane.b32.xlu0 %v2421, 8
        %v2509 = vpop.permute.xlu0 %2508
        %2510 = vrot.lane.b32.xlu0 %v2422, 8
        %v2511 = vpop.permute.xlu0 %2510
        %2512 = vrot.lane.b32.xlu0 %v2423, 8
        %v2513 = vpop.permute.xlu0 %2512
        %2514 = vrot.lane.b32.xlu0 %v2424, 8
        %v2515 = vpop.permute.xlu0 %2514
        %2516 = vrot.lane.b32.xlu0 %v2425, 8
        %v2517 = vpop.permute.xlu0 %2516
        %2518 = vrot.lane.b32.xlu0 %v2426, 8
        %v2519 = vpop.permute.xlu0 %2518
        %2520 = vrot.lane.b32.xlu0 %v2427, 8
        %v2521 = vpop.permute.xlu0 %2520
        %2522 = vrot.lane.b32.xlu0 %v2428, 8
        %v2523 = vpop.permute.xlu0 %2522
        %2524 = vrot.lane.b32.xlu0 %v2429, 8
        %v2525 = vpop.permute.xlu0 %2524
        %vm2558 = vcmask 130112
        %2559 = vst.msk [vmem:[%s325] sm:$0xff] %vm2558, %v2463
        %2560 = vst.msk [vmem:[%s325 + $0x8] sm:$0xff] %vm2558, %v2465
        %2561 = vst.msk [vmem:[%s325 + $0x10] sm:$0xff] %vm2558, %v2467
        %2562 = vst.msk [vmem:[%s325 + $0x18] sm:$0xff] %vm2558, %v2469
        %2563 = vst.msk [vmem:[%s325 + $0x20] sm:$0xff] %vm2558, %v2471
        %2564 = vst.msk [vmem:[%s325 + $0x28] sm:$0xff] %vm2558, %v2473
        %2565 = vst.msk [vmem:[%s325 + $0x30] sm:$0xff] %vm2558, %v2475
        %2566 = vst.msk [vmem:[%s325 + $0x38] sm:$0xff] %vm2558, %v2477
        %2567 = vst.msk [vmem:[%s325 + $0x40] sm:$0xff] %vm2558, %v2479
        %2568 = vst.msk [vmem:[%s325 + $0x48] sm:$0xff] %vm2558, %v2481
        %2569 = vst.msk [vmem:[%s325 + $0x50] sm:$0xff] %vm2558, %v2483
        %2570 = vst.msk [vmem:[%s325 + $0x58] sm:$0xff] %vm2558, %v2485
        %2571 = vst.msk [vmem:[%s325 + $0x60] sm:$0xff] %vm2558, %v2487
        %2572 = vst.msk [vmem:[%s325 + $0x68] sm:$0xff] %vm2558, %v2489
        %2573 = vst.msk [vmem:[%s325 + $0x70] sm:$0xff] %vm2558, %v2491
        %2574 = vst.msk [vmem:[%s325 + $0x78] sm:$0xff] %vm2558, %v2493
        %2575 = vst.msk [vmem:[%s325 + $0x80] sm:$0xff] %vm2558, %v2495
        %2576 = vst.msk [vmem:[%s325 + $0x88] sm:$0xff] %vm2558, %v2497
        %2577 = vst.msk [vmem:[%s325 + $0x90] sm:$0xff] %vm2558, %v2499
        %2578 = vst.msk [vmem:[%s325 + $0x98] sm:$0xff] %vm2558, %v2501
        %2579 = vst.msk [vmem:[%s325 + $0xa0] sm:$0xff] %vm2558, %v2503
        %2580 = vst.msk [vmem:[%s325 + $0xa8] sm:$0xff] %vm2558, %v2505
        %2581 = vst.msk [vmem:[%s325 + $0xb0] sm:$0xff] %vm2558, %v2507
        %2582 = vst.msk [vmem:[%s325 + $0xb8] sm:$0xff] %vm2558, %v2509
        %2583 = vst.msk [vmem:[%s325 + $0xc0] sm:$0xff] %vm2558, %v2511
        %2584 = vst.msk [vmem:[%s325 + $0xc8] sm:$0xff] %vm2558, %v2513
        %2585 = vst.msk [vmem:[%s325 + $0xd0] sm:$0xff] %vm2558, %v2515
        %2586 = vst.msk [vmem:[%s325 + $0xd8] sm:$0xff] %vm2558, %v2517
        %2587 = vst.msk [vmem:[%s325 + $0xe0] sm:$0xff] %vm2558, %v2519
        %2588 = vst.msk [vmem:[%s325 + $0xe8] sm:$0xff] %vm2558, %v2521
        %2589 = vst.msk [vmem:[%s325 + $0xf0] sm:$0xff] %vm2558, %v2523
        %2590 = vst.msk [vmem:[%s325 + $0xf8] sm:$0xff] %vm2558, %v2525
        %vm2623 = vcmask 1040384
        %vm2624 = vcmask 1044484
        %vm2625 = vmor %vm2623, %vm2624
        %v2626 = vrot.slane %v809, 7
        %v2627 = vrot.slane %v2626, 4
        %v2628 = vrot.slane %v810, 7
        %v2629 = vsel %vm2625, %v2627, %v2628
        %v2630 = vrot.slane %v2628, 4
        %v2631 = vrot.slane %v811, 7
        %v2632 = vrot.slane %v2631, 4
        %v2633 = vrot.slane %v812, 7
        %v2634 = vsel %vm2625, %v2632, %v2633
        %v2635 = vrot.slane %v2633, 4
        %v2636 = vrot.slane %v813, 7
        %v2637 = vrot.slane %v2636, 4
        %v2638 = vrot.slane %v814, 7
        %v2639 = vsel %vm2625, %v2637, %v2638
        %v2640 = vrot.slane %v2638, 4
        %v2641 = vrot.slane %v815, 7
        %v2642 = vrot.slane %v2641, 4
        %v2643 = vrot.slane %v816, 7
        %v2644 = vsel %vm2625, %v2642, %v2643
        %v2645 = vrot.slane %v2643, 4
        %v2646 = vrot.slane %v817, 7
        %v2647 = vrot.slane %v2646, 4
        %v2648 = vrot.slane %v818, 7
        %v2649 = vsel %vm2625, %v2647, %v2648
        %v2650 = vrot.slane %v2648, 4
        %v2651 = vrot.slane %v819, 7
        %v2652 = vrot.slane %v2651, 4
        %v2653 = vrot.slane %v820, 7
        %v2654 = vsel %vm2625, %v2652, %v2653
        %v2655 = vrot.slane %v2653, 4
        %v2656 = vrot.slane %v821, 7
        %v2657 = vrot.slane %v2656, 4
        %v2658 = vrot.slane %v822, 7
        %v2659 = vsel %vm2625, %v2657, %v2658
        %v2660 = vrot.slane %v2658, 4
        %v2661 = vrot.slane %v823, 7
        %v2662 = vrot.slane %v2661, 4
        %v2663 = vrot.slane %v824, 7
        %v2664 = vsel %vm2625, %v2662, %v2663
        %v2665 = vrot.slane %v2663, 4
        %v2666 = vrot.slane %v825, 7
        %v2667 = vrot.slane %v2666, 4
        %v2668 = vrot.slane %v826, 7
        %v2669 = vsel %vm2625, %v2667, %v2668
        %v2670 = vrot.slane %v2668, 4
        %v2671 = vrot.slane %v827, 7
        %v2672 = vrot.slane %v2671, 4
        %v2673 = vrot.slane %v828, 7
        %v2674 = vsel %vm2625, %v2672, %v2673
        %v2675 = vrot.slane %v2673, 4
        %v2676 = vrot.slane %v829, 7
        %v2677 = vrot.slane %v2676, 4
        %v2678 = vrot.slane %v830, 7
        %v2679 = vsel %vm2625, %v2677, %v2678
        %v2680 = vrot.slane %v2678, 4
        %v2681 = vrot.slane %v831, 7
        %v2682 = vrot.slane %v2681, 4
        %v2683 = vrot.slane %v832, 7
        %v2684 = vsel %vm2625, %v2682, %v2683
        %v2685 = vrot.slane %v2683, 4
        %v2686 = vrot.slane %v833, 7
        %v2687 = vrot.slane %v2686, 4
        %v2688 = vrot.slane %v834, 7
        %v2689 = vsel %vm2625, %v2687, %v2688
        %v2690 = vrot.slane %v2688, 4
        %v2691 = vrot.slane %v835, 7
        %v2692 = vrot.slane %v2691, 4
        %v2693 = vrot.slane %v836, 7
        %v2694 = vsel %vm2625, %v2692, %v2693
        %v2695 = vrot.slane %v2693, 4
        %v2696 = vrot.slane %v837, 7
        %v2697 = vrot.slane %v2696, 4
        %v2698 = vrot.slane %v838, 7
        %v2699 = vsel %vm2625, %v2697, %v2698
        %v2700 = vrot.slane %v2698, 4
        %v2701 = vrot.slane %v839, 7
        %v2702 = vrot.slane %v2701, 4
        %v2703 = vrot.slane %v840, 7
        %v2704 = vsel %vm2625, %v2702, %v2703
        %v2705 = vrot.slane %v2703, 4
        %2706 = vrot.lane.b32.xlu0 %v2626, 116
        %v2707 = vpop.permute.xlu0 %2706
        %2708 = vrot.lane.b32.xlu0 %v2629, 116
        %v2709 = vpop.permute.xlu0 %2708
        %2710 = vrot.lane.b32.xlu0 %v2630, 116
        %v2711 = vpop.permute.xlu0 %2710
        %2712 = vrot.lane.b32.xlu0 %v2631, 116
        %v2713 = vpop.permute.xlu0 %2712
        %2714 = vrot.lane.b32.xlu0 %v2634, 116
        %v2715 = vpop.permute.xlu0 %2714
        %2716 = vrot.lane.b32.xlu0 %v2635, 116
        %v2717 = vpop.permute.xlu0 %2716
        %2718 = vrot.lane.b32.xlu0 %v2636, 116
        %v2719 = vpop.permute.xlu0 %2718
        %2720 = vrot.lane.b32.xlu0 %v2639, 116
        %v2721 = vpop.permute.xlu0 %2720
        %2722 = vrot.lane.b32.xlu0 %v2640, 116
        %v2723 = vpop.permute.xlu0 %2722
        %2724 = vrot.lane.b32.xlu0 %v2641, 116
        %v2725 = vpop.permute.xlu0 %2724
        %2726 = vrot.lane.b32.xlu0 %v2644, 116
        %v2727 = vpop.permute.xlu0 %2726
        %2728 = vrot.lane.b32.xlu0 %v2645, 116
        %v2729 = vpop.permute.xlu0 %2728
        %2730 = vrot.lane.b32.xlu0 %v2646, 116
        %v2731 = vpop.permute.xlu0 %2730
        %2732 = vrot.lane.b32.xlu0 %v2649, 116
        %v2733 = vpop.permute.xlu0 %2732
        %2734 = vrot.lane.b32.xlu0 %v2650, 116
        %v2735 = vpop.permute.xlu0 %2734
        %2736 = vrot.lane.b32.xlu0 %v2651, 116
        %v2737 = vpop.permute.xlu0 %2736
        %2738 = vrot.lane.b32.xlu0 %v2654, 116
        %v2739 = vpop.permute.xlu0 %2738
        %2740 = vrot.lane.b32.xlu0 %v2655, 116
        %v2741 = vpop.permute.xlu0 %2740
        %2742 = vrot.lane.b32.xlu0 %v2656, 116
        %v2743 = vpop.permute.xlu0 %2742
        %2744 = vrot.lane.b32.xlu0 %v2659, 116
        %v2745 = vpop.permute.xlu0 %2744
        %2746 = vrot.lane.b32.xlu0 %v2660, 116
        %v2747 = vpop.permute.xlu0 %2746
        %2748 = vrot.lane.b32.xlu0 %v2661, 116
        %v2749 = vpop.permute.xlu0 %2748
        %2750 = vrot.lane.b32.xlu0 %v2664, 116
        %v2751 = vpop.permute.xlu0 %2750
        %2752 = vrot.lane.b32.xlu0 %v2665, 116
        %v2753 = vpop.permute.xlu0 %2752
        %2754 = vrot.lane.b32.xlu0 %v2666, 116
        %v2755 = vpop.permute.xlu0 %2754
        %2756 = vrot.lane.b32.xlu0 %v2669, 116
        %v2757 = vpop.permute.xlu0 %2756
        %2758 = vrot.lane.b32.xlu0 %v2670, 116
        %v2759 = vpop.permute.xlu0 %2758
        %2760 = vrot.lane.b32.xlu0 %v2671, 116
        %v2761 = vpop.permute.xlu0 %2760
        %2762 = vrot.lane.b32.xlu0 %v2674, 116
        %v2763 = vpop.permute.xlu0 %2762
        %2764 = vrot.lane.b32.xlu0 %v2675, 116
        %v2765 = vpop.permute.xlu0 %2764
        %2766 = vrot.lane.b32.xlu0 %v2676, 116
        %v2767 = vpop.permute.xlu0 %2766
        %2768 = vrot.lane.b32.xlu0 %v2679, 116
        %v2769 = vpop.permute.xlu0 %2768
        %2770 = vrot.lane.b32.xlu0 %v2680, 116
        %v2771 = vpop.permute.xlu0 %2770
        %2772 = vrot.lane.b32.xlu0 %v2681, 116
        %v2773 = vpop.permute.xlu0 %2772
        %2774 = vrot.lane.b32.xlu0 %v2684, 116
        %v2775 = vpop.permute.xlu0 %2774
        %2776 = vrot.lane.b32.xlu0 %v2685, 116
        %v2777 = vpop.permute.xlu0 %2776
        %2778 = vrot.lane.b32.xlu0 %v2686, 116
        %v2779 = vpop.permute.xlu0 %2778
        %2780 = vrot.lane.b32.xlu0 %v2689, 116
        %v2781 = vpop.permute.xlu0 %2780
        %2782 = vrot.lane.b32.xlu0 %v2690, 116
        %v2783 = vpop.permute.xlu0 %2782
        %2784 = vrot.lane.b32.xlu0 %v2691, 116
        %v2785 = vpop.permute.xlu0 %2784
        %2786 = vrot.lane.b32.xlu0 %v2694, 116
        %v2787 = vpop.permute.xlu0 %2786
        %2788 = vrot.lane.b32.xlu0 %v2695, 116
        %v2789 = vpop.permute.xlu0 %2788
        %2790 = vrot.lane.b32.xlu0 %v2696, 116
        %v2791 = vpop.permute.xlu0 %2790
        %2792 = vrot.lane.b32.xlu0 %v2699, 116
        %v2793 = vpop.permute.xlu0 %2792
        %2794 = vrot.lane.b32.xlu0 %v2700, 116
        %v2795 = vpop.permute.xlu0 %2794
        %2796 = vrot.lane.b32.xlu0 %v2701, 116
        %v2797 = vpop.permute.xlu0 %2796
        %2798 = vrot.lane.b32.xlu0 %v2704, 116
        %v2799 = vpop.permute.xlu0 %2798
        %2800 = vrot.lane.b32.xlu0 %v2705, 116
        %v2801 = vpop.permute.xlu0 %2800
        %s2850 = scalar_lea.vmem [#allocation3], 24
        %vm2851 = vcmask 27649
        %2852 = vst.msk [vmem:[%s2850] sm:$0xe] %vm2851, %v2707
        %2853 = vst.msk [vmem:[%s2850 + $0x4] sm:$0xf] %vm1267, %v2709
        %vm2854 = vcmask 24576
        %2855 = vst.msk [vmem:[%s2850 + $0x8] sm:$0x1] %vm2854, %v2711
        %2856 = vst.msk [vmem:[%s2850 + $0xc] sm:$0xe] %vm2851, %v2713
        %2857 = vst.msk [vmem:[%s2850 + $0x10] sm:$0xf] %vm1267, %v2715
        %2858 = vst.msk [vmem:[%s2850 + $0x14] sm:$0x1] %vm2854, %v2717
        %2859 = vst.msk [vmem:[%s2850 + $0x18] sm:$0xe] %vm2851, %v2719
        %2860 = vst.msk [vmem:[%s2850 + $0x1c] sm:$0xf] %vm1267, %v2721
        %2861 = vst.msk [vmem:[%s2850 + $0x20] sm:$0x1] %vm2854, %v2723
        %2862 = vst.msk [vmem:[%s2850 + $0x24] sm:$0xe] %vm2851, %v2725
        %2863 = vst.msk [vmem:[%s2850 + $0x28] sm:$0xf] %vm1267, %v2727
        %2864 = vst.msk [vmem:[%s2850 + $0x2c] sm:$0x1] %vm2854, %v2729
        %2865 = vst.msk [vmem:[%s2850 + $0x30] sm:$0xe] %vm2851, %v2731
        %2866 = vst.msk [vmem:[%s2850 + $0x34] sm:$0xf] %vm1267, %v2733
        %2867 = vst.msk [vmem:[%s2850 + $0x38] sm:$0x1] %vm2854, %v2735
        %2868 = vst.msk [vmem:[%s2850 + $0x3c] sm:$0xe] %vm2851, %v2737
        %2869 = vst.msk [vmem:[%s2850 + $0x40] sm:$0xf] %vm1267, %v2739
        %2870 = vst.msk [vmem:[%s2850 + $0x44] sm:$0x1] %vm2854, %v2741
        %2871 = vst.msk [vmem:[%s2850 + $0x48] sm:$0xe] %vm2851, %v2743
        %2872 = vst.msk [vmem:[%s2850 + $0x4c] sm:$0xf] %vm1267, %v2745
        %2873 = vst.msk [vmem:[%s2850 + $0x50] sm:$0x1] %vm2854, %v2747
        %2874 = vst.msk [vmem:[%s2850 + $0x54] sm:$0xe] %vm2851, %v2749
        %2875 = vst.msk [vmem:[%s2850 + $0x58] sm:$0xf] %vm1267, %v2751
        %2876 = vst.msk [vmem:[%s2850 + $0x5c] sm:$0x1] %vm2854, %v2753
        %2877 = vst.msk [vmem:[%s2850 + $0x60] sm:$0xe] %vm2851, %v2755
        %2878 = vst.msk [vmem:[%s2850 + $0x64] sm:$0xf] %vm1267, %v2757
        %2879 = vst.msk [vmem:[%s2850 + $0x68] sm:$0x1] %vm2854, %v2759
        %2880 = vst.msk [vmem:[%s2850 + $0x6c] sm:$0xe] %vm2851, %v2761
        %2881 = vst.msk [vmem:[%s2850 + $0x70] sm:$0xf] %vm1267, %v2763
        %2882 = vst.msk [vmem:[%s2850 + $0x74] sm:$0x1] %vm2854, %v2765
        %2883 = vst.msk [vmem:[%s2850 + $0x78] sm:$0xe] %vm2851, %v2767
        %2884 = vst.msk [vmem:[%s2850 + $0x7c] sm:$0xf] %vm1267, %v2769
        %2885 = vst.msk [vmem:[%s2850 + $0x80] sm:$0x1] %vm2854, %v2771
        %2886 = vst.msk [vmem:[%s2850 + $0x84] sm:$0xe] %vm2851, %v2773
        %2887 = vst.msk [vmem:[%s2850 + $0x88] sm:$0xf] %vm1267, %v2775
        %2888 = vst.msk [vmem:[%s2850 + $0x8c] sm:$0x1] %vm2854, %v2777
        %2889 = vst.msk [vmem:[%s2850 + $0x90] sm:$0xe] %vm2851, %v2779
        %2890 = vst.msk [vmem:[%s2850 + $0x94] sm:$0xf] %vm1267, %v2781
        %2891 = vst.msk [vmem:[%s2850 + $0x98] sm:$0x1] %vm2854, %v2783
        %2892 = vst.msk [vmem:[%s2850 + $0x9c] sm:$0xe] %vm2851, %v2785
        %2893 = vst.msk [vmem:[%s2850 + $0xa0] sm:$0xf] %vm1267, %v2787
        %2894 = vst.msk [vmem:[%s2850 + $0xa4] sm:$0x1] %vm2854, %v2789
        %2895 = vst.msk [vmem:[%s2850 + $0xa8] sm:$0xe] %vm2851, %v2791
        %2896 = vst.msk [vmem:[%s2850 + $0xac] sm:$0xf] %vm1267, %v2793
        %2897 = vst.msk [vmem:[%s2850 + $0xb0] sm:$0x1] %vm2854, %v2795
        %2898 = vst.msk [vmem:[%s2850 + $0xb4] sm:$0xe] %vm2851, %v2797
        %2899 = vst.msk [vmem:[%s2850 + $0xb8] sm:$0xf] %vm1267, %v2799
        %2900 = vst.msk [vmem:[%s2850 + $0xbc] sm:$0x1] %vm2854, %v2801
        %v2901 = vld [vmem:[#allocation3] sm:$0xf]
        %v2902 = vld [vmem:[#allocation3 + $0x4] sm:$0xf]
        %v2903 = vld [vmem:[#allocation3 + $0x8] sm:$0x3]
        %v2904 = vld [vmem:[#allocation3 + $0xc] sm:$0xf]
        %v2905 = vld [vmem:[#allocation3 + $0x10] sm:$0xf]
        %v2906 = vld [vmem:[#allocation3 + $0x14] sm:$0x3]
        %v2907 = vld [vmem:[#allocation3 + $0x18] sm:$0xf]
        %v2908 = vld [vmem:[#allocation3 + $0x1c] sm:$0xf]
        %v2909 = vld [vmem:[#allocation3 + $0x20] sm:$0x3]
        %v2910 = vld [vmem:[#allocation3 + $0x24] sm:$0xf]
        %v2911 = vld [vmem:[#allocation3 + $0x28] sm:$0xf]
        %v2912 = vld [vmem:[#allocation3 + $0x2c] sm:$0x3]
        %v2913 = vld [vmem:[#allocation3 + $0x30] sm:$0xf]
        %v2914 = vld [vmem:[#allocation3 + $0x34] sm:$0xf]
        %v2915 = vld [vmem:[#allocation3 + $0x38] sm:$0x3]
        %v2916 = vld [vmem:[#allocation3 + $0x3c] sm:$0xf]
        %v2917 = vld [vmem:[#allocation3 + $0x40] sm:$0xf]
        %v2918 = vld [vmem:[#allocation3 + $0x44] sm:$0x3]
        %v2919 = vld [vmem:[#allocation3 + $0x48] sm:$0xf]
        %v2920 = vld [vmem:[#allocation3 + $0x4c] sm:$0xf]
        %v2921 = vld [vmem:[#allocation3 + $0x50] sm:$0x3]
        %v2922 = vld [vmem:[#allocation3 + $0x54] sm:$0xf]
        %v2923 = vld [vmem:[#allocation3 + $0x58] sm:$0xf]
        %v2924 = vld [vmem:[#allocation3 + $0x5c] sm:$0x3]
        %v2925 = vld [vmem:[#allocation3 + $0x60] sm:$0xf]
        %v2926 = vld [vmem:[#allocation3 + $0x64] sm:$0xf]
        %v2927 = vld [vmem:[#allocation3 + $0x68] sm:$0x3]
        %v2928 = vld [vmem:[#allocation3 + $0x6c] sm:$0xf]
        %v2929 = vld [vmem:[#allocation3 + $0x70] sm:$0xf]
        %v2930 = vld [vmem:[#allocation3 + $0x74] sm:$0x3]
        %v2931 = vld [vmem:[#allocation3 + $0x78] sm:$0xf]
        %v2932 = vld [vmem:[#allocation3 + $0x7c] sm:$0xf]
        %v2933 = vld [vmem:[#allocation3 + $0x80] sm:$0x3]
        %v2934 = vld [vmem:[#allocation3 + $0x84] sm:$0xf]
        %v2935 = vld [vmem:[#allocation3 + $0x88] sm:$0xf]
        %v2936 = vld [vmem:[#allocation3 + $0x8c] sm:$0x3]
        %v2937 = vld [vmem:[#allocation3 + $0x90] sm:$0xf]
        %v2938 = vld [vmem:[#allocation3 + $0x94] sm:$0xf]
        %v2939 = vld [vmem:[#allocation3 + $0x98] sm:$0x3]
        %v2940 = vld [vmem:[#allocation3 + $0x9c] sm:$0xf]
        %v2941 = vld [vmem:[#allocation3 + $0xa0] sm:$0xf]
        %v2942 = vld [vmem:[#allocation3 + $0xa4] sm:$0x3]
        %v2943 = vld [vmem:[#allocation3 + $0xa8] sm:$0xf]
        %v2944 = vld [vmem:[#allocation3 + $0xac] sm:$0xf]
        %v2945 = vld [vmem:[#allocation3 + $0xb0] sm:$0x3]
        %v2946 = vld [vmem:[#allocation3 + $0xb4] sm:$0xf]
        %v2947 = vld [vmem:[#allocation3 + $0xb8] sm:$0xf]
        %v2948 = vld [vmem:[#allocation3 + $0xbc] sm:$0x3]
        %v2949 = vld [vmem:[#allocation3 + $0xc0] sm:$0xf]
        %v2950 = vld [vmem:[#allocation3 + $0xc4] sm:$0xf]
        %v2951 = vld [vmem:[#allocation3 + $0xc8] sm:$0x3]
        %v2952 = vld [vmem:[#allocation3 + $0xcc] sm:$0xf]
        %v2953 = vld [vmem:[#allocation3 + $0xd0] sm:$0xf]
        %v2954 = vld [vmem:[#allocation3 + $0xd4] sm:$0x3]
        %v2955 = vld [vmem:[#allocation3 + $0xd8] sm:$0xf]
        %v2956 = vld [vmem:[#allocation3 + $0xdc] sm:$0xf]
        %v2957 = vld [vmem:[#allocation3 + $0xe0] sm:$0x3]
        %v2958 = vld [vmem:[#allocation3 + $0xe4] sm:$0xf]
        %v2959 = vld [vmem:[#allocation3 + $0xe8] sm:$0xf]
        %v2960 = vld [vmem:[#allocation3 + $0xec] sm:$0x3]
        %v3001 = vunpack.c.l.b16 %v2901
        %v3002 = vunpack.c.l.b16 %v2902
        %v3003 = vunpack.c.l.b16 %v2904
        %v3004 = vunpack.c.l.b16 %v2905
        %v3005 = vunpack.c.l.b16 %v2907
        %v3006 = vunpack.c.l.b16 %v2908
        %v3007 = vunpack.c.l.b16 %v2910
        %v3008 = vunpack.c.l.b16 %v2911
        %v3009 = vunpack.c.l.b16 %v2913
        %v3010 = vunpack.c.l.b16 %v2914
        %v3011 = vunpack.c.l.b16 %v2916
        %v3012 = vunpack.c.l.b16 %v2917
        %v3013 = vunpack.c.l.b16 %v2919
        %v3014 = vunpack.c.l.b16 %v2920
        %v3015 = vunpack.c.l.b16 %v2922
        %v3016 = vunpack.c.l.b16 %v2923
        %v3017 = vunpack.c.l.b16 %v2925
        %v3018 = vunpack.c.l.b16 %v2926
        %v3019 = vunpack.c.l.b16 %v2928
        %v3020 = vunpack.c.l.b16 %v2929
        %v3021 = vunpack.c.l.b16 %v2931
        %v3022 = vunpack.c.l.b16 %v2932
        %v3023 = vunpack.c.l.b16 %v2934
        %v3024 = vunpack.c.l.b16 %v2935
        %v3025 = vunpack.c.l.b16 %v2937
        %v3026 = vunpack.c.l.b16 %v2938
        %v3027 = vunpack.c.l.b16 %v2940
        %v3028 = vunpack.c.l.b16 %v2941
        %v3029 = vunpack.c.l.b16 %v2943
        %v3030 = vunpack.c.l.b16 %v2944
        %v3031 = vunpack.c.l.b16 %v2946
        %v3032 = vunpack.c.l.b16 %v2947
        %v3033 = vunpack.c.l.b16 %v2949
        %v3034 = vunpack.c.l.b16 %v2950
        %v3035 = vunpack.c.l.b16 %v2952
        %v3036 = vunpack.c.l.b16 %v2953
        %v3037 = vunpack.c.l.b16 %v2955
        %v3038 = vunpack.c.l.b16 %v2956
        %v3039 = vunpack.c.l.b16 %v2958
        %v3040 = vunpack.c.l.b16 %v2959
        %v3041 = vpack.c.b16 %v3002, %v3001
        %v3042 = vpack.c.b16 %v3004, %v3003
        %v3043 = vpack.c.b16 %v3006, %v3005
        %v3044 = vpack.c.b16 %v3008, %v3007
        %v3045 = vpack.c.b16 %v3010, %v3009
        %v3046 = vpack.c.b16 %v3012, %v3011
        %v3047 = vpack.c.b16 %v3014, %v3013
        %v3048 = vpack.c.b16 %v3016, %v3015
        %v3049 = vpack.c.b16 %v3018, %v3017
        %v3050 = vpack.c.b16 %v3020, %v3019
        %v3051 = vpack.c.b16 %v3022, %v3021
        %v3052 = vpack.c.b16 %v3024, %v3023
        %v3053 = vpack.c.b16 %v3026, %v3025
        %v3054 = vpack.c.b16 %v3028, %v3027
        %v3055 = vpack.c.b16 %v3030, %v3029
        %v3056 = vpack.c.b16 %v3032, %v3031
        %v3057 = vpack.c.b16 %v3034, %v3033
        %v3058 = vpack.c.b16 %v3036, %v3035
        %v3059 = vpack.c.b16 %v3038, %v3037
        %v3060 = vpack.c.b16 %v3040, %v3039
        %v3081 = vunpack.c.l.b16 %v2903
        %v3082 = vunpack.c.l.b16 %v2906
        %v3083 = vunpack.c.l.b16 %v2909
        %v3084 = vunpack.c.l.b16 %v2912
        %v3085 = vunpack.c.l.b16 %v2915
        %v3086 = vunpack.c.l.b16 %v2918
        %v3087 = vunpack.c.l.b16 %v2921
        %v3088 = vunpack.c.l.b16 %v2924
        %v3089 = vunpack.c.l.b16 %v2927
        %v3090 = vunpack.c.l.b16 %v2930
        %v3091 = vunpack.c.l.b16 %v2933
        %v3092 = vunpack.c.l.b16 %v2936
        %v3093 = vunpack.c.l.b16 %v2939
        %v3094 = vunpack.c.l.b16 %v2942
        %v3095 = vunpack.c.l.b16 %v2945
        %v3096 = vunpack.c.l.b16 %v2948
        %v3097 = vunpack.c.l.b16 %v2951
        %v3098 = vunpack.c.l.b16 %v2954
        %v3099 = vunpack.c.l.b16 %v2957
        %v3100 = vunpack.c.l.b16 %v2960
        %v3101 = vpack.c.b16 %v3081, %v3081
        %v3102 = vpack.c.b16 %v3082, %v3082
        %v3103 = vpack.c.b16 %v3083, %v3083
        %v3104 = vpack.c.b16 %v3084, %v3084
        %v3105 = vpack.c.b16 %v3085, %v3085
        %v3106 = vpack.c.b16 %v3086, %v3086
        %v3107 = vpack.c.b16 %v3087, %v3087
        %v3108 = vpack.c.b16 %v3088, %v3088
        %v3109 = vpack.c.b16 %v3089, %v3089
        %v3110 = vpack.c.b16 %v3090, %v3090
        %v3111 = vpack.c.b16 %v3091, %v3091
        %v3112 = vpack.c.b16 %v3092, %v3092
        %v3113 = vpack.c.b16 %v3093, %v3093
        %v3114 = vpack.c.b16 %v3094, %v3094
        %v3115 = vpack.c.b16 %v3095, %v3095
        %v3116 = vpack.c.b16 %v3096, %v3096
        %v3117 = vpack.c.b16 %v3097, %v3097
        %v3118 = vpack.c.b16 %v3098, %v3098
        %v3119 = vpack.c.b16 %v3099, %v3099
        %v3120 = vpack.c.b16 %v3100, %v3100
        %v3122 = vshrl.u32 %v3041, 16
        %v3124 = vshll.u32 %v3041, 16
        %v3126 = vrot.slane %v3124, 1
        %v3127 = vor.u32 %v3122, %v3126
        %v3129 = vshll.u32 %v3101, 16
        %v3131 = vrot.slane %v3129, 1
        %v3132 = vsel %vm1577, %v3127, %v3131
        %v3134 = vshrl.u32 %v3042, 16
        %v3136 = vshll.u32 %v3042, 16
        %v3138 = vrot.slane %v3136, 1
        %v3139 = vor.u32 %v3134, %v3138
        %v3141 = vshll.u32 %v3102, 16
        %v3143 = vrot.slane %v3141, 1
        %v3144 = vsel %vm1577, %v3139, %v3143
        %v3146 = vshrl.u32 %v3043, 16
        %v3148 = vshll.u32 %v3043, 16
        %v3150 = vrot.slane %v3148, 1
        %v3151 = vor.u32 %v3146, %v3150
        %v3153 = vshll.u32 %v3103, 16
        %v3155 = vrot.slane %v3153, 1
        %v3156 = vsel %vm1577, %v3151, %v3155
        %v3158 = vshrl.u32 %v3044, 16
        %v3160 = vshll.u32 %v3044, 16
        %v3162 = vrot.slane %v3160, 1
        %v3163 = vor.u32 %v3158, %v3162
        %v3165 = vshll.u32 %v3104, 16
        %v3167 = vrot.slane %v3165, 1
        %v3168 = vsel %vm1577, %v3163, %v3167
        %v3170 = vshrl.u32 %v3045, 16
        %v3172 = vshll.u32 %v3045, 16
        %v3174 = vrot.slane %v3172, 1
        %v3175 = vor.u32 %v3170, %v3174
        %v3177 = vshll.u32 %v3105, 16
        %v3179 = vrot.slane %v3177, 1
        %v3180 = vsel %vm1577, %v3175, %v3179
        %v3182 = vshrl.u32 %v3046, 16
        %v3184 = vshll.u32 %v3046, 16
        %v3186 = vrot.slane %v3184, 1
        %v3187 = vor.u32 %v3182, %v3186
        %v3189 = vshll.u32 %v3106, 16
        %v3191 = vrot.slane %v3189, 1
        %v3192 = vsel %vm1577, %v3187, %v3191
        %v3194 = vshrl.u32 %v3047, 16
        %v3196 = vshll.u32 %v3047, 16
        %v3198 = vrot.slane %v3196, 1
        %v3199 = vor.u32 %v3194, %v3198
        %v3201 = vshll.u32 %v3107, 16
        %v3203 = vrot.slane %v3201, 1
        %v3204 = vsel %vm1577, %v3199, %v3203
        %v3206 = vshrl.u32 %v3048, 16
        %v3208 = vshll.u32 %v3048, 16
        %v3210 = vrot.slane %v3208, 1
        %v3211 = vor.u32 %v3206, %v3210
        %v3213 = vshll.u32 %v3108, 16
        %v3215 = vrot.slane %v3213, 1
        %v3216 = vsel %vm1577, %v3211, %v3215
        %v3218 = vshrl.u32 %v3049, 16
        %v3220 = vshll.u32 %v3049, 16
        %v3222 = vrot.slane %v3220, 1
        %v3223 = vor.u32 %v3218, %v3222
        %v3225 = vshll.u32 %v3109, 16
        %v3227 = vrot.slane %v3225, 1
        %v3228 = vsel %vm1577, %v3223, %v3227
        %v3230 = vshrl.u32 %v3050, 16
        %v3232 = vshll.u32 %v3050, 16
        %v3234 = vrot.slane %v3232, 1
        %v3235 = vor.u32 %v3230, %v3234
        %v3237 = vshll.u32 %v3110, 16
        %v3239 = vrot.slane %v3237, 1
        %v3240 = vsel %vm1577, %v3235, %v3239
        %v3242 = vshrl.u32 %v3051, 16
        %v3244 = vshll.u32 %v3051, 16
        %v3246 = vrot.slane %v3244, 1
        %v3247 = vor.u32 %v3242, %v3246
        %v3249 = vshll.u32 %v3111, 16
        %v3251 = vrot.slane %v3249, 1
        %v3252 = vsel %vm1577, %v3247, %v3251
        %v3254 = vshrl.u32 %v3052, 16
        %v3256 = vshll.u32 %v3052, 16
        %v3258 = vrot.slane %v3256, 1
        %v3259 = vor.u32 %v3254, %v3258
        %v3261 = vshll.u32 %v3112, 16
        %v3263 = vrot.slane %v3261, 1
        %v3264 = vsel %vm1577, %v3259, %v3263
        %v3266 = vshrl.u32 %v3053, 16
        %v3268 = vshll.u32 %v3053, 16
        %v3270 = vrot.slane %v3268, 1
        %v3271 = vor.u32 %v3266, %v3270
        %v3273 = vshll.u32 %v3113, 16
        %v3275 = vrot.slane %v3273, 1
        %v3276 = vsel %vm1577, %v3271, %v3275
        %v3278 = vshrl.u32 %v3054, 16
        %v3280 = vshll.u32 %v3054, 16
        %v3282 = vrot.slane %v3280, 1
        %v3283 = vor.u32 %v3278, %v3282
        %v3285 = vshll.u32 %v3114, 16
        %v3287 = vrot.slane %v3285, 1
        %v3288 = vsel %vm1577, %v3283, %v3287
        %v3290 = vshrl.u32 %v3055, 16
        %v3292 = vshll.u32 %v3055, 16
        %v3294 = vrot.slane %v3292, 1
        %v3295 = vor.u32 %v3290, %v3294
        %v3297 = vshll.u32 %v3115, 16
        %v3299 = vrot.slane %v3297, 1
        %v3300 = vsel %vm1577, %v3295, %v3299
        %v3302 = vshrl.u32 %v3056, 16
        %v3304 = vshll.u32 %v3056, 16
        %v3306 = vrot.slane %v3304, 1
        %v3307 = vor.u32 %v3302, %v3306
        %v3309 = vshll.u32 %v3116, 16
        %v3311 = vrot.slane %v3309, 1
        %v3312 = vsel %vm1577, %v3307, %v3311
        %v3314 = vshrl.u32 %v3057, 16
        %v3316 = vshll.u32 %v3057, 16
        %v3318 = vrot.slane %v3316, 1
        %v3319 = vor.u32 %v3314, %v3318
        %v3321 = vshll.u32 %v3117, 16
        %v3323 = vrot.slane %v3321, 1
        %v3324 = vsel %vm1577, %v3319, %v3323
        %v3326 = vshrl.u32 %v3058, 16
        %v3328 = vshll.u32 %v3058, 16
        %v3330 = vrot.slane %v3328, 1
        %v3331 = vor.u32 %v3326, %v3330
        %v3333 = vshll.u32 %v3118, 16
        %v3335 = vrot.slane %v3333, 1
        %v3336 = vsel %vm1577, %v3331, %v3335
        %v3338 = vshrl.u32 %v3059, 16
        %v3340 = vshll.u32 %v3059, 16
        %v3342 = vrot.slane %v3340, 1
        %v3343 = vor.u32 %v3338, %v3342
        %v3345 = vshll.u32 %v3119, 16
        %v3347 = vrot.slane %v3345, 1
        %v3348 = vsel %vm1577, %v3343, %v3347
        %v3350 = vshrl.u32 %v3060, 16
        %v3352 = vshll.u32 %v3060, 16
        %v3354 = vrot.slane %v3352, 1
        %v3355 = vor.u32 %v3350, %v3354
        %v3357 = vshll.u32 %v3120, 16
        %v3359 = vrot.slane %v3357, 1
        %v3360 = vsel %vm1577, %v3355, %v3359
        %3361 = vrot.lane.b32.xlu0 %v3132, 4
        %v3362 = vpop.permute.xlu0 %3361
        %3363 = vrot.lane.b32.xlu0 %v3144, 4
        %v3364 = vpop.permute.xlu0 %3363
        %3365 = vrot.lane.b32.xlu0 %v3156, 4
        %v3366 = vpop.permute.xlu0 %3365
        %3367 = vrot.lane.b32.xlu0 %v3168, 4
        %v3368 = vpop.permute.xlu0 %3367
        %3369 = vrot.lane.b32.xlu0 %v3180, 4
        %v3370 = vpop.permute.xlu0 %3369
        %3371 = vrot.lane.b32.xlu0 %v3192, 4
        %v3372 = vpop.permute.xlu0 %3371
        %3373 = vrot.lane.b32.xlu0 %v3204, 4
        %v3374 = vpop.permute.xlu0 %3373
        %3375 = vrot.lane.b32.xlu0 %v3216, 4
        %v3376 = vpop.permute.xlu0 %3375
        %3377 = vrot.lane.b32.xlu0 %v3228, 4
        %v3378 = vpop.permute.xlu0 %3377
        %3379 = vrot.lane.b32.xlu0 %v3240, 4
        %v3380 = vpop.permute.xlu0 %3379
        %3381 = vrot.lane.b32.xlu0 %v3252, 4
        %v3382 = vpop.permute.xlu0 %3381
        %3383 = vrot.lane.b32.xlu0 %v3264, 4
        %v3384 = vpop.permute.xlu0 %3383
        %3385 = vrot.lane.b32.xlu0 %v3276, 4
        %v3386 = vpop.permute.xlu0 %3385
        %3387 = vrot.lane.b32.xlu0 %v3288, 4
        %v3388 = vpop.permute.xlu0 %3387
        %3389 = vrot.lane.b32.xlu0 %v3300, 4
        %v3390 = vpop.permute.xlu0 %3389
        %3391 = vrot.lane.b32.xlu0 %v3312, 4
        %v3392 = vpop.permute.xlu0 %3391
        %3393 = vrot.lane.b32.xlu0 %v3324, 4
        %v3394 = vpop.permute.xlu0 %3393
        %3395 = vrot.lane.b32.xlu0 %v3336, 4
        %v3396 = vpop.permute.xlu0 %3395
        %3397 = vrot.lane.b32.xlu0 %v3348, 4
        %v3398 = vpop.permute.xlu0 %3397
        %3399 = vrot.lane.b32.xlu0 %v3360, 4
        %v3400 = vpop.permute.xlu0 %3399
        %v3401 = vrot.slane %v3041, 1
        %v3402 = vrot.slane %v3101, 1
        %v3403 = vsel %vm1830, %v3401, %v3402
        %v3404 = vrot.slane %v3042, 1
        %v3405 = vrot.slane %v3102, 1
        %v3406 = vsel %vm1830, %v3404, %v3405
        %v3407 = vrot.slane %v3043, 1
        %v3408 = vrot.slane %v3103, 1
        %v3409 = vsel %vm1830, %v3407, %v3408
        %v3410 = vrot.slane %v3044, 1
        %v3411 = vrot.slane %v3104, 1
        %v3412 = vsel %vm1830, %v3410, %v3411
        %v3413 = vrot.slane %v3045, 1
        %v3414 = vrot.slane %v3105, 1
        %v3415 = vsel %vm1830, %v3413, %v3414
        %v3416 = vrot.slane %v3046, 1
        %v3417 = vrot.slane %v3106, 1
        %v3418 = vsel %vm1830, %v3416, %v3417
        %v3419 = vrot.slane %v3047, 1
        %v3420 = vrot.slane %v3107, 1
        %v3421 = vsel %vm1830, %v3419, %v3420
        %v3422 = vrot.slane %v3048, 1
        %v3423 = vrot.slane %v3108, 1
        %v3424 = vsel %vm1830, %v3422, %v3423
        %v3425 = vrot.slane %v3049, 1
        %v3426 = vrot.slane %v3109, 1
        %v3427 = vsel %vm1830, %v3425, %v3426
        %v3428 = vrot.slane %v3050, 1
        %v3429 = vrot.slane %v3110, 1
        %v3430 = vsel %vm1830, %v3428, %v3429
        %v3431 = vrot.slane %v3051, 1
        %v3432 = vrot.slane %v3111, 1
        %v3433 = vsel %vm1830, %v3431, %v3432
        %v3434 = vrot.slane %v3052, 1
        %v3435 = vrot.slane %v3112, 1
        %v3436 = vsel %vm1830, %v3434, %v3435
        %v3437 = vrot.slane %v3053, 1
        %v3438 = vrot.slane %v3113, 1
        %v3439 = vsel %vm1830, %v3437, %v3438
        %v3440 = vrot.slane %v3054, 1
        %v3441 = vrot.slane %v3114, 1
        %v3442 = vsel %vm1830, %v3440, %v3441
        %v3443 = vrot.slane %v3055, 1
        %v3444 = vrot.slane %v3115, 1
        %v3445 = vsel %vm1830, %v3443, %v3444
        %v3446 = vrot.slane %v3056, 1
        %v3447 = vrot.slane %v3116, 1
        %v3448 = vsel %vm1830, %v3446, %v3447
        %v3449 = vrot.slane %v3057, 1
        %v3450 = vrot.slane %v3117, 1
        %v3451 = vsel %vm1830, %v3449, %v3450
        %v3452 = vrot.slane %v3058, 1
        %v3453 = vrot.slane %v3118, 1
        %v3454 = vsel %vm1830, %v3452, %v3453
        %v3455 = vrot.slane %v3059, 1
        %v3456 = vrot.slane %v3119, 1
        %v3457 = vsel %vm1830, %v3455, %v3456
        %v3458 = vrot.slane %v3060, 1
        %v3459 = vrot.slane %v3120, 1
        %v3460 = vsel %vm1830, %v3458, %v3459
        %3461 = vrot.lane.b32.xlu0 %v3403, 8
        %v3462 = vpop.permute.xlu0 %3461
        %3463 = vrot.lane.b32.xlu0 %v3406, 8
        %v3464 = vpop.permute.xlu0 %3463
        %3465 = vrot.lane.b32.xlu0 %v3409, 8
        %v3466 = vpop.permute.xlu0 %3465
        %3467 = vrot.lane.b32.xlu0 %v3412, 8
        %v3468 = vpop.permute.xlu0 %3467
        %3469 = vrot.lane.b32.xlu0 %v3415, 8
        %v3470 = vpop.permute.xlu0 %3469
        %3471 = vrot.lane.b32.xlu0 %v3418, 8
        %v3472 = vpop.permute.xlu0 %3471
        %3473 = vrot.lane.b32.xlu0 %v3421, 8
        %v3474 = vpop.permute.xlu0 %3473
        %3475 = vrot.lane.b32.xlu0 %v3424, 8
        %v3476 = vpop.permute.xlu0 %3475
        %3477 = vrot.lane.b32.xlu0 %v3427, 8
        %v3478 = vpop.permute.xlu0 %3477
        %3479 = vrot.lane.b32.xlu0 %v3430, 8
        %v3480 = vpop.permute.xlu0 %3479
        %3481 = vrot.lane.b32.xlu0 %v3433, 8
        %v3482 = vpop.permute.xlu0 %3481
        %3483 = vrot.lane.b32.xlu0 %v3436, 8
        %v3484 = vpop.permute.xlu0 %3483
        %3485 = vrot.lane.b32.xlu0 %v3439, 8
        %v3486 = vpop.permute.xlu0 %3485
        %3487 = vrot.lane.b32.xlu0 %v3442, 8
        %v3488 = vpop.permute.xlu0 %3487
        %3489 = vrot.lane.b32.xlu0 %v3445, 8
        %v3490 = vpop.permute.xlu0 %3489
        %3491 = vrot.lane.b32.xlu0 %v3448, 8
        %v3492 = vpop.permute.xlu0 %3491
        %3493 = vrot.lane.b32.xlu0 %v3451, 8
        %v3494 = vpop.permute.xlu0 %3493
        %3495 = vrot.lane.b32.xlu0 %v3454, 8
        %v3496 = vpop.permute.xlu0 %3495
        %3497 = vrot.lane.b32.xlu0 %v3457, 8
        %v3498 = vpop.permute.xlu0 %3497
        %3499 = vrot.lane.b32.xlu0 %v3460, 8
        %v3500 = vpop.permute.xlu0 %3499
        %vm3501 = vsmask.f32 6400
        %v3502 = vrot.slane %v3122, 1
        %v3503 = vrot.slane %v3124, 2
        %v3504 = vor.u32 %v3502, %v3503
        %v3505 = vshrl.u32 %v3101, 16
        %v3507 = vrot.slane %v3505, 1
        %v3508 = vrot.slane %v3129, 2
        %v3509 = vor.u32 %v3507, %v3508
        %v3510 = vsel %vm3501, %v3504, %v3509
        %v3511 = vrot.slane %v3134, 1
        %v3512 = vrot.slane %v3136, 2
        %v3513 = vor.u32 %v3511, %v3512
        %v3514 = vshrl.u32 %v3102, 16
        %v3516 = vrot.slane %v3514, 1
        %v3517 = vrot.slane %v3141, 2
        %v3518 = vor.u32 %v3516, %v3517
        %v3519 = vsel %vm3501, %v3513, %v3518
        %v3520 = vrot.slane %v3146, 1
        %v3521 = vrot.slane %v3148, 2
        %v3522 = vor.u32 %v3520, %v3521
        %v3523 = vshrl.u32 %v3103, 16
        %v3525 = vrot.slane %v3523, 1
        %v3526 = vrot.slane %v3153, 2
        %v3527 = vor.u32 %v3525, %v3526
        %v3528 = vsel %vm3501, %v3522, %v3527
        %v3529 = vrot.slane %v3158, 1
        %v3530 = vrot.slane %v3160, 2
        %v3531 = vor.u32 %v3529, %v3530
        %v3532 = vshrl.u32 %v3104, 16
        %v3534 = vrot.slane %v3532, 1
        %v3535 = vrot.slane %v3165, 2
        %v3536 = vor.u32 %v3534, %v3535
        %v3537 = vsel %vm3501, %v3531, %v3536
        %v3538 = vrot.slane %v3170, 1
        %v3539 = vrot.slane %v3172, 2
        %v3540 = vor.u32 %v3538, %v3539
        %v3541 = vshrl.u32 %v3105, 16
        %v3543 = vrot.slane %v3541, 1
        %v3544 = vrot.slane %v3177, 2
        %v3545 = vor.u32 %v3543, %v3544
        %v3546 = vsel %vm3501, %v3540, %v3545
        %v3547 = vrot.slane %v3182, 1
        %v3548 = vrot.slane %v3184, 2
        %v3549 = vor.u32 %v3547, %v3548
        %v3550 = vshrl.u32 %v3106, 16
        %v3552 = vrot.slane %v3550, 1
        %v3553 = vrot.slane %v3189, 2
        %v3554 = vor.u32 %v3552, %v3553
        %v3555 = vsel %vm3501, %v3549, %v3554
        %v3556 = vrot.slane %v3194, 1
        %v3557 = vrot.slane %v3196, 2
        %v3558 = vor.u32 %v3556, %v3557
        %v3559 = vshrl.u32 %v3107, 16
        %v3561 = vrot.slane %v3559, 1
        %v3562 = vrot.slane %v3201, 2
        %v3563 = vor.u32 %v3561, %v3562
        %v3564 = vsel %vm3501, %v3558, %v3563
        %v3565 = vrot.slane %v3206, 1
        %v3566 = vrot.slane %v3208, 2
        %v3567 = vor.u32 %v3565, %v3566
        %v3568 = vshrl.u32 %v3108, 16
        %v3570 = vrot.slane %v3568, 1
        %v3571 = vrot.slane %v3213, 2
        %v3572 = vor.u32 %v3570, %v3571
        %v3573 = vsel %vm3501, %v3567, %v3572
        %v3574 = vrot.slane %v3218, 1
        %v3575 = vrot.slane %v3220, 2
        %v3576 = vor.u32 %v3574, %v3575
        %v3577 = vshrl.u32 %v3109, 16
        %v3579 = vrot.slane %v3577, 1
        %v3580 = vrot.slane %v3225, 2
        %v3581 = vor.u32 %v3579, %v3580
        %v3582 = vsel %vm3501, %v3576, %v3581
        %v3583 = vrot.slane %v3230, 1
        %v3584 = vrot.slane %v3232, 2
        %v3585 = vor.u32 %v3583, %v3584
        %v3586 = vshrl.u32 %v3110, 16
        %v3588 = vrot.slane %v3586, 1
        %v3589 = vrot.slane %v3237, 2
        %v3590 = vor.u32 %v3588, %v3589
        %v3591 = vsel %vm3501, %v3585, %v3590
        %v3592 = vrot.slane %v3242, 1
        %v3593 = vrot.slane %v3244, 2
        %v3594 = vor.u32 %v3592, %v3593
        %v3595 = vshrl.u32 %v3111, 16
        %v3597 = vrot.slane %v3595, 1
        %v3598 = vrot.slane %v3249, 2
        %v3599 = vor.u32 %v3597, %v3598
        %v3600 = vsel %vm3501, %v3594, %v3599
        %v3601 = vrot.slane %v3254, 1
        %v3602 = vrot.slane %v3256, 2
        %v3603 = vor.u32 %v3601, %v3602
        %v3604 = vshrl.u32 %v3112, 16
        %v3606 = vrot.slane %v3604, 1
        %v3607 = vrot.slane %v3261, 2
        %v3608 = vor.u32 %v3606, %v3607
        %v3609 = vsel %vm3501, %v3603, %v3608
        %v3610 = vrot.slane %v3266, 1
        %v3611 = vrot.slane %v3268, 2
        %v3612 = vor.u32 %v3610, %v3611
        %v3613 = vshrl.u32 %v3113, 16
        %v3615 = vrot.slane %v3613, 1
        %v3616 = vrot.slane %v3273, 2
        %v3617 = vor.u32 %v3615, %v3616
        %v3618 = vsel %vm3501, %v3612, %v3617
        %v3619 = vrot.slane %v3278, 1
        %v3620 = vrot.slane %v3280, 2
        %v3621 = vor.u32 %v3619, %v3620
        %v3622 = vshrl.u32 %v3114, 16
        %v3624 = vrot.slane %v3622, 1
        %v3625 = vrot.slane %v3285, 2
        %v3626 = vor.u32 %v3624, %v3625
        %v3627 = vsel %vm3501, %v3621, %v3626
        %v3628 = vrot.slane %v3290, 1
        %v3629 = vrot.slane %v3292, 2
        %v3630 = vor.u32 %v3628, %v3629
        %v3631 = vshrl.u32 %v3115, 16
        %v3633 = vrot.slane %v3631, 1
        %v3634 = vrot.slane %v3297, 2
        %v3635 = vor.u32 %v3633, %v3634
        %v3636 = vsel %vm3501, %v3630, %v3635
        %v3637 = vrot.slane %v3302, 1
        %v3638 = vrot.slane %v3304, 2
        %v3639 = vor.u32 %v3637, %v3638
        %v3640 = vshrl.u32 %v3116, 16
        %v3642 = vrot.slane %v3640, 1
        %v3643 = vrot.slane %v3309, 2
        %v3644 = vor.u32 %v3642, %v3643
        %v3645 = vsel %vm3501, %v3639, %v3644
        %v3646 = vrot.slane %v3314, 1
        %v3647 = vrot.slane %v3316, 2
        %v3648 = vor.u32 %v3646, %v3647
        %v3649 = vshrl.u32 %v3117, 16
        %v3651 = vrot.slane %v3649, 1
        %v3652 = vrot.slane %v3321, 2
        %v3653 = vor.u32 %v3651, %v3652
        %v3654 = vsel %vm3501, %v3648, %v3653
        %v3655 = vrot.slane %v3326, 1
        %v3656 = vrot.slane %v3328, 2
        %v3657 = vor.u32 %v3655, %v3656
        %v3658 = vshrl.u32 %v3118, 16
        %v3660 = vrot.slane %v3658, 1
        %v3661 = vrot.slane %v3333, 2
        %v3662 = vor.u32 %v3660, %v3661
        %v3663 = vsel %vm3501, %v3657, %v3662
        %v3664 = vrot.slane %v3338, 1
        %v3665 = vrot.slane %v3340, 2
        %v3666 = vor.u32 %v3664, %v3665
        %v3667 = vshrl.u32 %v3119, 16
        %v3669 = vrot.slane %v3667, 1
        %v3670 = vrot.slane %v3345, 2
        %v3671 = vor.u32 %v3669, %v3670
        %v3672 = vsel %vm3501, %v3666, %v3671
        %v3673 = vrot.slane %v3350, 1
        %v3674 = vrot.slane %v3352, 2
        %v3675 = vor.u32 %v3673, %v3674
        %v3676 = vshrl.u32 %v3120, 16
        %v3678 = vrot.slane %v3676, 1
        %v3679 = vrot.slane %v3357, 2
        %v3680 = vor.u32 %v3678, %v3679
        %v3681 = vsel %vm3501, %v3675, %v3680
        %3682 = vrot.lane.b32.xlu0 %v3510, 12
        %v3683 = vpop.permute.xlu0 %3682
        %3684 = vrot.lane.b32.xlu0 %v3519, 12
        %v3685 = vpop.permute.xlu0 %3684
        %3686 = vrot.lane.b32.xlu0 %v3528, 12
        %v3687 = vpop.permute.xlu0 %3686
        %3688 = vrot.lane.b32.xlu0 %v3537, 12
        %v3689 = vpop.permute.xlu0 %3688
        %3690 = vrot.lane.b32.xlu0 %v3546, 12
        %v3691 = vpop.permute.xlu0 %3690
        %3692 = vrot.lane.b32.xlu0 %v3555, 12
        %v3693 = vpop.permute.xlu0 %3692
        %3694 = vrot.lane.b32.xlu0 %v3564, 12
        %v3695 = vpop.permute.xlu0 %3694
        %3696 = vrot.lane.b32.xlu0 %v3573, 12
        %v3697 = vpop.permute.xlu0 %3696
        %3698 = vrot.lane.b32.xlu0 %v3582, 12
        %v3699 = vpop.permute.xlu0 %3698
        %3700 = vrot.lane.b32.xlu0 %v3591, 12
        %v3701 = vpop.permute.xlu0 %3700
        %3702 = vrot.lane.b32.xlu0 %v3600, 12
        %v3703 = vpop.permute.xlu0 %3702
        %3704 = vrot.lane.b32.xlu0 %v3609, 12
        %v3705 = vpop.permute.xlu0 %3704
        %3706 = vrot.lane.b32.xlu0 %v3618, 12
        %v3707 = vpop.permute.xlu0 %3706
        %3708 = vrot.lane.b32.xlu0 %v3627, 12
        %v3709 = vpop.permute.xlu0 %3708
        %3710 = vrot.lane.b32.xlu0 %v3636, 12
        %v3711 = vpop.permute.xlu0 %3710
        %3712 = vrot.lane.b32.xlu0 %v3645, 12
        %v3713 = vpop.permute.xlu0 %3712
        %3714 = vrot.lane.b32.xlu0 %v3654, 12
        %v3715 = vpop.permute.xlu0 %3714
        %3716 = vrot.lane.b32.xlu0 %v3663, 12
        %v3717 = vpop.permute.xlu0 %3716
        %3718 = vrot.lane.b32.xlu0 %v3672, 12
        %v3719 = vpop.permute.xlu0 %3718
        %3720 = vrot.lane.b32.xlu0 %v3681, 12
        %v3721 = vpop.permute.xlu0 %3720
        %vm3722 = vcmask 1045504
        %v3723 = vrot.slane %v3041, 2
        %v3724 = vrot.slane %v3101, 2
        %v3725 = vsel %vm3722, %v3723, %v3724
        %v3726 = vrot.slane %v3042, 2
        %v3727 = vrot.slane %v3102, 2
        %v3728 = vsel %vm3722, %v3726, %v3727
        %v3729 = vrot.slane %v3043, 2
        %v3730 = vrot.slane %v3103, 2
        %v3731 = vsel %vm3722, %v3729, %v3730
        %v3732 = vrot.slane %v3044, 2
        %v3733 = vrot.slane %v3104, 2
        %v3734 = vsel %vm3722, %v3732, %v3733
        %v3735 = vrot.slane %v3045, 2
        %v3736 = vrot.slane %v3105, 2
        %v3737 = vsel %vm3722, %v3735, %v3736
        %v3738 = vrot.slane %v3046, 2
        %v3739 = vrot.slane %v3106, 2
        %v3740 = vsel %vm3722, %v3738, %v3739
        %v3741 = vrot.slane %v3047, 2
        %v3742 = vrot.slane %v3107, 2
        %v3743 = vsel %vm3722, %v3741, %v3742
        %v3744 = vrot.slane %v3048, 2
        %v3745 = vrot.slane %v3108, 2
        %v3746 = vsel %vm3722, %v3744, %v3745
        %v3747 = vrot.slane %v3049, 2
        %v3748 = vrot.slane %v3109, 2
        %v3749 = vsel %vm3722, %v3747, %v3748
        %v3750 = vrot.slane %v3050, 2
        %v3751 = vrot.slane %v3110, 2
        %v3752 = vsel %vm3722, %v3750, %v3751
        %v3753 = vrot.slane %v3051, 2
        %v3754 = vrot.slane %v3111, 2
        %v3755 = vsel %vm3722, %v3753, %v3754
        %v3756 = vrot.slane %v3052, 2
        %v3757 = vrot.slane %v3112, 2
        %v3758 = vsel %vm3722, %v3756, %v3757
        %v3759 = vrot.slane %v3053, 2
        %v3760 = vrot.slane %v3113, 2
        %v3761 = vsel %vm3722, %v3759, %v3760
        %v3762 = vrot.slane %v3054, 2
        %v3763 = vrot.slane %v3114, 2
        %v3764 = vsel %vm3722, %v3762, %v3763
        %v3765 = vrot.slane %v3055, 2
        %v3766 = vrot.slane %v3115, 2
        %v3767 = vsel %vm3722, %v3765, %v3766
        %v3768 = vrot.slane %v3056, 2
        %v3769 = vrot.slane %v3116, 2
        %v3770 = vsel %vm3722, %v3768, %v3769
        %v3771 = vrot.slane %v3057, 2
        %v3772 = vrot.slane %v3117, 2
        %v3773 = vsel %vm3722, %v3771, %v3772
        %v3774 = vrot.slane %v3058, 2
        %v3775 = vrot.slane %v3118, 2
        %v3776 = vsel %vm3722, %v3774, %v3775
        %v3777 = vrot.slane %v3059, 2
        %v3778 = vrot.slane %v3119, 2
        %v3779 = vsel %vm3722, %v3777, %v3778
        %v3780 = vrot.slane %v3060, 2
        %v3781 = vrot.slane %v3120, 2
        %v3782 = vsel %vm3722, %v3780, %v3781
        %3783 = vrot.lane.b32.xlu0 %v3725, 16
        %v3784 = vpop.permute.xlu0 %3783
        %3785 = vrot.lane.b32.xlu0 %v3728, 16
        %v3786 = vpop.permute.xlu0 %3785
        %3787 = vrot.lane.b32.xlu0 %v3731, 16
        %v3788 = vpop.permute.xlu0 %3787
        %3789 = vrot.lane.b32.xlu0 %v3734, 16
        %v3790 = vpop.permute.xlu0 %3789
        %3791 = vrot.lane.b32.xlu0 %v3737, 16
        %v3792 = vpop.permute.xlu0 %3791
        %3793 = vrot.lane.b32.xlu0 %v3740, 16
        %v3794 = vpop.permute.xlu0 %3793
        %3795 = vrot.lane.b32.xlu0 %v3743, 16
        %v3796 = vpop.permute.xlu0 %3795
        %3797 = vrot.lane.b32.xlu0 %v3746, 16
        %v3798 = vpop.permute.xlu0 %3797
        %3799 = vrot.lane.b32.xlu0 %v3749, 16
        %v3800 = vpop.permute.xlu0 %3799
        %3801 = vrot.lane.b32.xlu0 %v3752, 16
        %v3802 = vpop.permute.xlu0 %3801
        %3803 = vrot.lane.b32.xlu0 %v3755, 16
        %v3804 = vpop.permute.xlu0 %3803
        %3805 = vrot.lane.b32.xlu0 %v3758, 16
        %v3806 = vpop.permute.xlu0 %3805
        %3807 = vrot.lane.b32.xlu0 %v3761, 16
        %v3808 = vpop.permute.xlu0 %3807
        %3809 = vrot.lane.b32.xlu0 %v3764, 16
        %v3810 = vpop.permute.xlu0 %3809
        %3811 = vrot.lane.b32.xlu0 %v3767, 16
        %v3812 = vpop.permute.xlu0 %3811
        %3813 = vrot.lane.b32.xlu0 %v3770, 16
        %v3814 = vpop.permute.xlu0 %3813
        %3815 = vrot.lane.b32.xlu0 %v3773, 16
        %v3816 = vpop.permute.xlu0 %3815
        %3817 = vrot.lane.b32.xlu0 %v3776, 16
        %v3818 = vpop.permute.xlu0 %3817
        %3819 = vrot.lane.b32.xlu0 %v3779, 16
        %v3820 = vpop.permute.xlu0 %3819
        %3821 = vrot.lane.b32.xlu0 %v3782, 16
        %v3822 = vpop.permute.xlu0 %3821
        %v3824 = vsel %vm602, %v3041, %v3362
        %v3826 = vsel %vm602, %v3042, %v3364
        %v3828 = vsel %vm602, %v3043, %v3366
        %v3830 = vsel %vm602, %v3044, %v3368
        %v3832 = vsel %vm602, %v3045, %v3370
        %v3834 = vsel %vm602, %v3046, %v3372
        %v3836 = vsel %vm602, %v3047, %v3374
        %v3838 = vsel %vm602, %v3048, %v3376
        %v3840 = vsel %vm602, %v3049, %v3378
        %v3842 = vsel %vm602, %v3050, %v3380
        %v3844 = vsel %vm602, %v3051, %v3382
        %v3846 = vsel %vm602, %v3052, %v3384
        %v3848 = vsel %vm602, %v3053, %v3386
        %v3850 = vsel %vm602, %v3054, %v3388
        %v3852 = vsel %vm602, %v3055, %v3390
        %v3854 = vsel %vm602, %v3056, %v3392
        %v3856 = vsel %vm602, %v3057, %v3394
        %v3858 = vsel %vm602, %v3058, %v3396
        %v3860 = vsel %vm602, %v3059, %v3398
        %v3862 = vsel %vm602, %v3060, %v3400
        %v3864 = vsel %vm776, %v3824, %v3462
        %v3866 = vsel %vm776, %v3826, %v3464
        %v3868 = vsel %vm776, %v3828, %v3466
        %v3870 = vsel %vm776, %v3830, %v3468
        %v3872 = vsel %vm776, %v3832, %v3470
        %v3874 = vsel %vm776, %v3834, %v3472
        %v3876 = vsel %vm776, %v3836, %v3474
        %v3878 = vsel %vm776, %v3838, %v3476
        %v3880 = vsel %vm776, %v3840, %v3478
        %v3882 = vsel %vm776, %v3842, %v3480
        %v3884 = vsel %vm776, %v3844, %v3482
        %v3886 = vsel %vm776, %v3846, %v3484
        %v3888 = vsel %vm776, %v3848, %v3486
        %v3890 = vsel %vm776, %v3850, %v3488
        %v3892 = vsel %vm776, %v3852, %v3490
        %v3894 = vsel %vm776, %v3854, %v3492
        %v3896 = vsel %vm776, %v3856, %v3494
        %v3898 = vsel %vm776, %v3858, %v3496
        %v3900 = vsel %vm776, %v3860, %v3498
        %v3902 = vsel %vm776, %v3862, %v3500
        %v3904 = vsel %vm2003, %v3864, %v3683
        %v3906 = vsel %vm2003, %v3866, %v3685
        %v3908 = vsel %vm2003, %v3868, %v3687
        %v3910 = vsel %vm2003, %v3870, %v3689
        %v3912 = vsel %vm2003, %v3872, %v3691
        %v3914 = vsel %vm2003, %v3874, %v3693
        %v3916 = vsel %vm2003, %v3876, %v3695
        %v3918 = vsel %vm2003, %v3878, %v3697
        %v3920 = vsel %vm2003, %v3880, %v3699
        %v3922 = vsel %vm2003, %v3882, %v3701
        %v3924 = vsel %vm2003, %v3884, %v3703
        %v3926 = vsel %vm2003, %v3886, %v3705
        %v3928 = vsel %vm2003, %v3888, %v3707
        %v3930 = vsel %vm2003, %v3890, %v3709
        %v3932 = vsel %vm2003, %v3892, %v3711
        %v3934 = vsel %vm2003, %v3894, %v3713
        %v3936 = vsel %vm2003, %v3896, %v3715
        %v3938 = vsel %vm2003, %v3898, %v3717
        %v3940 = vsel %vm2003, %v3900, %v3719
        %v3942 = vsel %vm2003, %v3902, %v3721
        %vm3943 = vcmask 130048
        %v3945 = vsel %vm3943, %v3904, %v3784
        %v3947 = vsel %vm3943, %v3906, %v3786
        %v3949 = vsel %vm3943, %v3908, %v3788
        %v3951 = vsel %vm3943, %v3910, %v3790
        %v3953 = vsel %vm3943, %v3912, %v3792
        %v3955 = vsel %vm3943, %v3914, %v3794
        %v3957 = vsel %vm3943, %v3916, %v3796
        %v3959 = vsel %vm3943, %v3918, %v3798
        %v3961 = vsel %vm3943, %v3920, %v3800
        %v3963 = vsel %vm3943, %v3922, %v3802
        %v3965 = vsel %vm3943, %v3924, %v3804
        %v3967 = vsel %vm3943, %v3926, %v3806
        %v3969 = vsel %vm3943, %v3928, %v3808
        %v3971 = vsel %vm3943, %v3930, %v3810
        %v3973 = vsel %vm3943, %v3932, %v3812
        %v3975 = vsel %vm3943, %v3934, %v3814
        %v3977 = vsel %vm3943, %v3936, %v3816
        %v3979 = vsel %vm3943, %v3938, %v3818
        %v3981 = vsel %vm3943, %v3940, %v3820
        %v3983 = vsel %vm3943, %v3942, %v3822
        %v3984 = vld [vmem:[%s5] sm:$0xf]
        %v3985 = vld [vmem:[%s5 + $0x4] sm:$0xf]
        %v3986 = vld [vmem:[%s5 + $0x8] sm:$0x3]
        %s3987 = scalar_lea.vmem %s5, 12
        %v3988 = vld [vmem:[%s3987] sm:$0xf]
        %v3989 = vld [vmem:[%s3987 + $0x4] sm:$0xf]
        %v3990 = vld [vmem:[%s3987 + $0x8] sm:$0x3]
        %v3994 = vunpack.c.l.b16 %v3988
        %v3995 = vunpack.c.l.b16 %v3989
        %v3996 = vunpack.c.l.b16 %v3990
        %v3997 = vpack.c.b16 %v3995, %v3994
        %v3998 = vpack.c.b16 %v3996, %v3996
        %vm4000 = vcmask 162816
        %v4001 = vsel %vm4000, %v3947, 0
        %v4003 = vsel %vm4000, %v3949, 0
        %v4005 = vsel %vm4000, %v3951, 0
        %v4007 = vsel %vm4000, %v3953, 0
        %v4009 = vsel %vm4000, %v3955, 0
        %v4011 = vsel %vm4000, %v3957, 0
        %v4013 = vsel %vm4000, %v3959, 0
        %v4015 = vsel %vm4000, %v3961, 0
        %v4017 = vsel %vm4000, %v3963, 0
        %v4019 = vsel %vm4000, %v3965, 0
        %v4021 = vsel %vm4000, %v3967, 0
        %v4023 = vsel %vm4000, %v3969, 0
        %v4025 = vsel %vm4000, %v3971, 0
        %v4027 = vsel %vm4000, %v3973, 0
        %v4029 = vsel %vm4000, %v3975, 0
        %v4031 = vsel %vm4000, %v3977, 0
        %v4034 = vsel %vm651, %v3998, 0
        %4036 = vmatpush.bf16.msra.mxu0 0
        %4037 = vmatpush.bf16.msra.mxu0 0
        %4038 = vmatpush.bf16.msra.mxu0 0
        %4039 = vmatpush.bf16.msra.mxu0 0
        %4040 = vmatpush.bf16.msra.mxu0 0
        %4041 = vmatpush.bf16.msra.mxu0 0
        %4042 = vmatpush.bf16.msra.mxu0 %v4034
        %4043 = vmatpush.bf16.msra.mxu0 %v3997
        %4044 = vmatmul.bf16.gmra.mxu0 %v4001
        %v4045 = vpop.f32.mrf.mxu0
        %v4046 = vadd.f32 0.0, %v4045
        %v4047 = vpop.f32.mrf.mxu0
        %v4048 = vadd.f32 0.0, %v4047
        %4049 = vmatmul.bf16.gmra.mxu0 %v4003
        %v4050 = vpop.f32.mrf.mxu0
        %v4051 = vadd.f32 0.0, %v4050
        %v4052 = vpop.f32.mrf.mxu0
        %v4053 = vadd.f32 0.0, %v4052
        %4054 = vmatmul.bf16.gmra.mxu0 %v4005
        %v4055 = vpop.f32.mrf.mxu0
        %v4056 = vadd.f32 0.0, %v4055
        %v4057 = vpop.f32.mrf.mxu0
        %v4058 = vadd.f32 0.0, %v4057
        %4059 = vmatmul.bf16.gmra.mxu0 %v4007
        %v4060 = vpop.f32.mrf.mxu0
        %v4061 = vadd.f32 0.0, %v4060
        %v4062 = vpop.f32.mrf.mxu0
        %v4063 = vadd.f32 0.0, %v4062
        %4064 = vmatmul.bf16.gmra.mxu0 %v4009
        %v4065 = vpop.f32.mrf.mxu0
        %v4066 = vadd.f32 0.0, %v4065
        %v4067 = vpop.f32.mrf.mxu0
        %v4068 = vadd.f32 0.0, %v4067
        %4069 = vmatmul.bf16.gmra.mxu0 %v4011
        %v4070 = vpop.f32.mrf.mxu0
        %v4071 = vadd.f32 0.0, %v4070
        %v4072 = vpop.f32.mrf.mxu0
        %v4073 = vadd.f32 0.0, %v4072
        %4074 = vmatmul.bf16.gmra.mxu0 %v4013
        %v4075 = vpop.f32.mrf.mxu0
        %v4076 = vadd.f32 0.0, %v4075
        %v4077 = vpop.f32.mrf.mxu0
        %v4078 = vadd.f32 0.0, %v4077
        %4079 = vmatmul.bf16.gmra.mxu0 %v4015
        %v4080 = vpop.f32.mrf.mxu0
        %v4081 = vadd.f32 0.0, %v4080
        %v4082 = vpop.f32.mrf.mxu0
        %v4083 = vadd.f32 0.0, %v4082
        %4084 = vmatmul.bf16.gmra.mxu0 %v4017
        %v4085 = vpop.f32.mrf.mxu0
        %v4086 = vadd.f32 0.0, %v4085
        %v4087 = vpop.f32.mrf.mxu0
        %v4088 = vadd.f32 0.0, %v4087
        %4089 = vmatmul.bf16.gmra.mxu0 %v4019
        %v4090 = vpop.f32.mrf.mxu0
        %v4091 = vadd.f32 0.0, %v4090
        %v4092 = vpop.f32.mrf.mxu0
        %v4093 = vadd.f32 0.0, %v4092
        %4094 = vmatmul.bf16.gmra.mxu0 %v4021
        %v4095 = vpop.f32.mrf.mxu0
        %v4096 = vadd.f32 0.0, %v4095
        %v4097 = vpop.f32.mrf.mxu0
        %v4098 = vadd.f32 0.0, %v4097
        %4099 = vmatmul.bf16.gmra.mxu0 %v4023
        %v4100 = vpop.f32.mrf.mxu0
        %v4101 = vadd.f32 0.0, %v4100
        %v4102 = vpop.f32.mrf.mxu0
        %v4103 = vadd.f32 0.0, %v4102
        %4104 = vmatmul.bf16.gmra.mxu0 %v4025
        %v4105 = vpop.f32.mrf.mxu0
        %v4106 = vadd.f32 0.0, %v4105
        %v4107 = vpop.f32.mrf.mxu0
        %v4108 = vadd.f32 0.0, %v4107
        %4109 = vmatmul.bf16.gmra.mxu0 %v4027
        %v4110 = vpop.f32.mrf.mxu0
        %v4111 = vadd.f32 0.0, %v4110
        %v4112 = vpop.f32.mrf.mxu0
        %v4113 = vadd.f32 0.0, %v4112
        %4114 = vmatmul.bf16.gmra.mxu0 %v4029
        %v4115 = vpop.f32.mrf.mxu0
        %v4116 = vadd.f32 0.0, %v4115
        %v4117 = vpop.f32.mrf.mxu0
        %v4118 = vadd.f32 0.0, %v4117
        %4119 = vmatmul.bf16.gmra.mxu0 %v4031
        %v4120 = vpop.f32.mrf.mxu0
        %v4121 = vadd.f32 0.0, %v4120
        %v4122 = vpop.f32.mrf.mxu0
        %v4123 = vadd.f32 0.0, %v4122
        %4124 = vdwg.mxu0
        %v4128 = vunpack.c.l.b16 %v3984
        %v4129 = vunpack.c.l.b16 %v3985
        %v4130 = vunpack.c.l.b16 %v3986
        %v4131 = vpack.c.b16 %v4129, %v4128
        %v4132 = vpack.c.b16 %v4130, %v4130
        %v4134 = vsel %vm4000, %v3945, 0
        %v4137 = vsel %vm651, %v4132, 0
        %4139 = vmatpush.bf16.msra.mxu0 0
        %4140 = vmatpush.bf16.msra.mxu0 0
        %4141 = vmatpush.bf16.msra.mxu0 0
        %4142 = vmatpush.bf16.msra.mxu0 0
        %4143 = vmatpush.bf16.msra.mxu0 0
        %4144 = vmatpush.bf16.msra.mxu0 0
        %4145 = vmatpush.bf16.msra.mxu0 %v4137
        %4146 = vmatpush.bf16.msra.mxu0 %v4131
        %4147 = vmatmul.bf16.gmra.mxu0 %v4134
        %v4148 = vpop.f32.mrf.mxu0
        %v4149 = vadd.f32 %v4046, %v4148
        %v4150 = vpop.f32.mrf.mxu0
        %v4151 = vadd.f32 %v4048, %v4150
        %4152 = vmatmul.bf16.gmra.mxu0 %v4001
        %v4153 = vpop.f32.mrf.mxu0
        %v4154 = vadd.f32 %v4051, %v4153
        %v4155 = vpop.f32.mrf.mxu0
        %v4156 = vadd.f32 %v4053, %v4155
        %4157 = vmatmul.bf16.gmra.mxu0 %v4003
        %v4158 = vpop.f32.mrf.mxu0
        %v4159 = vadd.f32 %v4056, %v4158
        %v4160 = vpop.f32.mrf.mxu0
        %v4161 = vadd.f32 %v4058, %v4160
        %4162 = vmatmul.bf16.gmra.mxu0 %v4005
        %v4163 = vpop.f32.mrf.mxu0
        %v4164 = vadd.f32 %v4061, %v4163
        %v4165 = vpop.f32.mrf.mxu0
        %v4166 = vadd.f32 %v4063, %v4165
        %4167 = vmatmul.bf16.gmra.mxu0 %v4007
        %v4168 = vpop.f32.mrf.mxu0
        %v4169 = vadd.f32 %v4066, %v4168
        %v4170 = vpop.f32.mrf.mxu0
        %v4171 = vadd.f32 %v4068, %v4170
        %4172 = vmatmul.bf16.gmra.mxu0 %v4009
        %v4173 = vpop.f32.mrf.mxu0
        %v4174 = vadd.f32 %v4071, %v4173
        %v4175 = vpop.f32.mrf.mxu0
        %v4176 = vadd.f32 %v4073, %v4175
        %4177 = vmatmul.bf16.gmra.mxu0 %v4011
        %v4178 = vpop.f32.mrf.mxu0
        %v4179 = vadd.f32 %v4076, %v4178
        %v4180 = vpop.f32.mrf.mxu0
        %v4181 = vadd.f32 %v4078, %v4180
        %4182 = vmatmul.bf16.gmra.mxu0 %v4013
        %v4183 = vpop.f32.mrf.mxu0
        %v4184 = vadd.f32 %v4081, %v4183
        %v4185 = vpop.f32.mrf.mxu0
        %v4186 = vadd.f32 %v4083, %v4185
        %4187 = vmatmul.bf16.gmra.mxu0 %v4015
        %v4188 = vpop.f32.mrf.mxu0
        %v4189 = vadd.f32 %v4086, %v4188
        %v4190 = vpop.f32.mrf.mxu0
        %v4191 = vadd.f32 %v4088, %v4190
        %4192 = vmatmul.bf16.gmra.mxu0 %v4017
        %v4193 = vpop.f32.mrf.mxu0
        %v4194 = vadd.f32 %v4091, %v4193
        %v4195 = vpop.f32.mrf.mxu0
        %v4196 = vadd.f32 %v4093, %v4195
        %4197 = vmatmul.bf16.gmra.mxu0 %v4019
        %v4198 = vpop.f32.mrf.mxu0
        %v4199 = vadd.f32 %v4096, %v4198
        %v4200 = vpop.f32.mrf.mxu0
        %v4201 = vadd.f32 %v4098, %v4200
        %4202 = vmatmul.bf16.gmra.mxu0 %v4021
        %v4203 = vpop.f32.mrf.mxu0
        %v4204 = vadd.f32 %v4101, %v4203
        %v4205 = vpop.f32.mrf.mxu0
        %v4206 = vadd.f32 %v4103, %v4205
        %4207 = vmatmul.bf16.gmra.mxu0 %v4023
        %v4208 = vpop.f32.mrf.mxu0
        %v4209 = vadd.f32 %v4106, %v4208
        %v4210 = vpop.f32.mrf.mxu0
        %v4211 = vadd.f32 %v4108, %v4210
        %4212 = vmatmul.bf16.gmra.mxu0 %v4025
        %v4213 = vpop.f32.mrf.mxu0
        %v4214 = vadd.f32 %v4111, %v4213
        %v4215 = vpop.f32.mrf.mxu0
        %v4216 = vadd.f32 %v4113, %v4215
        %4217 = vmatmul.bf16.gmra.mxu0 %v4027
        %v4218 = vpop.f32.mrf.mxu0
        %v4219 = vadd.f32 %v4116, %v4218
        %v4220 = vpop.f32.mrf.mxu0
        %v4221 = vadd.f32 %v4118, %v4220
        %4222 = vmatmul.bf16.gmra.mxu0 %v4029
        %v4223 = vpop.f32.mrf.mxu0
        %v4224 = vadd.f32 %v4121, %v4223
        %v4225 = vpop.f32.mrf.mxu0
        %v4226 = vadd.f32 %v4123, %v4225
        %4227 = vdwg.mxu0
        %s4228 = scalar_lea.vmem %s5, 24
        %v4229 = vld [vmem:[%s4228] sm:$0xf]
        %v4230 = vld [vmem:[%s4228 + $0x4] sm:$0xf]
        %v4231 = vld [vmem:[%s4228 + $0x8] sm:$0x3]
        %v4235 = vunpack.c.l.b16 %v4229
        %v4236 = vunpack.c.l.b16 %v4230
        %v4237 = vunpack.c.l.b16 %v4231
        %v4238 = vpack.c.b16 %v4236, %v4235
        %v4239 = vpack.c.b16 %v4237, %v4237
        %v4241 = vsel %vm4000, %v3979, 0
        %v4244 = vsel %vm651, %v4239, 0
        %4246 = vmatpush.bf16.msra.mxu0 0
        %4247 = vmatpush.bf16.msra.mxu0 0
        %4248 = vmatpush.bf16.msra.mxu0 0
        %4249 = vmatpush.bf16.msra.mxu0 0
        %4250 = vmatpush.bf16.msra.mxu0 0
        %4251 = vmatpush.bf16.msra.mxu0 0
        %4252 = vmatpush.bf16.msra.mxu0 %v4244
        %4253 = vmatpush.bf16.msra.mxu0 %v4238
        %4254 = vmatmul.bf16.gmra.mxu0 %v4003
        %v4255 = vpop.f32.mrf.mxu0
        %v4256 = vadd.f32 0.0, %v4255
        %v4257 = vpop.f32.mrf.mxu0
        %v4258 = vadd.f32 0.0, %v4257
        %4259 = vmatmul.bf16.gmra.mxu0 %v4005
        %v4260 = vpop.f32.mrf.mxu0
        %v4261 = vadd.f32 0.0, %v4260
        %v4262 = vpop.f32.mrf.mxu0
        %v4263 = vadd.f32 0.0, %v4262
        %4264 = vmatmul.bf16.gmra.mxu0 %v4007
        %v4265 = vpop.f32.mrf.mxu0
        %v4266 = vadd.f32 0.0, %v4265
        %v4267 = vpop.f32.mrf.mxu0
        %v4268 = vadd.f32 0.0, %v4267
        %4269 = vmatmul.bf16.gmra.mxu0 %v4009
        %v4270 = vpop.f32.mrf.mxu0
        %v4271 = vadd.f32 0.0, %v4270
        %v4272 = vpop.f32.mrf.mxu0
        %v4273 = vadd.f32 0.0, %v4272
        %4274 = vmatmul.bf16.gmra.mxu0 %v4011
        %v4275 = vpop.f32.mrf.mxu0
        %v4276 = vadd.f32 0.0, %v4275
        %v4277 = vpop.f32.mrf.mxu0
        %v4278 = vadd.f32 0.0, %v4277
        %4279 = vmatmul.bf16.gmra.mxu0 %v4013
        %v4280 = vpop.f32.mrf.mxu0
        %v4281 = vadd.f32 0.0, %v4280
        %v4282 = vpop.f32.mrf.mxu0
        %v4283 = vadd.f32 0.0, %v4282
        %4284 = vmatmul.bf16.gmra.mxu0 %v4015
        %v4285 = vpop.f32.mrf.mxu0
        %v4286 = vadd.f32 0.0, %v4285
        %v4287 = vpop.f32.mrf.mxu0
        %v4288 = vadd.f32 0.0, %v4287
        %4289 = vmatmul.bf16.gmra.mxu0 %v4017
        %v4290 = vpop.f32.mrf.mxu0
        %v4291 = vadd.f32 0.0, %v4290
        %v4292 = vpop.f32.mrf.mxu0
        %v4293 = vadd.f32 0.0, %v4292
        %4294 = vmatmul.bf16.gmra.mxu0 %v4019
        %v4295 = vpop.f32.mrf.mxu0
        %v4296 = vadd.f32 0.0, %v4295
        %v4297 = vpop.f32.mrf.mxu0
        %v4298 = vadd.f32 0.0, %v4297
        %4299 = vmatmul.bf16.gmra.mxu0 %v4021
        %v4300 = vpop.f32.mrf.mxu0
        %v4301 = vadd.f32 0.0, %v4300
        %v4302 = vpop.f32.mrf.mxu0
        %v4303 = vadd.f32 0.0, %v4302
        %4304 = vmatmul.bf16.gmra.mxu0 %v4023
        %v4305 = vpop.f32.mrf.mxu0
        %v4306 = vadd.f32 0.0, %v4305
        %v4307 = vpop.f32.mrf.mxu0
        %v4308 = vadd.f32 0.0, %v4307
        %4309 = vmatmul.bf16.gmra.mxu0 %v4025
        %v4310 = vpop.f32.mrf.mxu0
        %v4311 = vadd.f32 0.0, %v4310
        %v4312 = vpop.f32.mrf.mxu0
        %v4313 = vadd.f32 0.0, %v4312
        %4314 = vmatmul.bf16.gmra.mxu0 %v4027
        %v4315 = vpop.f32.mrf.mxu0
        %v4316 = vadd.f32 0.0, %v4315
        %v4317 = vpop.f32.mrf.mxu0
        %v4318 = vadd.f32 0.0, %v4317
        %4319 = vmatmul.bf16.gmra.mxu0 %v4029
        %v4320 = vpop.f32.mrf.mxu0
        %v4321 = vadd.f32 0.0, %v4320
        %v4322 = vpop.f32.mrf.mxu0
        %v4323 = vadd.f32 0.0, %v4322
        %4324 = vmatmul.bf16.gmra.mxu0 %v4031
        %v4325 = vpop.f32.mrf.mxu0
        %v4326 = vadd.f32 0.0, %v4325
        %v4327 = vpop.f32.mrf.mxu0
        %v4328 = vadd.f32 0.0, %v4327
        %4329 = vmatmul.bf16.gmra.mxu0 %v4241
        %v4330 = vpop.f32.mrf.mxu0
        %v4331 = vadd.f32 0.0, %v4330
        %v4332 = vpop.f32.mrf.mxu0
        %v4333 = vadd.f32 0.0, %v4332
        %4334 = vdwg.mxu0
        %v4335 = vadd.f32 %v4149, %v4256
        %v4336 = vadd.f32 %v4151, %v4258
        %v4337 = vadd.f32 %v4154, %v4261
        %v4338 = vadd.f32 %v4156, %v4263
        %v4339 = vadd.f32 %v4159, %v4266
        %v4340 = vadd.f32 %v4161, %v4268
        %v4341 = vadd.f32 %v4164, %v4271
        %v4342 = vadd.f32 %v4166, %v4273
        %v4343 = vadd.f32 %v4169, %v4276
        %v4344 = vadd.f32 %v4171, %v4278
        %v4345 = vadd.f32 %v4174, %v4281
        %v4346 = vadd.f32 %v4176, %v4283
        %v4347 = vadd.f32 %v4179, %v4286
        %v4348 = vadd.f32 %v4181, %v4288
        %v4349 = vadd.f32 %v4184, %v4291
        %v4350 = vadd.f32 %v4186, %v4293
        %v4351 = vadd.f32 %v4189, %v4296
        %v4352 = vadd.f32 %v4191, %v4298
        %v4353 = vadd.f32 %v4194, %v4301
        %v4354 = vadd.f32 %v4196, %v4303
        %v4355 = vadd.f32 %v4199, %v4306
        %v4356 = vadd.f32 %v4201, %v4308
        %v4357 = vadd.f32 %v4204, %v4311
        %v4358 = vadd.f32 %v4206, %v4313
        %v4359 = vadd.f32 %v4209, %v4316
        %v4360 = vadd.f32 %v4211, %v4318
        %v4361 = vadd.f32 %v4214, %v4321
        %v4362 = vadd.f32 %v4216, %v4323
        %v4363 = vadd.f32 %v4219, %v4326
        %v4364 = vadd.f32 %v4221, %v4328
        %v4365 = vadd.f32 %v4224, %v4331
        %v4366 = vadd.f32 %v4226, %v4333
        %s4367 = scalar_lea.vmem %s5, 36
        %v4368 = vld [vmem:[%s4367] sm:$0xf]
        %v4369 = vld [vmem:[%s4367 + $0x4] sm:$0xf]
        %v4370 = vld [vmem:[%s4367 + $0x8] sm:$0x3]
        %v4374 = vunpack.c.l.b16 %v4368
        %v4375 = vunpack.c.l.b16 %v4369
        %v4376 = vunpack.c.l.b16 %v4370
        %v4377 = vpack.c.b16 %v4375, %v4374
        %v4378 = vpack.c.b16 %v4376, %v4376
        %v4380 = vsel %vm4000, %v3981, 0
        %v4383 = vsel %vm651, %v4378, 0
        %4385 = vmatpush.bf16.msra.mxu0 0
        %4386 = vmatpush.bf16.msra.mxu0 0
        %4387 = vmatpush.bf16.msra.mxu0 0
        %4388 = vmatpush.bf16.msra.mxu0 0
        %4389 = vmatpush.bf16.msra.mxu0 0
        %4390 = vmatpush.bf16.msra.mxu0 0
        %4391 = vmatpush.bf16.msra.mxu0 %v4383
        %4392 = vmatpush.bf16.msra.mxu0 %v4377
        %4393 = vmatmul.bf16.gmra.mxu0 %v4005
        %v4394 = vpop.f32.mrf.mxu0
        %v4395 = vadd.f32 0.0, %v4394
        %v4396 = vpop.f32.mrf.mxu0
        %v4397 = vadd.f32 0.0, %v4396
        %4398 = vmatmul.bf16.gmra.mxu0 %v4007
        %v4399 = vpop.f32.mrf.mxu0
        %v4400 = vadd.f32 0.0, %v4399
        %v4401 = vpop.f32.mrf.mxu0
        %v4402 = vadd.f32 0.0, %v4401
        %4403 = vmatmul.bf16.gmra.mxu0 %v4009
        %v4404 = vpop.f32.mrf.mxu0
        %v4405 = vadd.f32 0.0, %v4404
        %v4406 = vpop.f32.mrf.mxu0
        %v4407 = vadd.f32 0.0, %v4406
        %4408 = vmatmul.bf16.gmra.mxu0 %v4011
        %v4409 = vpop.f32.mrf.mxu0
        %v4410 = vadd.f32 0.0, %v4409
        %v4411 = vpop.f32.mrf.mxu0
        %v4412 = vadd.f32 0.0, %v4411
        %4413 = vmatmul.bf16.gmra.mxu0 %v4013
        %v4414 = vpop.f32.mrf.mxu0
        %v4415 = vadd.f32 0.0, %v4414
        %v4416 = vpop.f32.mrf.mxu0
        %v4417 = vadd.f32 0.0, %v4416
        %4418 = vmatmul.bf16.gmra.mxu0 %v4015
        %v4419 = vpop.f32.mrf.mxu0
        %v4420 = vadd.f32 0.0, %v4419
        %v4421 = vpop.f32.mrf.mxu0
        %v4422 = vadd.f32 0.0, %v4421
        %4423 = vmatmul.bf16.gmra.mxu0 %v4017
        %v4424 = vpop.f32.mrf.mxu0
        %v4425 = vadd.f32 0.0, %v4424
        %v4426 = vpop.f32.mrf.mxu0
        %v4427 = vadd.f32 0.0, %v4426
        %4428 = vmatmul.bf16.gmra.mxu0 %v4019
        %v4429 = vpop.f32.mrf.mxu0
        %v4430 = vadd.f32 0.0, %v4429
        %v4431 = vpop.f32.mrf.mxu0
        %v4432 = vadd.f32 0.0, %v4431
        %4433 = vmatmul.bf16.gmra.mxu0 %v4021
        %v4434 = vpop.f32.mrf.mxu0
        %v4435 = vadd.f32 0.0, %v4434
        %v4436 = vpop.f32.mrf.mxu0
        %v4437 = vadd.f32 0.0, %v4436
        %4438 = vmatmul.bf16.gmra.mxu0 %v4023
        %v4439 = vpop.f32.mrf.mxu0
        %v4440 = vadd.f32 0.0, %v4439
        %v4441 = vpop.f32.mrf.mxu0
        %v4442 = vadd.f32 0.0, %v4441
        %4443 = vmatmul.bf16.gmra.mxu0 %v4025
        %v4444 = vpop.f32.mrf.mxu0
        %v4445 = vadd.f32 0.0, %v4444
        %v4446 = vpop.f32.mrf.mxu0
        %v4447 = vadd.f32 0.0, %v4446
        %4448 = vmatmul.bf16.gmra.mxu0 %v4027
        %v4449 = vpop.f32.mrf.mxu0
        %v4450 = vadd.f32 0.0, %v4449
        %v4451 = vpop.f32.mrf.mxu0
        %v4452 = vadd.f32 0.0, %v4451
        %4453 = vmatmul.bf16.gmra.mxu0 %v4029
        %v4454 = vpop.f32.mrf.mxu0
        %v4455 = vadd.f32 0.0, %v4454
        %v4456 = vpop.f32.mrf.mxu0
        %v4457 = vadd.f32 0.0, %v4456
        %4458 = vmatmul.bf16.gmra.mxu0 %v4031
        %v4459 = vpop.f32.mrf.mxu0
        %v4460 = vadd.f32 0.0, %v4459
        %v4461 = vpop.f32.mrf.mxu0
        %v4462 = vadd.f32 0.0, %v4461
        %4463 = vmatmul.bf16.gmra.mxu0 %v4241
        %v4464 = vpop.f32.mrf.mxu0
        %v4465 = vadd.f32 0.0, %v4464
        %v4466 = vpop.f32.mrf.mxu0
        %v4467 = vadd.f32 0.0, %v4466
        %4468 = vmatmul.bf16.gmra.mxu0 %v4380
        %v4469 = vpop.f32.mrf.mxu0
        %v4470 = vadd.f32 0.0, %v4469
        %v4471 = vpop.f32.mrf.mxu0
        %v4472 = vadd.f32 0.0, %v4471
        %4473 = vdwg.mxu0
        %v4474 = vadd.f32 %v4335, %v4395
        %v4475 = vadd.f32 %v4336, %v4397
        %v4476 = vadd.f32 %v4337, %v4400
        %v4477 = vadd.f32 %v4338, %v4402
        %v4478 = vadd.f32 %v4339, %v4405
        %v4479 = vadd.f32 %v4340, %v4407
        %v4480 = vadd.f32 %v4341, %v4410
        %v4481 = vadd.f32 %v4342, %v4412
        %v4482 = vadd.f32 %v4343, %v4415
        %v4483 = vadd.f32 %v4344, %v4417
        %v4484 = vadd.f32 %v4345, %v4420
        %v4485 = vadd.f32 %v4346, %v4422
        %v4486 = vadd.f32 %v4347, %v4425
        %v4487 = vadd.f32 %v4348, %v4427
        %v4488 = vadd.f32 %v4349, %v4430
        %v4489 = vadd.f32 %v4350, %v4432
        %v4490 = vadd.f32 %v4351, %v4435
        %v4491 = vadd.f32 %v4352, %v4437
        %v4492 = vadd.f32 %v4353, %v4440
        %v4493 = vadd.f32 %v4354, %v4442
        %v4494 = vadd.f32 %v4355, %v4445
        %v4495 = vadd.f32 %v4356, %v4447
        %v4496 = vadd.f32 %v4357, %v4450
        %v4497 = vadd.f32 %v4358, %v4452
        %v4498 = vadd.f32 %v4359, %v4455
        %v4499 = vadd.f32 %v4360, %v4457
        %v4500 = vadd.f32 %v4361, %v4460
        %v4501 = vadd.f32 %v4362, %v4462
        %v4502 = vadd.f32 %v4363, %v4465
        %v4503 = vadd.f32 %v4364, %v4467
        %v4504 = vadd.f32 %v4365, %v4470
        %v4505 = vadd.f32 %v4366, %v4472
        %s4506 = scalar_lea.vmem %s5, 48
        %v4507 = vld [vmem:[%s4506] sm:$0xf]
        %v4508 = vld [vmem:[%s4506 + $0x4] sm:$0xf]
        %v4509 = vld [vmem:[%s4506 + $0x8] sm:$0x3]
        %v4513 = vunpack.c.l.b16 %v4507
        %v4514 = vunpack.c.l.b16 %v4508
        %v4515 = vunpack.c.l.b16 %v4509
        %v4516 = vpack.c.b16 %v4514, %v4513
        %v4517 = vpack.c.b16 %v4515, %v4515
        %v4519 = vsel %vm4000, %v3983, 0
        %v4522 = vsel %vm651, %v4517, 0
        %4524 = vmatpush.bf16.msra.mxu0 0
        %4525 = vmatpush.bf16.msra.mxu0 0
        %4526 = vmatpush.bf16.msra.mxu0 0
        %4527 = vmatpush.bf16.msra.mxu0 0
        %4528 = vmatpush.bf16.msra.mxu0 0
        %4529 = vmatpush.bf16.msra.mxu0 0
        %4530 = vmatpush.bf16.msra.mxu0 %v4522
        %4531 = vmatpush.bf16.msra.mxu0 %v4516
        %4532 = vmatmul.bf16.gmra.mxu0 %v4007
        %v4533 = vpop.f32.mrf.mxu0
        %v4534 = vadd.f32 0.0, %v4533
        %v4535 = vpop.f32.mrf.mxu0
        %v4536 = vadd.f32 0.0, %v4535
        %4537 = vmatmul.bf16.gmra.mxu0 %v4009
        %v4538 = vpop.f32.mrf.mxu0
        %v4539 = vadd.f32 0.0, %v4538
        %v4540 = vpop.f32.mrf.mxu0
        %v4541 = vadd.f32 0.0, %v4540
        %4542 = vmatmul.bf16.gmra.mxu0 %v4011
        %v4543 = vpop.f32.mrf.mxu0
        %v4544 = vadd.f32 0.0, %v4543
        %v4545 = vpop.f32.mrf.mxu0
        %v4546 = vadd.f32 0.0, %v4545
        %4547 = vmatmul.bf16.gmra.mxu0 %v4013
        %v4548 = vpop.f32.mrf.mxu0
        %v4549 = vadd.f32 0.0, %v4548
        %v4550 = vpop.f32.mrf.mxu0
        %v4551 = vadd.f32 0.0, %v4550
        %4552 = vmatmul.bf16.gmra.mxu0 %v4015
        %v4553 = vpop.f32.mrf.mxu0
        %v4554 = vadd.f32 0.0, %v4553
        %v4555 = vpop.f32.mrf.mxu0
        %v4556 = vadd.f32 0.0, %v4555
        %4557 = vmatmul.bf16.gmra.mxu0 %v4017
        %v4558 = vpop.f32.mrf.mxu0
        %v4559 = vadd.f32 0.0, %v4558
        %v4560 = vpop.f32.mrf.mxu0
        %v4561 = vadd.f32 0.0, %v4560
        %4562 = vmatmul.bf16.gmra.mxu0 %v4019
        %v4563 = vpop.f32.mrf.mxu0
        %v4564 = vadd.f32 0.0, %v4563
        %v4565 = vpop.f32.mrf.mxu0
        %v4566 = vadd.f32 0.0, %v4565
        %4567 = vmatmul.bf16.gmra.mxu0 %v4021
        %v4568 = vpop.f32.mrf.mxu0
        %v4569 = vadd.f32 0.0, %v4568
        %v4570 = vpop.f32.mrf.mxu0
        %v4571 = vadd.f32 0.0, %v4570
        %4572 = vmatmul.bf16.gmra.mxu0 %v4023
        %v4573 = vpop.f32.mrf.mxu0
        %v4574 = vadd.f32 0.0, %v4573
        %v4575 = vpop.f32.mrf.mxu0
        %v4576 = vadd.f32 0.0, %v4575
        %4577 = vmatmul.bf16.gmra.mxu0 %v4025
        %v4578 = vpop.f32.mrf.mxu0
        %v4579 = vadd.f32 0.0, %v4578
        %v4580 = vpop.f32.mrf.mxu0
        %v4581 = vadd.f32 0.0, %v4580
        %4582 = vmatmul.bf16.gmra.mxu0 %v4027
        %v4583 = vpop.f32.mrf.mxu0
        %v4584 = vadd.f32 0.0, %v4583
        %v4585 = vpop.f32.mrf.mxu0
        %v4586 = vadd.f32 0.0, %v4585
        %4587 = vmatmul.bf16.gmra.mxu0 %v4029
        %v4588 = vpop.f32.mrf.mxu0
        %v4589 = vadd.f32 0.0, %v4588
        %v4590 = vpop.f32.mrf.mxu0
        %v4591 = vadd.f32 0.0, %v4590
        %4592 = vmatmul.bf16.gmra.mxu0 %v4031
        %v4593 = vpop.f32.mrf.mxu0
        %v4594 = vadd.f32 0.0, %v4593
        %v4595 = vpop.f32.mrf.mxu0
        %v4596 = vadd.f32 0.0, %v4595
        %4597 = vmatmul.bf16.gmra.mxu0 %v4241
        %v4598 = vpop.f32.mrf.mxu0
        %v4599 = vadd.f32 0.0, %v4598
        %v4600 = vpop.f32.mrf.mxu0
        %v4601 = vadd.f32 0.0, %v4600
        %4602 = vmatmul.bf16.gmra.mxu0 %v4380
        %v4603 = vpop.f32.mrf.mxu0
        %v4604 = vadd.f32 0.0, %v4603
        %v4605 = vpop.f32.mrf.mxu0
        %v4606 = vadd.f32 0.0, %v4605
        %4607 = vmatmul.bf16.gmra.mxu0 %v4519
        %v4608 = vpop.f32.mrf.mxu0
        %v4609 = vadd.f32 0.0, %v4608
        %v4610 = vpop.f32.mrf.mxu0
        %v4611 = vadd.f32 0.0, %v4610
        %4612 = vdwg.mxu0
        %v4613 = vadd.f32 %v4474, %v4534
        %v4614 = vadd.f32 %v4475, %v4536
        %v4615 = vadd.f32 %v4476, %v4539
        %v4616 = vadd.f32 %v4477, %v4541
        %v4617 = vadd.f32 %v4478, %v4544
        %v4618 = vadd.f32 %v4479, %v4546
        %v4619 = vadd.f32 %v4480, %v4549
        %v4620 = vadd.f32 %v4481, %v4551
        %v4621 = vadd.f32 %v4482, %v4554
        %v4622 = vadd.f32 %v4483, %v4556
        %v4623 = vadd.f32 %v4484, %v4559
        %v4624 = vadd.f32 %v4485, %v4561
        %v4625 = vadd.f32 %v4486, %v4564
        %v4626 = vadd.f32 %v4487, %v4566
        %v4627 = vadd.f32 %v4488, %v4569
        %v4628 = vadd.f32 %v4489, %v4571
        %v4629 = vadd.f32 %v4490, %v4574
        %v4630 = vadd.f32 %v4491, %v4576
        %v4631 = vadd.f32 %v4492, %v4579
        %v4632 = vadd.f32 %v4493, %v4581
        %v4633 = vadd.f32 %v4494, %v4584
        %v4634 = vadd.f32 %v4495, %v4586
        %v4635 = vadd.f32 %v4496, %v4589
        %v4636 = vadd.f32 %v4497, %v4591
        %v4637 = vadd.f32 %v4498, %v4594
        %v4638 = vadd.f32 %v4499, %v4596
        %v4639 = vadd.f32 %v4500, %v4599
        %v4640 = vadd.f32 %v4501, %v4601
        %v4641 = vadd.f32 %v4502, %v4604
        %v4642 = vadd.f32 %v4503, %v4606
        %v4643 = vadd.f32 %v4504, %v4609
        %v4644 = vadd.f32 %v4505, %v4611
        %v4645 = vld [vmem:[%s6] sm:$0x1]
        %v4647 = vperm.slane %v4645, 0
        %v4649 = vadd.f32 %v4613, %v4647
        %v4650 = vadd.f32 %v4614, %v4647
        %v4651 = vadd.f32 %v4615, %v4647
        %v4652 = vadd.f32 %v4616, %v4647
        %v4653 = vadd.f32 %v4617, %v4647
        %v4654 = vadd.f32 %v4618, %v4647
        %v4655 = vadd.f32 %v4619, %v4647
        %v4656 = vadd.f32 %v4620, %v4647
        %v4657 = vadd.f32 %v4621, %v4647
        %v4658 = vadd.f32 %v4622, %v4647
        %v4659 = vadd.f32 %v4623, %v4647
        %v4660 = vadd.f32 %v4624, %v4647
        %v4661 = vadd.f32 %v4625, %v4647
        %v4662 = vadd.f32 %v4626, %v4647
        %v4663 = vadd.f32 %v4627, %v4647
        %v4664 = vadd.f32 %v4628, %v4647
        %v4665 = vadd.f32 %v4629, %v4647
        %v4666 = vadd.f32 %v4630, %v4647
        %v4667 = vadd.f32 %v4631, %v4647
        %v4668 = vadd.f32 %v4632, %v4647
        %v4669 = vadd.f32 %v4633, %v4647
        %v4670 = vadd.f32 %v4634, %v4647
        %v4671 = vadd.f32 %v4635, %v4647
        %v4672 = vadd.f32 %v4636, %v4647
        %v4673 = vadd.f32 %v4637, %v4647
        %v4674 = vadd.f32 %v4638, %v4647
        %v4675 = vadd.f32 %v4639, %v4647
        %v4676 = vadd.f32 %v4640, %v4647
        %v4677 = vadd.f32 %v4641, %v4647
        %v4678 = vadd.f32 %v4642, %v4647
        %v4679 = vadd.f32 %v4643, %v4647
        %v4680 = vadd.f32 %v4644, %v4647
        %v4681 = vmax.f32 %v4649, 0.0
        %v4682 = vmax.f32 %v4650, 0.0
        %v4683 = vmax.f32 %v4651, 0.0
        %v4684 = vmax.f32 %v4652, 0.0
        %v4685 = vmax.f32 %v4653, 0.0
        %v4686 = vmax.f32 %v4654, 0.0
        %v4687 = vmax.f32 %v4655, 0.0
        %v4688 = vmax.f32 %v4656, 0.0
        %v4689 = vmax.f32 %v4657, 0.0
        %v4690 = vmax.f32 %v4658, 0.0
        %v4691 = vmax.f32 %v4659, 0.0
        %v4692 = vmax.f32 %v4660, 0.0
        %v4693 = vmax.f32 %v4661, 0.0
        %v4694 = vmax.f32 %v4662, 0.0
        %v4695 = vmax.f32 %v4663, 0.0
        %v4696 = vmax.f32 %v4664, 0.0
        %v4697 = vmax.f32 %v4665, 0.0
        %v4698 = vmax.f32 %v4666, 0.0
        %v4699 = vmax.f32 %v4667, 0.0
        %v4700 = vmax.f32 %v4668, 0.0
        %v4701 = vmax.f32 %v4669, 0.0
        %v4702 = vmax.f32 %v4670, 0.0
        %v4703 = vmax.f32 %v4671, 0.0
        %v4704 = vmax.f32 %v4672, 0.0
        %v4705 = vmax.f32 %v4673, 0.0
        %v4706 = vmax.f32 %v4674, 0.0
        %v4707 = vmax.f32 %v4675, 0.0
        %v4708 = vmax.f32 %v4676, 0.0
        %v4709 = vmax.f32 %v4677, 0.0
        %v4710 = vmax.f32 %v4678, 0.0
        %v4711 = vmax.f32 %v4679, 0.0
        %v4712 = vmax.f32 %v4680, 0.0
        %4745 = vrot.lane.b32.xlu0 %v4681, 16
        %v4746 = vpop.permute.xlu0 %4745
        %4747 = vrot.lane.b32.xlu0 %v4682, 16
        %v4748 = vpop.permute.xlu0 %4747
        %4749 = vrot.lane.b32.xlu0 %v4683, 16
        %v4750 = vpop.permute.xlu0 %4749
        %4751 = vrot.lane.b32.xlu0 %v4684, 16
        %v4752 = vpop.permute.xlu0 %4751
        %4753 = vrot.lane.b32.xlu0 %v4685, 16
        %v4754 = vpop.permute.xlu0 %4753
        %4755 = vrot.lane.b32.xlu0 %v4686, 16
        %v4756 = vpop.permute.xlu0 %4755
        %4757 = vrot.lane.b32.xlu0 %v4687, 16
        %v4758 = vpop.permute.xlu0 %4757
        %4759 = vrot.lane.b32.xlu0 %v4688, 16
        %v4760 = vpop.permute.xlu0 %4759
        %4761 = vrot.lane.b32.xlu0 %v4689, 16
        %v4762 = vpop.permute.xlu0 %4761
        %4763 = vrot.lane.b32.xlu0 %v4690, 16
        %v4764 = vpop.permute.xlu0 %4763
        %4765 = vrot.lane.b32.xlu0 %v4691, 16
        %v4766 = vpop.permute.xlu0 %4765
        %4767 = vrot.lane.b32.xlu0 %v4692, 16
        %v4768 = vpop.permute.xlu0 %4767
        %4769 = vrot.lane.b32.xlu0 %v4693, 16
        %v4770 = vpop.permute.xlu0 %4769
        %4771 = vrot.lane.b32.xlu0 %v4694, 16
        %v4772 = vpop.permute.xlu0 %4771
        %4773 = vrot.lane.b32.xlu0 %v4695, 16
        %v4774 = vpop.permute.xlu0 %4773
        %4775 = vrot.lane.b32.xlu0 %v4696, 16
        %v4776 = vpop.permute.xlu0 %4775
        %4777 = vrot.lane.b32.xlu0 %v4697, 16
        %v4778 = vpop.permute.xlu0 %4777
        %4779 = vrot.lane.b32.xlu0 %v4698, 16
        %v4780 = vpop.permute.xlu0 %4779
        %4781 = vrot.lane.b32.xlu0 %v4699, 16
        %v4782 = vpop.permute.xlu0 %4781
        %4783 = vrot.lane.b32.xlu0 %v4700, 16
        %v4784 = vpop.permute.xlu0 %4783
        %4785 = vrot.lane.b32.xlu0 %v4701, 16
        %v4786 = vpop.permute.xlu0 %4785
        %4787 = vrot.lane.b32.xlu0 %v4702, 16
        %v4788 = vpop.permute.xlu0 %4787
        %4789 = vrot.lane.b32.xlu0 %v4703, 16
        %v4790 = vpop.permute.xlu0 %4789
        %4791 = vrot.lane.b32.xlu0 %v4704, 16
        %v4792 = vpop.permute.xlu0 %4791
        %4793 = vrot.lane.b32.xlu0 %v4705, 16
        %v4794 = vpop.permute.xlu0 %4793
        %4795 = vrot.lane.b32.xlu0 %v4706, 16
        %v4796 = vpop.permute.xlu0 %4795
        %4797 = vrot.lane.b32.xlu0 %v4707, 16
        %v4798 = vpop.permute.xlu0 %4797
        %4799 = vrot.lane.b32.xlu0 %v4708, 16
        %v4800 = vpop.permute.xlu0 %4799
        %4801 = vrot.lane.b32.xlu0 %v4709, 16
        %v4802 = vpop.permute.xlu0 %4801
        %4803 = vrot.lane.b32.xlu0 %v4710, 16
        %v4804 = vpop.permute.xlu0 %4803
        %4805 = vrot.lane.b32.xlu0 %v4711, 16
        %v4806 = vpop.permute.xlu0 %4805
        %4807 = vrot.lane.b32.xlu0 %v4712, 16
        %v4808 = vpop.permute.xlu0 %4807
        %vm4841 = vcmask 195712
        %4842 = vst.msk [vmem:[%s325] sm:$0xff] %vm4841, %v4746
        %4843 = vst.msk [vmem:[%s325 + $0x8] sm:$0xff] %vm4841, %v4748
        %4844 = vst.msk [vmem:[%s325 + $0x10] sm:$0xff] %vm4841, %v4750
        %4845 = vst.msk [vmem:[%s325 + $0x18] sm:$0xff] %vm4841, %v4752
        %4846 = vst.msk [vmem:[%s325 + $0x20] sm:$0xff] %vm4841, %v4754
        %4847 = vst.msk [vmem:[%s325 + $0x28] sm:$0xff] %vm4841, %v4756
        %4848 = vst.msk [vmem:[%s325 + $0x30] sm:$0xff] %vm4841, %v4758
        %4849 = vst.msk [vmem:[%s325 + $0x38] sm:$0xff] %vm4841, %v4760
        %4850 = vst.msk [vmem:[%s325 + $0x40] sm:$0xff] %vm4841, %v4762
        %4851 = vst.msk [vmem:[%s325 + $0x48] sm:$0xff] %vm4841, %v4764
        %4852 = vst.msk [vmem:[%s325 + $0x50] sm:$0xff] %vm4841, %v4766
        %4853 = vst.msk [vmem:[%s325 + $0x58] sm:$0xff] %vm4841, %v4768
        %4854 = vst.msk [vmem:[%s325 + $0x60] sm:$0xff] %vm4841, %v4770
        %4855 = vst.msk [vmem:[%s325 + $0x68] sm:$0xff] %vm4841, %v4772
        %4856 = vst.msk [vmem:[%s325 + $0x70] sm:$0xff] %vm4841, %v4774
        %4857 = vst.msk [vmem:[%s325 + $0x78] sm:$0xff] %vm4841, %v4776
        %4858 = vst.msk [vmem:[%s325 + $0x80] sm:$0xff] %vm4841, %v4778
        %4859 = vst.msk [vmem:[%s325 + $0x88] sm:$0xff] %vm4841, %v4780
        %4860 = vst.msk [vmem:[%s325 + $0x90] sm:$0xff] %vm4841, %v4782
        %4861 = vst.msk [vmem:[%s325 + $0x98] sm:$0xff] %vm4841, %v4784
        %4862 = vst.msk [vmem:[%s325 + $0xa0] sm:$0xff] %vm4841, %v4786
        %4863 = vst.msk [vmem:[%s325 + $0xa8] sm:$0xff] %vm4841, %v4788
        %4864 = vst.msk [vmem:[%s325 + $0xb0] sm:$0xff] %vm4841, %v4790
        %4865 = vst.msk [vmem:[%s325 + $0xb8] sm:$0xff] %vm4841, %v4792
        %4866 = vst.msk [vmem:[%s325 + $0xc0] sm:$0xff] %vm4841, %v4794
        %4867 = vst.msk [vmem:[%s325 + $0xc8] sm:$0xff] %vm4841, %v4796
        %4868 = vst.msk [vmem:[%s325 + $0xd0] sm:$0xff] %vm4841, %v4798
        %4869 = vst.msk [vmem:[%s325 + $0xd8] sm:$0xff] %vm4841, %v4800
        %4870 = vst.msk [vmem:[%s325 + $0xe0] sm:$0xff] %vm4841, %v4802
        %4871 = vst.msk [vmem:[%s325 + $0xe8] sm:$0xff] %vm4841, %v4804
        %4872 = vst.msk [vmem:[%s325 + $0xf0] sm:$0xff] %vm4841, %v4806
        %4873 = vst.msk [vmem:[%s325 + $0xf8] sm:$0xff] %vm4841, %v4808
        %v4874 = vunpack.c.l.bf16 %v485
        %v4875 = vunpack.c.l.bf16 %v486
        %v4876 = vunpack.c.l.bf16 %v487
        %v4877 = vunpack.c.l.bf16 %v488
        %v4878 = vunpack.c.l.bf16 %v489
        %v4879 = vunpack.c.l.bf16 %v490
        %v4880 = vunpack.c.l.bf16 %v491
        %v4881 = vunpack.c.l.bf16 %v492
        %v4882 = vunpack.c.l.bf16 %v493
        %v4883 = vunpack.c.l.bf16 %v494
        %v4884 = vunpack.c.l.bf16 %v495
        %v4885 = vunpack.c.l.bf16 %v496
        %v4886 = vunpack.c.l.bf16 %v497
        %v4887 = vunpack.c.l.bf16 %v498
        %v4888 = vunpack.c.l.bf16 %v499
        %v4889 = vunpack.c.l.bf16 %v500
        %v4890 = vunpack.c.l.bf16 %v501
        %v4891 = vunpack.c.l.bf16 %v502
        %v4892 = vunpack.c.l.bf16 %v503
        %v4893 = vunpack.c.l.bf16 %v504
        %v4894 = vunpack.c.l.bf16 %v505
        %v4895 = vunpack.c.l.bf16 %v506
        %v4896 = vunpack.c.l.bf16 %v507
        %v4897 = vunpack.c.l.bf16 %v508
        %v4898 = vunpack.c.l.bf16 %v509
        %v4899 = vunpack.c.l.bf16 %v510
        %v4900 = vunpack.c.l.bf16 %v511
        %v4901 = vunpack.c.l.bf16 %v512
        %v4902 = vunpack.c.l.bf16 %v513
        %v4903 = vunpack.c.l.bf16 %v514
        %v4904 = vunpack.c.l.bf16 %v515
        %v4905 = vunpack.c.l.bf16 %v516
        %v4906 = vmax.f32 %v4874, %v4876
        %v4907 = vmax.f32 %v4875, %v4877
        %v4908 = vmax.f32 %v4876, %v4878
        %v4909 = vmax.f32 %v4877, %v4879
        %v4910 = vmax.f32 %v4878, %v4880
        %v4911 = vmax.f32 %v4879, %v4881
        %v4912 = vmax.f32 %v4880, %v4882
        %v4913 = vmax.f32 %v4881, %v4883
        %v4914 = vmax.f32 %v4882, %v4884
        %v4915 = vmax.f32 %v4883, %v4885
        %v4916 = vmax.f32 %v4884, %v4886
        %v4917 = vmax.f32 %v4885, %v4887
        %v4918 = vmax.f32 %v4886, %v4888
        %v4919 = vmax.f32 %v4887, %v4889
        %v4920 = vmax.f32 %v4888, %v4890
        %v4921 = vmax.f32 %v4889, %v4891
        %v4922 = vmax.f32 %v4890, %v4892
        %v4923 = vmax.f32 %v4891, %v4893
        %v4924 = vmax.f32 %v4892, %v4894
        %v4925 = vmax.f32 %v4893, %v4895
        %v4926 = vmax.f32 %v4894, %v4896
        %v4927 = vmax.f32 %v4895, %v4897
        %v4928 = vmax.f32 %v4896, %v4898
        %v4929 = vmax.f32 %v4897, %v4899
        %v4930 = vmax.f32 %v4898, %v4900
        %v4931 = vmax.f32 %v4899, %v4901
        %v4932 = vmax.f32 %v4900, %v4902
        %v4933 = vmax.f32 %v4901, %v4903
        %v4934 = vmax.f32 %v4902, %v4904
        %v4935 = vmax.f32 %v4903, %v4905
        %v4936 = vpack.c.bf16 %v4874, %v4874
        %v4937 = vpack.c.bf16 %v4875, %v4875
        %v4938 = vpack.c.bf16 %v4906, %v4906
        %v4939 = vpack.c.bf16 %v4907, %v4907
        %v4940 = vpack.c.bf16 %v4908, %v4908
        %v4941 = vpack.c.bf16 %v4909, %v4909
        %v4942 = vpack.c.bf16 %v4910, %v4910
        %v4943 = vpack.c.bf16 %v4911, %v4911
        %v4944 = vpack.c.bf16 %v4912, %v4912
        %v4945 = vpack.c.bf16 %v4913, %v4913
        %v4946 = vpack.c.bf16 %v4914, %v4914
        %v4947 = vpack.c.bf16 %v4915, %v4915
        %v4948 = vpack.c.bf16 %v4916, %v4916
        %v4949 = vpack.c.bf16 %v4917, %v4917
        %v4950 = vpack.c.bf16 %v4918, %v4918
        %v4951 = vpack.c.bf16 %v4919, %v4919
        %v4952 = vpack.c.bf16 %v4920, %v4920
        %v4953 = vpack.c.bf16 %v4921, %v4921
        %v4954 = vpack.c.bf16 %v4922, %v4922
        %v4955 = vpack.c.bf16 %v4923, %v4923
        %v4956 = vpack.c.bf16 %v4924, %v4924
        %v4957 = vpack.c.bf16 %v4925, %v4925
        %v4958 = vpack.c.bf16 %v4926, %v4926
        %v4959 = vpack.c.bf16 %v4927, %v4927
        %v4960 = vpack.c.bf16 %v4928, %v4928
        %v4961 = vpack.c.bf16 %v4929, %v4929
        %v4962 = vpack.c.bf16 %v4930, %v4930
        %v4963 = vpack.c.bf16 %v4931, %v4931
        %v4964 = vpack.c.bf16 %v4932, %v4932
        %v4965 = vpack.c.bf16 %v4933, %v4933
        %v4966 = vpack.c.bf16 %v4934, %v4934
        %v4967 = vpack.c.bf16 %v4935, %v4935
        %v4968 = vunpack.c.l.bf16 %v4936
        %v4969 = vunpack.c.l.bf16 %v4937
        %v4970 = vunpack.c.l.bf16 %v4938
        %v4971 = vunpack.c.l.bf16 %v4939
        %v4972 = vunpack.c.l.bf16 %v4940
        %v4973 = vunpack.c.l.bf16 %v4941
        %v4974 = vunpack.c.l.bf16 %v4942
        %v4975 = vunpack.c.l.bf16 %v4943
        %v4976 = vunpack.c.l.bf16 %v4944
        %v4977 = vunpack.c.l.bf16 %v4945
        %v4978 = vunpack.c.l.bf16 %v4946
        %v4979 = vunpack.c.l.bf16 %v4947
        %v4980 = vunpack.c.l.bf16 %v4948
        %v4981 = vunpack.c.l.bf16 %v4949
        %v4982 = vunpack.c.l.bf16 %v4950
        %v4983 = vunpack.c.l.bf16 %v4951
        %v4984 = vunpack.c.l.bf16 %v4952
        %v4985 = vunpack.c.l.bf16 %v4953
        %v4986 = vunpack.c.l.bf16 %v4954
        %v4987 = vunpack.c.l.bf16 %v4955
        %v4988 = vunpack.c.l.bf16 %v4956
        %v4989 = vunpack.c.l.bf16 %v4957
        %v4990 = vunpack.c.l.bf16 %v4958
        %v4991 = vunpack.c.l.bf16 %v4959
        %v4992 = vunpack.c.l.bf16 %v4960
        %v4993 = vunpack.c.l.bf16 %v4961
        %v4994 = vunpack.c.l.bf16 %v4962
        %v4995 = vunpack.c.l.bf16 %v4963
        %v4996 = vunpack.c.l.bf16 %v4964
        %v4997 = vunpack.c.l.bf16 %v4965
        %v4998 = vunpack.c.l.bf16 %v4966
        %v4999 = vunpack.c.l.bf16 %v4967
        %v5000 = vmax.f32 %v4968, %v4876
        %v5001 = vmax.f32 %v4969, %v4877
        %v5002 = vmax.f32 %v4970, %v4878
        %v5003 = vmax.f32 %v4971, %v4879
        %v5004 = vmax.f32 %v4972, %v4880
        %v5005 = vmax.f32 %v4973, %v4881
        %v5006 = vmax.f32 %v4974, %v4882
        %v5007 = vmax.f32 %v4975, %v4883
        %v5008 = vmax.f32 %v4976, %v4884
        %v5009 = vmax.f32 %v4977, %v4885
        %v5010 = vmax.f32 %v4978, %v4886
        %v5011 = vmax.f32 %v4979, %v4887
        %v5012 = vmax.f32 %v4980, %v4888
        %v5013 = vmax.f32 %v4981, %v4889
        %v5014 = vmax.f32 %v4982, %v4890
        %v5015 = vmax.f32 %v4983, %v4891
        %v5016 = vmax.f32 %v4984, %v4892
        %v5017 = vmax.f32 %v4985, %v4893
        %v5018 = vmax.f32 %v4986, %v4894
        %v5019 = vmax.f32 %v4987, %v4895
        %v5020 = vmax.f32 %v4988, %v4896
        %v5021 = vmax.f32 %v4989, %v4897
        %v5022 = vmax.f32 %v4990, %v4898
        %v5023 = vmax.f32 %v4991, %v4899
        %v5024 = vmax.f32 %v4992, %v4900
        %v5025 = vmax.f32 %v4993, %v4901
        %v5026 = vmax.f32 %v4994, %v4902
        %v5027 = vmax.f32 %v4995, %v4903
        %v5028 = vmax.f32 %v4996, %v4904
        %v5029 = vmax.f32 %v4997, %v4905
        %v5030 = vmax.f32 %v4998, %v4904
        %v5031 = vmax.f32 %v4999, %v4905
        %v5032 = vpack.c.bf16 %v5000, %v5000
        %v5033 = vpack.c.bf16 %v5001, %v5001
        %v5034 = vpack.c.bf16 %v5002, %v5002
        %v5035 = vpack.c.bf16 %v5003, %v5003
        %v5036 = vpack.c.bf16 %v5004, %v5004
        %v5037 = vpack.c.bf16 %v5005, %v5005
        %v5038 = vpack.c.bf16 %v5006, %v5006
        %v5039 = vpack.c.bf16 %v5007, %v5007
        %v5040 = vpack.c.bf16 %v5008, %v5008
        %v5041 = vpack.c.bf16 %v5009, %v5009
        %v5042 = vpack.c.bf16 %v5010, %v5010
        %v5043 = vpack.c.bf16 %v5011, %v5011
        %v5044 = vpack.c.bf16 %v5012, %v5012
        %v5045 = vpack.c.bf16 %v5013, %v5013
        %v5046 = vpack.c.bf16 %v5014, %v5014
        %v5047 = vpack.c.bf16 %v5015, %v5015
        %v5048 = vpack.c.bf16 %v5016, %v5016
        %v5049 = vpack.c.bf16 %v5017, %v5017
        %v5050 = vpack.c.bf16 %v5018, %v5018
        %v5051 = vpack.c.bf16 %v5019, %v5019
        %v5052 = vpack.c.bf16 %v5020, %v5020
        %v5053 = vpack.c.bf16 %v5021, %v5021
        %v5054 = vpack.c.bf16 %v5022, %v5022
        %v5055 = vpack.c.bf16 %v5023, %v5023
        %v5056 = vpack.c.bf16 %v5024, %v5024
        %v5057 = vpack.c.bf16 %v5025, %v5025
        %v5058 = vpack.c.bf16 %v5026, %v5026
        %v5059 = vpack.c.bf16 %v5027, %v5027
        %v5060 = vpack.c.bf16 %v5028, %v5028
        %v5061 = vpack.c.bf16 %v5029, %v5029
        %v5062 = vpack.c.bf16 %v5030, %v5030
        %v5063 = vpack.c.bf16 %v5031, %v5031
        %v5096 = vunpack.c.l.b16 %v5032
        %v5097 = vunpack.c.l.b16 %v5033
        %v5098 = vunpack.c.l.b16 %v5034
        %v5099 = vunpack.c.l.b16 %v5035
        %v5100 = vunpack.c.l.b16 %v5036
        %v5101 = vunpack.c.l.b16 %v5037
        %v5102 = vunpack.c.l.b16 %v5038
        %v5103 = vunpack.c.l.b16 %v5039
        %v5104 = vunpack.c.l.b16 %v5040
        %v5105 = vunpack.c.l.b16 %v5041
        %v5106 = vunpack.c.l.b16 %v5042
        %v5107 = vunpack.c.l.b16 %v5043
        %v5108 = vunpack.c.l.b16 %v5044
        %v5109 = vunpack.c.l.b16 %v5045
        %v5110 = vunpack.c.l.b16 %v5046
        %v5111 = vunpack.c.l.b16 %v5047
        %v5112 = vunpack.c.l.b16 %v5048
        %v5113 = vunpack.c.l.b16 %v5049
        %v5114 = vunpack.c.l.b16 %v5050
        %v5115 = vunpack.c.l.b16 %v5051
        %v5116 = vunpack.c.l.b16 %v5052
        %v5117 = vunpack.c.l.b16 %v5053
        %v5118 = vunpack.c.l.b16 %v5054
        %v5119 = vunpack.c.l.b16 %v5055
        %v5120 = vunpack.c.l.b16 %v5056
        %v5121 = vunpack.c.l.b16 %v5057
        %v5122 = vunpack.c.l.b16 %v5058
        %v5123 = vunpack.c.l.b16 %v5059
        %v5124 = vunpack.c.l.b16 %v5060
        %v5125 = vunpack.c.l.b16 %v5061
        %v5126 = vunpack.c.l.b16 %v5062
        %v5127 = vunpack.c.l.b16 %v5063
        %v5128 = vpack.c.b16 %v5097, %v5096
        %v5129 = vpack.c.b16 %v5099, %v5098
        %v5130 = vpack.c.b16 %v5101, %v5100
        %v5131 = vpack.c.b16 %v5103, %v5102
        %v5132 = vpack.c.b16 %v5105, %v5104
        %v5133 = vpack.c.b16 %v5107, %v5106
        %v5134 = vpack.c.b16 %v5109, %v5108
        %v5135 = vpack.c.b16 %v5111, %v5110
        %v5136 = vpack.c.b16 %v5113, %v5112
        %v5137 = vpack.c.b16 %v5115, %v5114
        %v5138 = vpack.c.b16 %v5117, %v5116
        %v5139 = vpack.c.b16 %v5119, %v5118
        %v5140 = vpack.c.b16 %v5121, %v5120
        %v5141 = vpack.c.b16 %v5123, %v5122
        %v5142 = vpack.c.b16 %v5125, %v5124
        %v5143 = vpack.c.b16 %v5127, %v5126
        %v5145 = vshrl.u32 %v5128, 16
        %v5147 = vrot.slane %v5145, 7
        %v5148 = vshll.u32 %v5128, 16
        %v5150 = vor.u32 %v5147, %v5148
        %v5152 = vshrl.u32 %v5129, 16
        %v5154 = vrot.slane %v5152, 7
        %v5155 = vshll.u32 %v5129, 16
        %v5157 = vor.u32 %v5154, %v5155
        %v5159 = vshrl.u32 %v5130, 16
        %v5161 = vrot.slane %v5159, 7
        %v5162 = vshll.u32 %v5130, 16
        %v5164 = vor.u32 %v5161, %v5162
        %v5166 = vshrl.u32 %v5131, 16
        %v5168 = vrot.slane %v5166, 7
        %v5169 = vshll.u32 %v5131, 16
        %v5171 = vor.u32 %v5168, %v5169
        %v5173 = vshrl.u32 %v5132, 16
        %v5175 = vrot.slane %v5173, 7
        %v5176 = vshll.u32 %v5132, 16
        %v5178 = vor.u32 %v5175, %v5176
        %v5180 = vshrl.u32 %v5133, 16
        %v5182 = vrot.slane %v5180, 7
        %v5183 = vshll.u32 %v5133, 16
        %v5185 = vor.u32 %v5182, %v5183
        %v5187 = vshrl.u32 %v5134, 16
        %v5189 = vrot.slane %v5187, 7
        %v5190 = vshll.u32 %v5134, 16
        %v5192 = vor.u32 %v5189, %v5190
        %v5194 = vshrl.u32 %v5135, 16
        %v5196 = vrot.slane %v5194, 7
        %v5197 = vshll.u32 %v5135, 16
        %v5199 = vor.u32 %v5196, %v5197
        %v5201 = vshrl.u32 %v5136, 16
        %v5203 = vrot.slane %v5201, 7
        %v5204 = vshll.u32 %v5136, 16
        %v5206 = vor.u32 %v5203, %v5204
        %v5208 = vshrl.u32 %v5137, 16
        %v5210 = vrot.slane %v5208, 7
        %v5211 = vshll.u32 %v5137, 16
        %v5213 = vor.u32 %v5210, %v5211
        %v5215 = vshrl.u32 %v5138, 16
        %v5217 = vrot.slane %v5215, 7
        %v5218 = vshll.u32 %v5138, 16
        %v5220 = vor.u32 %v5217, %v5218
        %v5222 = vshrl.u32 %v5139, 16
        %v5224 = vrot.slane %v5222, 7
        %v5225 = vshll.u32 %v5139, 16
        %v5227 = vor.u32 %v5224, %v5225
        %v5229 = vshrl.u32 %v5140, 16
        %v5231 = vrot.slane %v5229, 7
        %v5232 = vshll.u32 %v5140, 16
        %v5234 = vor.u32 %v5231, %v5232
        %v5236 = vshrl.u32 %v5141, 16
        %v5238 = vrot.slane %v5236, 7
        %v5239 = vshll.u32 %v5141, 16
        %v5241 = vor.u32 %v5238, %v5239
        %v5243 = vshrl.u32 %v5142, 16
        %v5245 = vrot.slane %v5243, 7
        %v5246 = vshll.u32 %v5142, 16
        %v5248 = vor.u32 %v5245, %v5246
        %v5250 = vshrl.u32 %v5143, 16
        %v5252 = vrot.slane %v5250, 7
        %v5253 = vshll.u32 %v5143, 16
        %v5255 = vor.u32 %v5252, %v5253
        %vm5272 = vmand %vm2623, %vm841
        %v5273 = vsel %vm5272, %v5032, %v5150
        %v5274 = vsel %vm5272, %v5034, %v5157
        %v5275 = vsel %vm5272, %v5036, %v5164
        %v5276 = vsel %vm5272, %v5038, %v5171
        %v5277 = vsel %vm5272, %v5040, %v5178
        %v5278 = vsel %vm5272, %v5042, %v5185
        %v5279 = vsel %vm5272, %v5044, %v5192
        %v5280 = vsel %vm5272, %v5046, %v5199
        %v5281 = vsel %vm5272, %v5048, %v5206
        %v5282 = vsel %vm5272, %v5050, %v5213
        %v5283 = vsel %vm5272, %v5052, %v5220
        %v5284 = vsel %vm5272, %v5054, %v5227
        %v5285 = vsel %vm5272, %v5056, %v5234
        %v5286 = vsel %vm5272, %v5058, %v5241
        %v5287 = vsel %vm5272, %v5060, %v5248
        %v5288 = vsel %vm5272, %v5062, %v5255
        %v5289 = vrot.slane %v5148, 1
        %v5290 = vor.u32 %v5145, %v5289
        %v5291 = vrot.slane %v5155, 1
        %v5292 = vor.u32 %v5152, %v5291
        %v5293 = vrot.slane %v5162, 1
        %v5294 = vor.u32 %v5159, %v5293
        %v5295 = vrot.slane %v5169, 1
        %v5296 = vor.u32 %v5166, %v5295
        %v5297 = vrot.slane %v5176, 1
        %v5298 = vor.u32 %v5173, %v5297
        %v5299 = vrot.slane %v5183, 1
        %v5300 = vor.u32 %v5180, %v5299
        %v5301 = vrot.slane %v5190, 1
        %v5302 = vor.u32 %v5187, %v5301
        %v5303 = vrot.slane %v5197, 1
        %v5304 = vor.u32 %v5194, %v5303
        %v5305 = vrot.slane %v5204, 1
        %v5306 = vor.u32 %v5201, %v5305
        %v5307 = vrot.slane %v5211, 1
        %v5308 = vor.u32 %v5208, %v5307
        %v5309 = vrot.slane %v5218, 1
        %v5310 = vor.u32 %v5215, %v5309
        %v5311 = vrot.slane %v5225, 1
        %v5312 = vor.u32 %v5222, %v5311
        %v5313 = vrot.slane %v5232, 1
        %v5314 = vor.u32 %v5229, %v5313
        %v5315 = vrot.slane %v5239, 1
        %v5316 = vor.u32 %v5236, %v5315
        %v5317 = vrot.slane %v5246, 1
        %v5318 = vor.u32 %v5243, %v5317
        %v5319 = vrot.slane %v5253, 1
        %v5320 = vor.u32 %v5250, %v5319
        %v5337 = vpack.c.b16 %v5097, %v5097
        %v5338 = vpack.c.b16 %v5099, %v5099
        %v5339 = vpack.c.b16 %v5101, %v5101
        %v5340 = vpack.c.b16 %v5103, %v5103
        %v5341 = vpack.c.b16 %v5105, %v5105
        %v5342 = vpack.c.b16 %v5107, %v5107
        %v5343 = vpack.c.b16 %v5109, %v5109
        %v5344 = vpack.c.b16 %v5111, %v5111
        %v5345 = vpack.c.b16 %v5113, %v5113
        %v5346 = vpack.c.b16 %v5115, %v5115
        %v5347 = vpack.c.b16 %v5117, %v5117
        %v5348 = vpack.c.b16 %v5119, %v5119
        %v5349 = vpack.c.b16 %v5121, %v5121
        %v5350 = vpack.c.b16 %v5123, %v5123
        %v5351 = vpack.c.b16 %v5125, %v5125
        %v5352 = vpack.c.b16 %v5127, %v5127
        %vm5369 = vcmask 1047552
        %vm5370 = vmand %vm5369, %vm1577
        %v5371 = vsel %vm5370, %v5290, %v5337
        %v5372 = vsel %vm5370, %v5292, %v5338
        %v5373 = vsel %vm5370, %v5294, %v5339
        %v5374 = vsel %vm5370, %v5296, %v5340
        %v5375 = vsel %vm5370, %v5298, %v5341
        %v5376 = vsel %vm5370, %v5300, %v5342
        %v5377 = vsel %vm5370, %v5302, %v5343
        %v5378 = vsel %vm5370, %v5304, %v5344
        %v5379 = vsel %vm5370, %v5306, %v5345
        %v5380 = vsel %vm5370, %v5308, %v5346
        %v5381 = vsel %vm5370, %v5310, %v5347
        %v5382 = vsel %vm5370, %v5312, %v5348
        %v5383 = vsel %vm5370, %v5314, %v5349
        %v5384 = vsel %vm5370, %v5316, %v5350
        %v5385 = vsel %vm5370, %v5318, %v5351
        %v5386 = vsel %vm5370, %v5320, %v5352
        %v5387 = vunpack.c.l.bf16 %v5273
        %v5388 = vunpack.c.h.bf16 %v5273
        %v5389 = vunpack.c.l.bf16 %v5274
        %v5390 = vunpack.c.h.bf16 %v5274
        %v5391 = vunpack.c.l.bf16 %v5275
        %v5392 = vunpack.c.h.bf16 %v5275
        %v5393 = vunpack.c.l.bf16 %v5276
        %v5394 = vunpack.c.h.bf16 %v5276
        %v5395 = vunpack.c.l.bf16 %v5277
        %v5396 = vunpack.c.h.bf16 %v5277
        %v5397 = vunpack.c.l.bf16 %v5278
        %v5398 = vunpack.c.h.bf16 %v5278
        %v5399 = vunpack.c.l.bf16 %v5279
        %v5400 = vunpack.c.h.bf16 %v5279
        %v5401 = vunpack.c.l.bf16 %v5280
        %v5402 = vunpack.c.h.bf16 %v5280
        %v5403 = vunpack.c.l.bf16 %v5281
        %v5404 = vunpack.c.h.bf16 %v5281
        %v5405 = vunpack.c.l.bf16 %v5282
        %v5406 = vunpack.c.h.bf16 %v5282
        %v5407 = vunpack.c.l.bf16 %v5283
        %v5408 = vunpack.c.h.bf16 %v5283
        %v5409 = vunpack.c.l.bf16 %v5284
        %v5410 = vunpack.c.h.bf16 %v5284
        %v5411 = vunpack.c.l.bf16 %v5285
        %v5412 = vunpack.c.h.bf16 %v5285
        %v5413 = vunpack.c.l.bf16 %v5286
        %v5414 = vunpack.c.h.bf16 %v5286
        %v5415 = vunpack.c.l.bf16 %v5287
        %v5416 = vunpack.c.h.bf16 %v5287
        %v5417 = vunpack.c.l.bf16 %v5288
        %v5418 = vunpack.c.h.bf16 %v5288
        %v5419 = vunpack.c.l.bf16 %v5032
        %v5420 = vunpack.c.l.bf16 %v5033
        %v5421 = vunpack.c.l.bf16 %v5034
        %v5422 = vunpack.c.l.bf16 %v5035
        %v5423 = vunpack.c.l.bf16 %v5036
        %v5424 = vunpack.c.l.bf16 %v5037
        %v5425 = vunpack.c.l.bf16 %v5038
        %v5426 = vunpack.c.l.bf16 %v5039
        %v5427 = vunpack.c.l.bf16 %v5040
        %v5428 = vunpack.c.l.bf16 %v5041
        %v5429 = vunpack.c.l.bf16 %v5042
        %v5430 = vunpack.c.l.bf16 %v5043
        %v5431 = vunpack.c.l.bf16 %v5044
        %v5432 = vunpack.c.l.bf16 %v5045
        %v5433 = vunpack.c.l.bf16 %v5046
        %v5434 = vunpack.c.l.bf16 %v5047
        %v5435 = vunpack.c.l.bf16 %v5048
        %v5436 = vunpack.c.l.bf16 %v5049
        %v5437 = vunpack.c.l.bf16 %v5050
        %v5438 = vunpack.c.l.bf16 %v5051
        %v5439 = vunpack.c.l.bf16 %v5052
        %v5440 = vunpack.c.l.bf16 %v5053
        %v5441 = vunpack.c.l.bf16 %v5054
        %v5442 = vunpack.c.l.bf16 %v5055
        %v5443 = vunpack.c.l.bf16 %v5056
        %v5444 = vunpack.c.l.bf16 %v5057
        %v5445 = vunpack.c.l.bf16 %v5058
        %v5446 = vunpack.c.l.bf16 %v5059
        %v5447 = vunpack.c.l.bf16 %v5060
        %v5448 = vunpack.c.l.bf16 %v5061
        %v5449 = vunpack.c.l.bf16 %v5062
        %v5450 = vunpack.c.l.bf16 %v5063
        %v5451 = vmax.f32 %v5387, %v5419
        %v5452 = vmax.f32 %v5388, %v5420
        %v5453 = vmax.f32 %v5389, %v5421
        %v5454 = vmax.f32 %v5390, %v5422
        %v5455 = vmax.f32 %v5391, %v5423
        %v5456 = vmax.f32 %v5392, %v5424
        %v5457 = vmax.f32 %v5393, %v5425
        %v5458 = vmax.f32 %v5394, %v5426
        %v5459 = vmax.f32 %v5395, %v5427
        %v5460 = vmax.f32 %v5396, %v5428
        %v5461 = vmax.f32 %v5397, %v5429
        %v5462 = vmax.f32 %v5398, %v5430
        %v5463 = vmax.f32 %v5399, %v5431
        %v5464 = vmax.f32 %v5400, %v5432
        %v5465 = vmax.f32 %v5401, %v5433
        %v5466 = vmax.f32 %v5402, %v5434
        %v5467 = vmax.f32 %v5403, %v5435
        %v5468 = vmax.f32 %v5404, %v5436
        %v5469 = vmax.f32 %v5405, %v5437
        %v5470 = vmax.f32 %v5406, %v5438
        %v5471 = vmax.f32 %v5407, %v5439
        %v5472 = vmax.f32 %v5408, %v5440
        %v5473 = vmax.f32 %v5409, %v5441
        %v5474 = vmax.f32 %v5410, %v5442
        %v5475 = vmax.f32 %v5411, %v5443
        %v5476 = vmax.f32 %v5412, %v5444
        %v5477 = vmax.f32 %v5413, %v5445
        %v5478 = vmax.f32 %v5414, %v5446
        %v5479 = vmax.f32 %v5415, %v5447
        %v5480 = vmax.f32 %v5416, %v5448
        %v5481 = vmax.f32 %v5417, %v5449
        %v5482 = vmax.f32 %v5418, %v5450
        %v5483 = vpack.c.bf16 %v5451, %v5451
        %v5484 = vpack.c.bf16 %v5452, %v5452
        %v5485 = vpack.c.bf16 %v5453, %v5453
        %v5486 = vpack.c.bf16 %v5454, %v5454
        %v5487 = vpack.c.bf16 %v5455, %v5455
        %v5488 = vpack.c.bf16 %v5456, %v5456
        %v5489 = vpack.c.bf16 %v5457, %v5457
        %v5490 = vpack.c.bf16 %v5458, %v5458
        %v5491 = vpack.c.bf16 %v5459, %v5459
        %v5492 = vpack.c.bf16 %v5460, %v5460
        %v5493 = vpack.c.bf16 %v5461, %v5461
        %v5494 = vpack.c.bf16 %v5462, %v5462
        %v5495 = vpack.c.bf16 %v5463, %v5463
        %v5496 = vpack.c.bf16 %v5464, %v5464
        %v5497 = vpack.c.bf16 %v5465, %v5465
        %v5498 = vpack.c.bf16 %v5466, %v5466
        %v5499 = vpack.c.bf16 %v5467, %v5467
        %v5500 = vpack.c.bf16 %v5468, %v5468
        %v5501 = vpack.c.bf16 %v5469, %v5469
        %v5502 = vpack.c.bf16 %v5470, %v5470
        %v5503 = vpack.c.bf16 %v5471, %v5471
        %v5504 = vpack.c.bf16 %v5472, %v5472
        %v5505 = vpack.c.bf16 %v5473, %v5473
        %v5506 = vpack.c.bf16 %v5474, %v5474
        %v5507 = vpack.c.bf16 %v5475, %v5475
        %v5508 = vpack.c.bf16 %v5476, %v5476
        %v5509 = vpack.c.bf16 %v5477, %v5477
        %v5510 = vpack.c.bf16 %v5478, %v5478
        %v5511 = vpack.c.bf16 %v5479, %v5479
        %v5512 = vpack.c.bf16 %v5480, %v5480
        %v5513 = vpack.c.bf16 %v5481, %v5481
        %v5514 = vpack.c.bf16 %v5482, %v5482
        %v5515 = vunpack.c.l.bf16 %v5483
        %v5516 = vunpack.c.l.bf16 %v5484
        %v5517 = vunpack.c.l.bf16 %v5485
        %v5518 = vunpack.c.l.bf16 %v5486
        %v5519 = vunpack.c.l.bf16 %v5487
        %v5520 = vunpack.c.l.bf16 %v5488
        %v5521 = vunpack.c.l.bf16 %v5489
        %v5522 = vunpack.c.l.bf16 %v5490
        %v5523 = vunpack.c.l.bf16 %v5491
        %v5524 = vunpack.c.l.bf16 %v5492
        %v5525 = vunpack.c.l.bf16 %v5493
        %v5526 = vunpack.c.l.bf16 %v5494
        %v5527 = vunpack.c.l.bf16 %v5495
        %v5528 = vunpack.c.l.bf16 %v5496
        %v5529 = vunpack.c.l.bf16 %v5497
        %v5530 = vunpack.c.l.bf16 %v5498
        %v5531 = vunpack.c.l.bf16 %v5499
        %v5532 = vunpack.c.l.bf16 %v5500
        %v5533 = vunpack.c.l.bf16 %v5501
        %v5534 = vunpack.c.l.bf16 %v5502
        %v5535 = vunpack.c.l.bf16 %v5503
        %v5536 = vunpack.c.l.bf16 %v5504
        %v5537 = vunpack.c.l.bf16 %v5505
        %v5538 = vunpack.c.l.bf16 %v5506
        %v5539 = vunpack.c.l.bf16 %v5507
        %v5540 = vunpack.c.l.bf16 %v5508
        %v5541 = vunpack.c.l.bf16 %v5509
        %v5542 = vunpack.c.l.bf16 %v5510
        %v5543 = vunpack.c.l.bf16 %v5511
        %v5544 = vunpack.c.l.bf16 %v5512
        %v5545 = vunpack.c.l.bf16 %v5513
        %v5546 = vunpack.c.l.bf16 %v5514
        %v5547 = vunpack.c.l.bf16 %v5371
        %v5548 = vunpack.c.h.bf16 %v5371
        %v5549 = vunpack.c.l.bf16 %v5372
        %v5550 = vunpack.c.h.bf16 %v5372
        %v5551 = vunpack.c.l.bf16 %v5373
        %v5552 = vunpack.c.h.bf16 %v5373
        %v5553 = vunpack.c.l.bf16 %v5374
        %v5554 = vunpack.c.h.bf16 %v5374
        %v5555 = vunpack.c.l.bf16 %v5375
        %v5556 = vunpack.c.h.bf16 %v5375
        %v5557 = vunpack.c.l.bf16 %v5376
        %v5558 = vunpack.c.h.bf16 %v5376
        %v5559 = vunpack.c.l.bf16 %v5377
        %v5560 = vunpack.c.h.bf16 %v5377
        %v5561 = vunpack.c.l.bf16 %v5378
        %v5562 = vunpack.c.h.bf16 %v5378
        %v5563 = vunpack.c.l.bf16 %v5379
        %v5564 = vunpack.c.h.bf16 %v5379
        %v5565 = vunpack.c.l.bf16 %v5380
        %v5566 = vunpack.c.h.bf16 %v5380
        %v5567 = vunpack.c.l.bf16 %v5381
        %v5568 = vunpack.c.h.bf16 %v5381
        %v5569 = vunpack.c.l.bf16 %v5382
        %v5570 = vunpack.c.h.bf16 %v5382
        %v5571 = vunpack.c.l.bf16 %v5383
        %v5572 = vunpack.c.h.bf16 %v5383
        %v5573 = vunpack.c.l.bf16 %v5384
        %v5574 = vunpack.c.h.bf16 %v5384
        %v5575 = vunpack.c.l.bf16 %v5385
        %v5576 = vunpack.c.h.bf16 %v5385
        %v5577 = vunpack.c.l.bf16 %v5386
        %v5578 = vunpack.c.h.bf16 %v5386
        %v5579 = vmax.f32 %v5515, %v5547
        %v5580 = vmax.f32 %v5516, %v5548
        %v5581 = vmax.f32 %v5517, %v5549
        %v5582 = vmax.f32 %v5518, %v5550
        %v5583 = vmax.f32 %v5519, %v5551
        %v5584 = vmax.f32 %v5520, %v5552
        %v5585 = vmax.f32 %v5521, %v5553
        %v5586 = vmax.f32 %v5522, %v5554
        %v5587 = vmax.f32 %v5523, %v5555
        %v5588 = vmax.f32 %v5524, %v5556
        %v5589 = vmax.f32 %v5525, %v5557
        %v5590 = vmax.f32 %v5526, %v5558
        %v5591 = vmax.f32 %v5527, %v5559
        %v5592 = vmax.f32 %v5528, %v5560
        %v5593 = vmax.f32 %v5529, %v5561
        %v5594 = vmax.f32 %v5530, %v5562
        %v5595 = vmax.f32 %v5531, %v5563
        %v5596 = vmax.f32 %v5532, %v5564
        %v5597 = vmax.f32 %v5533, %v5565
        %v5598 = vmax.f32 %v5534, %v5566
        %v5599 = vmax.f32 %v5535, %v5567
        %v5600 = vmax.f32 %v5536, %v5568
        %v5601 = vmax.f32 %v5537, %v5569
        %v5602 = vmax.f32 %v5538, %v5570
        %v5603 = vmax.f32 %v5539, %v5571
        %v5604 = vmax.f32 %v5540, %v5572
        %v5605 = vmax.f32 %v5541, %v5573
        %v5606 = vmax.f32 %v5542, %v5574
        %v5607 = vmax.f32 %v5543, %v5575
        %v5608 = vmax.f32 %v5544, %v5576
        %v5609 = vmax.f32 %v5545, %v5577
        %v5610 = vmax.f32 %v5546, %v5578
        %v5611 = vpack.c.bf16 %v5579, %v5579
        %v5612 = vpack.c.bf16 %v5580, %v5580
        %v5613 = vpack.c.bf16 %v5581, %v5581
        %v5614 = vpack.c.bf16 %v5582, %v5582
        %v5615 = vpack.c.bf16 %v5583, %v5583
        %v5616 = vpack.c.bf16 %v5584, %v5584
        %v5617 = vpack.c.bf16 %v5585, %v5585
        %v5618 = vpack.c.bf16 %v5586, %v5586
        %v5619 = vpack.c.bf16 %v5587, %v5587
        %v5620 = vpack.c.bf16 %v5588, %v5588
        %v5621 = vpack.c.bf16 %v5589, %v5589
        %v5622 = vpack.c.bf16 %v5590, %v5590
        %v5623 = vpack.c.bf16 %v5591, %v5591
        %v5624 = vpack.c.bf16 %v5592, %v5592
        %v5625 = vpack.c.bf16 %v5593, %v5593
        %v5626 = vpack.c.bf16 %v5594, %v5594
        %v5627 = vpack.c.bf16 %v5595, %v5595
        %v5628 = vpack.c.bf16 %v5596, %v5596
        %v5629 = vpack.c.bf16 %v5597, %v5597
        %v5630 = vpack.c.bf16 %v5598, %v5598
        %v5631 = vpack.c.bf16 %v5599, %v5599
        %v5632 = vpack.c.bf16 %v5600, %v5600
        %v5633 = vpack.c.bf16 %v5601, %v5601
        %v5634 = vpack.c.bf16 %v5602, %v5602
        %v5635 = vpack.c.bf16 %v5603, %v5603
        %v5636 = vpack.c.bf16 %v5604, %v5604
        %v5637 = vpack.c.bf16 %v5605, %v5605
        %v5638 = vpack.c.bf16 %v5606, %v5606
        %v5639 = vpack.c.bf16 %v5607, %v5607
        %v5640 = vpack.c.bf16 %v5608, %v5608
        %v5641 = vpack.c.bf16 %v5609, %v5609
        %v5642 = vpack.c.bf16 %v5610, %v5610
        %v5643 = vld [vmem:[%s7] sm:$0x3]
        %v5644 = vld [vmem:[%s8] sm:$0x1]
        %v5646 = vperm.slane %v5644, 0
        %v5680 = vunpack.c.l.b16 %v5611
        %v5681 = vunpack.c.l.b16 %v5612
        %v5682 = vunpack.c.l.b16 %v5613
        %v5683 = vunpack.c.l.b16 %v5614
        %v5684 = vunpack.c.l.b16 %v5615
        %v5685 = vunpack.c.l.b16 %v5616
        %v5686 = vunpack.c.l.b16 %v5617
        %v5687 = vunpack.c.l.b16 %v5618
        %v5688 = vunpack.c.l.b16 %v5619
        %v5689 = vunpack.c.l.b16 %v5620
        %v5690 = vunpack.c.l.b16 %v5621
        %v5691 = vunpack.c.l.b16 %v5622
        %v5692 = vunpack.c.l.b16 %v5623
        %v5693 = vunpack.c.l.b16 %v5624
        %v5694 = vunpack.c.l.b16 %v5625
        %v5695 = vunpack.c.l.b16 %v5626
        %v5696 = vunpack.c.l.b16 %v5627
        %v5697 = vunpack.c.l.b16 %v5628
        %v5698 = vunpack.c.l.b16 %v5629
        %v5699 = vunpack.c.l.b16 %v5630
        %v5700 = vunpack.c.l.b16 %v5631
        %v5701 = vunpack.c.l.b16 %v5632
        %v5702 = vunpack.c.l.b16 %v5633
        %v5703 = vunpack.c.l.b16 %v5634
        %v5704 = vunpack.c.l.b16 %v5635
        %v5705 = vunpack.c.l.b16 %v5636
        %v5706 = vunpack.c.l.b16 %v5637
        %v5707 = vunpack.c.l.b16 %v5638
        %v5708 = vunpack.c.l.b16 %v5639
        %v5709 = vunpack.c.l.b16 %v5640
        %v5710 = vunpack.c.l.b16 %v5641
        %v5711 = vunpack.c.l.b16 %v5642
        %v5712 = vpack.c.b16 %v5681, %v5680
        %v5713 = vpack.c.b16 %v5683, %v5682
        %v5714 = vpack.c.b16 %v5685, %v5684
        %v5715 = vpack.c.b16 %v5687, %v5686
        %v5716 = vpack.c.b16 %v5689, %v5688
        %v5717 = vpack.c.b16 %v5691, %v5690
        %v5718 = vpack.c.b16 %v5693, %v5692
        %v5719 = vpack.c.b16 %v5695, %v5694
        %v5720 = vpack.c.b16 %v5697, %v5696
        %v5721 = vpack.c.b16 %v5699, %v5698
        %v5722 = vpack.c.b16 %v5701, %v5700
        %v5723 = vpack.c.b16 %v5703, %v5702
        %v5724 = vpack.c.b16 %v5705, %v5704
        %v5725 = vpack.c.b16 %v5707, %v5706
        %v5726 = vpack.c.b16 %v5709, %v5708
        %v5727 = vpack.c.b16 %v5711, %v5710
        %v5729 = vsel %vm602, %v5712, 0
        %v5732 = vsel %vm602, %v5713, 0
        %v5735 = vsel %vm602, %v5714, 0
        %v5738 = vsel %vm602, %v5715, 0
        %v5741 = vsel %vm602, %v5716, 0
        %v5744 = vsel %vm602, %v5717, 0
        %v5747 = vsel %vm602, %v5718, 0
        %v5750 = vsel %vm602, %v5719, 0
        %v5753 = vsel %vm602, %v5720, 0
        %v5756 = vsel %vm602, %v5721, 0
        %v5759 = vsel %vm602, %v5722, 0
        %v5762 = vsel %vm602, %v5723, 0
        %v5765 = vsel %vm602, %v5724, 0
        %v5768 = vsel %vm602, %v5725, 0
        %v5771 = vsel %vm602, %v5726, 0
        %v5774 = vsel %vm602, %v5727, 0
        %v5777 = vsel %vm651, %v5643, 0
        %5779 = vmatpush.bf16.msra.mxu0 0
        %5780 = vmatpush.bf16.msra.mxu0 0
        %5781 = vmatpush.bf16.msra.mxu0 0
        %5782 = vmatpush.bf16.msra.mxu0 0
        %5783 = vmatpush.bf16.msra.mxu0 0
        %5784 = vmatpush.bf16.msra.mxu0 0
        %5785 = vmatpush.bf16.msra.mxu0 0
        %5786 = vmatpush.bf16.msra.mxu0 %v5777
        %5787 = vmatmul.bf16.gmra.mxu0 %v5729
        %v5788 = vpop.f32.mrf.mxu0
        %v5789 = vadd.f32 %v5646, %v5788
        %v5790 = vpop.f32.mrf.mxu0
        %v5791 = vadd.f32 %v5646, %v5790
        %5792 = vmatmul.bf16.gmra.mxu0 %v5732
        %v5793 = vpop.f32.mrf.mxu0
        %v5794 = vadd.f32 %v5646, %v5793
        %v5795 = vpop.f32.mrf.mxu0
        %v5796 = vadd.f32 %v5646, %v5795
        %5797 = vmatmul.bf16.gmra.mxu0 %v5735
        %v5798 = vpop.f32.mrf.mxu0
        %v5799 = vadd.f32 %v5646, %v5798
        %v5800 = vpop.f32.mrf.mxu0
        %v5801 = vadd.f32 %v5646, %v5800
        %5802 = vmatmul.bf16.gmra.mxu0 %v5738
        %v5803 = vpop.f32.mrf.mxu0
        %v5804 = vadd.f32 %v5646, %v5803
        %v5805 = vpop.f32.mrf.mxu0
        %v5806 = vadd.f32 %v5646, %v5805
        %5807 = vmatmul.bf16.gmra.mxu0 %v5741
        %v5808 = vpop.f32.mrf.mxu0
        %v5809 = vadd.f32 %v5646, %v5808
        %v5810 = vpop.f32.mrf.mxu0
        %v5811 = vadd.f32 %v5646, %v5810
        %5812 = vmatmul.bf16.gmra.mxu0 %v5744
        %v5813 = vpop.f32.mrf.mxu0
        %v5814 = vadd.f32 %v5646, %v5813
        %v5815 = vpop.f32.mrf.mxu0
        %v5816 = vadd.f32 %v5646, %v5815
        %5817 = vmatmul.bf16.gmra.mxu0 %v5747
        %v5818 = vpop.f32.mrf.mxu0
        %v5819 = vadd.f32 %v5646, %v5818
        %v5820 = vpop.f32.mrf.mxu0
        %v5821 = vadd.f32 %v5646, %v5820
        %5822 = vmatmul.bf16.gmra.mxu0 %v5750
        %v5823 = vpop.f32.mrf.mxu0
        %v5824 = vadd.f32 %v5646, %v5823
        %v5825 = vpop.f32.mrf.mxu0
        %v5826 = vadd.f32 %v5646, %v5825
        %5827 = vmatmul.bf16.gmra.mxu0 %v5753
        %v5828 = vpop.f32.mrf.mxu0
        %v5829 = vadd.f32 %v5646, %v5828
        %v5830 = vpop.f32.mrf.mxu0
        %v5831 = vadd.f32 %v5646, %v5830
        %5832 = vmatmul.bf16.gmra.mxu0 %v5756
        %v5833 = vpop.f32.mrf.mxu0
        %v5834 = vadd.f32 %v5646, %v5833
        %v5835 = vpop.f32.mrf.mxu0
        %v5836 = vadd.f32 %v5646, %v5835
        %5837 = vmatmul.bf16.gmra.mxu0 %v5759
        %v5838 = vpop.f32.mrf.mxu0
        %v5839 = vadd.f32 %v5646, %v5838
        %v5840 = vpop.f32.mrf.mxu0
        %v5841 = vadd.f32 %v5646, %v5840
        %5842 = vmatmul.bf16.gmra.mxu0 %v5762
        %v5843 = vpop.f32.mrf.mxu0
        %v5844 = vadd.f32 %v5646, %v5843
        %v5845 = vpop.f32.mrf.mxu0
        %v5846 = vadd.f32 %v5646, %v5845
        %5847 = vmatmul.bf16.gmra.mxu0 %v5765
        %v5848 = vpop.f32.mrf.mxu0
        %v5849 = vadd.f32 %v5646, %v5848
        %v5850 = vpop.f32.mrf.mxu0
        %v5851 = vadd.f32 %v5646, %v5850
        %5852 = vmatmul.bf16.gmra.mxu0 %v5768
        %v5853 = vpop.f32.mrf.mxu0
        %v5854 = vadd.f32 %v5646, %v5853
        %v5855 = vpop.f32.mrf.mxu0
        %v5856 = vadd.f32 %v5646, %v5855
        %5857 = vmatmul.bf16.gmra.mxu0 %v5771
        %v5858 = vpop.f32.mrf.mxu0
        %v5859 = vadd.f32 %v5646, %v5858
        %v5860 = vpop.f32.mrf.mxu0
        %v5861 = vadd.f32 %v5646, %v5860
        %5862 = vmatmul.bf16.gmra.mxu0 %v5774
        %v5863 = vpop.f32.mrf.mxu0
        %v5864 = vadd.f32 %v5646, %v5863
        %v5865 = vpop.f32.mrf.mxu0
        %v5866 = vadd.f32 %v5646, %v5865
        %5867 = vdwg.mxu0
        %v5868 = vmax.f32 %v5789, 0.0
        %v5869 = vmax.f32 %v5791, 0.0
        %v5870 = vmax.f32 %v5794, 0.0
        %v5871 = vmax.f32 %v5796, 0.0
        %v5872 = vmax.f32 %v5799, 0.0
        %v5873 = vmax.f32 %v5801, 0.0
        %v5874 = vmax.f32 %v5804, 0.0
        %v5875 = vmax.f32 %v5806, 0.0
        %v5876 = vmax.f32 %v5809, 0.0
        %v5877 = vmax.f32 %v5811, 0.0
        %v5878 = vmax.f32 %v5814, 0.0
        %v5879 = vmax.f32 %v5816, 0.0
        %v5880 = vmax.f32 %v5819, 0.0
        %v5881 = vmax.f32 %v5821, 0.0
        %v5882 = vmax.f32 %v5824, 0.0
        %v5883 = vmax.f32 %v5826, 0.0
        %v5884 = vmax.f32 %v5829, 0.0
        %v5885 = vmax.f32 %v5831, 0.0
        %v5886 = vmax.f32 %v5834, 0.0
        %v5887 = vmax.f32 %v5836, 0.0
        %v5888 = vmax.f32 %v5839, 0.0
        %v5889 = vmax.f32 %v5841, 0.0
        %v5890 = vmax.f32 %v5844, 0.0
        %v5891 = vmax.f32 %v5846, 0.0
        %v5892 = vmax.f32 %v5849, 0.0
        %v5893 = vmax.f32 %v5851, 0.0
        %v5894 = vmax.f32 %v5854, 0.0
        %v5895 = vmax.f32 %v5856, 0.0
        %v5896 = vmax.f32 %v5859, 0.0
        %v5897 = vmax.f32 %v5861, 0.0
        %v5898 = vmax.f32 %v5864, 0.0
        %v5899 = vmax.f32 %v5866, 0.0
        %5932 = vrot.lane.b32.xlu0 %v5868, 24
        %v5933 = vpop.permute.xlu0 %5932
        %5934 = vrot.lane.b32.xlu0 %v5869, 24
        %v5935 = vpop.permute.xlu0 %5934
        %5936 = vrot.lane.b32.xlu0 %v5870, 24
        %v5937 = vpop.permute.xlu0 %5936
        %5938 = vrot.lane.b32.xlu0 %v5871, 24
        %v5939 = vpop.permute.xlu0 %5938
        %5940 = vrot.lane.b32.xlu0 %v5872, 24
        %v5941 = vpop.permute.xlu0 %5940
        %5942 = vrot.lane.b32.xlu0 %v5873, 24
        %v5943 = vpop.permute.xlu0 %5942
        %5944 = vrot.lane.b32.xlu0 %v5874, 24
        %v5945 = vpop.permute.xlu0 %5944
        %5946 = vrot.lane.b32.xlu0 %v5875, 24
        %v5947 = vpop.permute.xlu0 %5946
        %5948 = vrot.lane.b32.xlu0 %v5876, 24
        %v5949 = vpop.permute.xlu0 %5948
        %5950 = vrot.lane.b32.xlu0 %v5877, 24
        %v5951 = vpop.permute.xlu0 %5950
        %5952 = vrot.lane.b32.xlu0 %v5878, 24
        %v5953 = vpop.permute.xlu0 %5952
        %5954 = vrot.lane.b32.xlu0 %v5879, 24
        %v5955 = vpop.permute.xlu0 %5954
        %5956 = vrot.lane.b32.xlu0 %v5880, 24
        %v5957 = vpop.permute.xlu0 %5956
        %5958 = vrot.lane.b32.xlu0 %v5881, 24
        %v5959 = vpop.permute.xlu0 %5958
        %5960 = vrot.lane.b32.xlu0 %v5882, 24
        %v5961 = vpop.permute.xlu0 %5960
        %5962 = vrot.lane.b32.xlu0 %v5883, 24
        %v5963 = vpop.permute.xlu0 %5962
        %5964 = vrot.lane.b32.xlu0 %v5884, 24
        %v5965 = vpop.permute.xlu0 %5964
        %5966 = vrot.lane.b32.xlu0 %v5885, 24
        %v5967 = vpop.permute.xlu0 %5966
        %5968 = vrot.lane.b32.xlu0 %v5886, 24
        %v5969 = vpop.permute.xlu0 %5968
        %5970 = vrot.lane.b32.xlu0 %v5887, 24
        %v5971 = vpop.permute.xlu0 %5970
        %5972 = vrot.lane.b32.xlu0 %v5888, 24
        %v5973 = vpop.permute.xlu0 %5972
        %5974 = vrot.lane.b32.xlu0 %v5889, 24
        %v5975 = vpop.permute.xlu0 %5974
        %5976 = vrot.lane.b32.xlu0 %v5890, 24
        %v5977 = vpop.permute.xlu0 %5976
        %5978 = vrot.lane.b32.xlu0 %v5891, 24
        %v5979 = vpop.permute.xlu0 %5978
        %5980 = vrot.lane.b32.xlu0 %v5892, 24
        %v5981 = vpop.permute.xlu0 %5980
        %5982 = vrot.lane.b32.xlu0 %v5893, 24
        %v5983 = vpop.permute.xlu0 %5982
        %5984 = vrot.lane.b32.xlu0 %v5894, 24
        %v5985 = vpop.permute.xlu0 %5984
        %5986 = vrot.lane.b32.xlu0 %v5895, 24
        %v5987 = vpop.permute.xlu0 %5986
        %5988 = vrot.lane.b32.xlu0 %v5896, 24
        %v5989 = vpop.permute.xlu0 %5988
        %5990 = vrot.lane.b32.xlu0 %v5897, 24
        %v5991 = vpop.permute.xlu0 %5990
        %5992 = vrot.lane.b32.xlu0 %v5898, 24
        %v5993 = vpop.permute.xlu0 %5992
        %5994 = vrot.lane.b32.xlu0 %v5899, 24
        %v5995 = vpop.permute.xlu0 %5994
        %vm6028 = vcmask 261312
        %6029 = vst.msk [vmem:[%s325] sm:$0xff] %vm6028, %v5933
        %6030 = vst.msk [vmem:[%s325 + $0x8] sm:$0xff] %vm6028, %v5935
        %6031 = vst.msk [vmem:[%s325 + $0x10] sm:$0xff] %vm6028, %v5937
        %6032 = vst.msk [vmem:[%s325 + $0x18] sm:$0xff] %vm6028, %v5939
        %6033 = vst.msk [vmem:[%s325 + $0x20] sm:$0xff] %vm6028, %v5941
        %6034 = vst.msk [vmem:[%s325 + $0x28] sm:$0xff] %vm6028, %v5943
        %6035 = vst.msk [vmem:[%s325 + $0x30] sm:$0xff] %vm6028, %v5945
        %6036 = vst.msk [vmem:[%s325 + $0x38] sm:$0xff] %vm6028, %v5947
        %6037 = vst.msk [vmem:[%s325 + $0x40] sm:$0xff] %vm6028, %v5949
        %6038 = vst.msk [vmem:[%s325 + $0x48] sm:$0xff] %vm6028, %v5951
        %6039 = vst.msk [vmem:[%s325 + $0x50] sm:$0xff] %vm6028, %v5953
        %6040 = vst.msk [vmem:[%s325 + $0x58] sm:$0xff] %vm6028, %v5955
        %6041 = vst.msk [vmem:[%s325 + $0x60] sm:$0xff] %vm6028, %v5957
        %6042 = vst.msk [vmem:[%s325 + $0x68] sm:$0xff] %vm6028, %v5959
        %6043 = vst.msk [vmem:[%s325 + $0x70] sm:$0xff] %vm6028, %v5961
        %6044 = vst.msk [vmem:[%s325 + $0x78] sm:$0xff] %vm6028, %v5963
        %6045 = vst.msk [vmem:[%s325 + $0x80] sm:$0xff] %vm6028, %v5965
        %6046 = vst.msk [vmem:[%s325 + $0x88] sm:$0xff] %vm6028, %v5967
        %6047 = vst.msk [vmem:[%s325 + $0x90] sm:$0xff] %vm6028, %v5969
        %6048 = vst.msk [vmem:[%s325 + $0x98] sm:$0xff] %vm6028, %v5971
        %6049 = vst.msk [vmem:[%s325 + $0xa0] sm:$0xff] %vm6028, %v5973
        %6050 = vst.msk [vmem:[%s325 + $0xa8] sm:$0xff] %vm6028, %v5975
        %6051 = vst.msk [vmem:[%s325 + $0xb0] sm:$0xff] %vm6028, %v5977
        %6052 = vst.msk [vmem:[%s325 + $0xb8] sm:$0xff] %vm6028, %v5979
        %6053 = vst.msk [vmem:[%s325 + $0xc0] sm:$0xff] %vm6028, %v5981
        %6054 = vst.msk [vmem:[%s325 + $0xc8] sm:$0xff] %vm6028, %v5983
        %6055 = vst.msk [vmem:[%s325 + $0xd0] sm:$0xff] %vm6028, %v5985
        %6056 = vst.msk [vmem:[%s325 + $0xd8] sm:$0xff] %vm6028, %v5987
        %6057 = vst.msk [vmem:[%s325 + $0xe0] sm:$0xff] %vm6028, %v5989
        %6058 = vst.msk [vmem:[%s325 + $0xe8] sm:$0xff] %vm6028, %v5991
        %6059 = vst.msk [vmem:[%s325 + $0xf0] sm:$0xff] %vm6028, %v5993
        %6060 = vst.msk [vmem:[%s325 + $0xf8] sm:$0xff] %vm6028, %v5995
        %s6061 = sand.u32 %s225, 1
        %s6062 = scalar_lea.sflag [#allocation5], %s6061
        %s6063 = sand.u32 %s225, 1
        %s6064 = smul.addr %s6063, 256
        %s6065 = scalar_lea.vmem [#allocation4], %s6064
        // Predicated region
        $region61: #{inception_block.1} parent=55 // pred_check
          %p6066 = pneg %p235
        $region62: #{inception_block.1} parent=55 // pred_check_branch
          %6068 = sbr.rel (%p6066) target = $region64
        $region63: #{inception_block.1} parent=55 // pred_region
          %6070 = vsyncadd %s6062, 0
          %s6071 = smul.addr %s23, 32
          %s6072 = smul.addr %s6071, 8
          %s6073 = scalar_lea.hbm %s9, %s6072
          %s6074 = sshll.u32 %s6065, 4
          %s6075 = int_to_ptr.vmem [resolvable:$true] %s6074
          %s6076 = sshll.u32 %s6073, 4
          %s6077 = int_to_ptr.hbm [resolvable:$true] %s6076
          %6082 = dma.vmem_to_hbm [thread:$0]  %s6075, 4096, %s6077, %s6062, 128, 128, 8
        $region64: #{inception_block.1} parent=55 // pred_fallthru
          _
      $region56: #{inception_block.1} parent=5 // pred_fallthru
        _
      %p6083 = scmp.le.s32.totalorder 2, %s18
      // Predicated region
      $region65: #{inception_block.1} parent=5 // pred_check
        %p6084 = pneg %p6083
      $region66: #{inception_block.1} parent=5 // pred_check_branch
        %6086 = sbr.rel (%p6084) target = $region68
      $region67: #{inception_block.1} parent=5 // pred_region
        %s6087 = ssub.s32 %s18, 2
        // Predicated region
        $region69: #{inception_block.1} parent=67 // pred_check
          %p6088 = pneg %p241
        $region70: #{inception_block.1} parent=67 // pred_check_branch
          %6090 = sbr.rel (%p6088) target = $region72
        $region71: #{inception_block.1} parent=67 // pred_region
          %s6091 = sand.u32 %s226, 1
          %s6092 = scalar_lea.sflag [#allocation5], %s6091
          %s6093 = sand.u32 %s226, 1
          %s6094 = smul.addr %s6093, 256
          %s6095 = scalar_lea.vmem [#allocation4], %s6094
          %6097 = dma.done %s6092, 4096
        $region72: #{inception_block.1} parent=67 // pred_fallthru
          _
      $region68: #{inception_block.1} parent=5 // pred_fallthru
        _
    $region6: #{inception_block.1} parent=1 // loop_footer
      %s22 = sadd.s32 1, %s18
    $region7: #{inception_block.1} parent=1 // loop_footer_branch
      %17 = sbr.rel target = $region3
    $region8: #{inception_block.1} parent=1 // loop_exit
      _
    %6098 = vsyncpa [#allocation5], 1
    %s6099 = scalar_lea.sflag [#allocation5], 1
    %6100 = vsyncpa %s6099, 1

</llo_original>
